<compile_context>
chip_gen: v7x
topology: tpu7x:2x2x1
jax: 0.10.0
libtpu: 0.0.40
codegen_flags: <defaults>
</compile_context>

<pallas_src>
import functools
import math

import jax
import jax.numpy as jnp
from jax.experimental import pallas as pl
from jax.experimental.pallas import tpu as pltpu

LN_EPS = 1e-5  # torch.nn.LayerNorm default


def _layernorm(x, eps=LN_EPS):
    # elementwise_affine=False LayerNorm over the last axis
    mu = jnp.mean(x, axis=-1, keepdims=True)
    var = jnp.mean((x - mu) ** 2, axis=-1, keepdims=True)
    return (x - mu) * jax.lax.rsqrt(var + eps)


def _erf(x):
    # TODO(synk): lax.erf lowering on Mosaic is not guaranteed; use the
    # Abramowitz & Stegun 7.1.26 polynomial (abs err ~1.5e-7), basic ops only.
    p = 0.3275911
    a1, a2, a3, a4, a5 = 0.254829592, -0.284496736, 1.421413741, -1.453152027, 1.061405429
    ax = jnp.abs(x)
    t = 1.0 / (1.0 + p * ax)
    poly = ((((a5 * t + a4) * t + a3) * t + a2) * t + a1) * t
    y = 1.0 - poly * jnp.exp(-ax * ax)
    return jnp.where(x >= 0, y, -y)


def _gelu(x):
    # exact (erf-based) GELU, matching nn.GELU(approximate='none')
    return 0.5 * x * (1.0 + _erf(x * (1.0 / math.sqrt(2.0))))


# ---------------------------------------------------------------------------
# Fused ParticleBlock kernel: one grid step = `block_n` batch rows, full seq.
# ---------------------------------------------------------------------------
def _particle_block_kernel(x_ref, wqkv_ref, bqkv_ref, wo_ref, bo_ref,
                           w1_ref, b1_ref, w2_ref, b2_ref, wres_ref, o_ref,
                           *, num_heads, head_dim, block_n):
    E = num_heads * head_dim
    scale = 1.0 / math.sqrt(head_dim)

    wqkv = wqkv_ref[...]   # (E, 3E)   = in_proj_weight.T
    bqkv = bqkv_ref[...]   # (1, 3E)
    wo = wo_ref[...]       # (E, E)    = out_proj.weight.T
    bo = bo_ref[...]       # (1, E)
    w1 = w1_ref[...]       # (E, F)    = fc1.weight.T
    b1 = b1_ref[...]       # (1, F)
    w2 = w2_ref[...]       # (F, E)    = fc2.weight.T
    b2 = b2_ref[...]       # (1, E)
    wres = wres_ref[...]   # (1, E)

    for b in range(block_n):                       # static unroll over batch tile
        x = x_ref[b]                               # (L, E)
        residual = x

        # ---------------- attention branch ----------------
        h = _layernorm(x)                          # pre_attn_norm
        qkv = jnp.dot(h, wqkv, preferred_element_type=jnp.float32) + bqkv   # (L, 3E)
        q = qkv[:, :E]
        k = qkv[:, E:2 * E]
        v = qkv[:, 2 * E:]

        attn = jnp.zeros_like(x) + bo              # start from out-proj bias
        for hh in range(num_heads):
            sl = slice(hh * head_dim, (hh + 1) * head_dim)
            qh = q[:, sl] * scale                  # (L, hd)
            kh = k[:, sl]
            vh = v[:, sl]
            s = jax.lax.dot_general(qh, kh, (((1,), (1,)), ((), ())),
                                    preferred_element_type=jnp.float32)     # (L, L)
            s = s - jnp.max(s, axis=-1, keepdims=True)
            p = jnp.exp(s)
            p = p / jnp.sum(p, axis=-1, keepdims=True)
            ctx = jnp.dot(p, vh, preferred_element_type=jnp.float32)        # (L, hd)
            # distribute the out-projection over heads (avoids concat/transpose)
            attn = attn + jnp.dot(ctx, wo[sl, :], preferred_element_type=jnp.float32)

        # TODO(synk): attn_dropout / dropout are identity (inference forward).
        x = _layernorm(attn) + residual            # post_attn_norm + residual
        residual = x

        # ---------------- feed-forward branch ----------------
        h = _layernorm(x)                          # pre_fc_norm
        h = jnp.dot(h, w1, preferred_element_type=jnp.float32) + b1         # (L, F)
        h = _gelu(h)                               # act_dropout = identity
        h = _layernorm(h)                          # post_fc_norm
        h = jnp.dot(h, w2, preferred_element_type=jnp.float32) + b2         # (L, E)

        o_ref[b] = h + wres * residual             # dropout = id; w_resid residual


# ---------------------------------------------------------------------------
# Module wrapper (parameters initialized deterministically in-script)
# ---------------------------------------------------------------------------
class ParticleBlockPallas:
    """Pallas TPU port of ParticleBlock (inference forward pass)."""

    def __init__(self, embed_dim, num_heads=4, ffn_ratio=2, key=None):
        assert embed_dim % num_heads == 0
        self.embed_dim = embed_dim
        self.num_heads = num_heads
        self.head_dim = embed_dim // num_heads
        self.ffn_dim = embed_dim * ffn_ratio
        E, F = embed_dim, self.ffn_dim

        k0, k1, k2, k3, k4, k5 = jax.random.split(key, 6)
        # nn.MultiheadAttention init: xavier_uniform in_proj, zero biases.
        bnd_qkv = math.sqrt(6.0 / (E + 3 * E))
        wqkv = jax.random.uniform(k0, (3 * E, E), jnp.float32, -bnd_qkv, bnd_qkv)
        bqkv = jnp.zeros((3 * E,), jnp.float32)
        bnd_o = 1.0 / math.sqrt(E)
        wo = jax.random.uniform(k1, (E, E), jnp.float32, -bnd_o, bnd_o)
        bo = jnp.zeros((E,), jnp.float32)
        # nn.Linear default init for fc1 / fc2.
        bnd1 = 1.0 / math.sqrt(E)
        w1 = jax.random.uniform(k2, (F, E), jnp.float32, -bnd1, bnd1)
        b1 = jax.random.uniform(k3, (F,), jnp.float32, -bnd1, bnd1)
        bnd2 = 1.0 / math.sqrt(F)
        w2 = jax.random.uniform(k4, (E, F), jnp.float32, -bnd2, bnd2)
        b2 = jax.random.uniform(k5, (E,), jnp.float32, -bnd2, bnd2)
        wres = jnp.ones((E,), jnp.float32)

        # Pre-transpose weights to (in_features, out_features) so the kernel
        # never transposes on-chip; keep biases 2-D for clean broadcasting.
        self.wqkv_t = jnp.asarray(wqkv.T)        # (E, 3E)
        self.bqkv = bqkv.reshape(1, 3 * E)
        self.wo_t = jnp.asarray(wo.T)            # (E, E)
        self.bo = bo.reshape(1, E)
        self.w1_t = jnp.asarray(w1.T)            # (E, F)
        self.b1 = b1.reshape(1, F)
        self.w2_t = jnp.asarray(w2.T)            # (F, E)
        self.b2 = b2.reshape(1, E)
        self.wres = wres.reshape(1, E)

    def __call__(self, x, padding_mask=None, attn_mask=None, *, block_n=None):
        # x: (seq_len L, batch N, embed E) -- PyTorch nn.MultiheadAttention layout.
        # TODO(synk): key_padding_mask / attn_mask are not implemented.
        assert padding_mask is None and attn_mask is None
        L, N, E = x.shape
        assert E == self.embed_dim

        if block_n is None:
            block_n = min(N, 8)
            while N % block_n:
                block_n -= 1
        assert N % block_n == 0

        # (N, L, E): batch-gridded, lane-dense along the embedding axis.
        x_nle = jnp.transpose(x, (1, 0, 2))

        kernel = functools.partial(
            _particle_block_kernel,
            num_heads=self.num_heads, head_dim=self.head_dim, block_n=block_n)

        def _full(a):  # full-array VMEM-resident block (weights/biases)
            return pl.BlockSpec(a.shape, lambda n, _nd=a.ndim: (0,) * _nd)

        x_spec = pl.BlockSpec((block_n, L, E), lambda n: (n, 0, 0))

        out_nle = pl.pallas_call(
            kernel,
            out_shape=jax.ShapeDtypeStruct((N, L, E), jnp.float32),
            grid=(N // block_n,),
            in_specs=[x_spec,
                      _full(self.wqkv_t), _full(self.bqkv),
                      _full(self.wo_t), _full(self.bo),
                      _full(self.w1_t), _full(self.b1),
                      _full(self.w2_t), _full(self.b2),
                      _full(self.wres)],
            out_specs=x_spec,
            compiler_params=pltpu.CompilerParams(
                dimension_semantics=("parallel",)),
        )(x_nle, self.wqkv_t, self.bqkv, self.wo_t, self.bo,
          self.w1_t, self.b1, self.w2_t, self.b2, self.wres)

        return jnp.transpose(out_nle, (1, 0, 2))   # back to (L, N, E)


# ---------------------------------------------------------------------------
# Pure-JAX reference of the PyTorch forward (dropout = identity), for checking.
# ---------------------------------------------------------------------------
def _reference_forward(x, model):
    E, H = model.embed_dim, model.num_heads
    hd = E // H
    hp = jax.lax.Precision.HIGHEST
    L, N, _ = x.shape

    def ln(v):
        mu = jnp.mean(v, axis=-1, keepdims=True)
        var = jnp.mean((v - mu) ** 2, axis=-1, keepdims=True)
        return (v - mu) * jax.lax.rsqrt(var + LN_EPS)

    residual = x
    h = ln(x)
    qkv = jnp.einsum("lne,ef->lnf", h, model.wqkv_t, precision=hp) + model.bqkv[None]
    q, k, v = qkv[..., :E], qkv[..., E:2 * E], qkv[..., 2 * E:]
    q = q.reshape(L, N, H, hd) * (1.0 / math.sqrt(hd))
    k = k.reshape(L, N, H, hd)
    v = v.reshape(L, N, H, hd)
    s = jnp.einsum("qnhd,knhd->nhqk", q, k, precision=hp)
    p = jax.nn.softmax(s, axis=-1)
    ctx = jnp.einsum("nhqk,knhd->qnhd", p, v, precision=hp).reshape(L, N, E)
    attn = jnp.einsum("lne,ef->lnf", ctx, model.wo_t, precision=hp) + model.bo[None]
    x = ln(attn) + residual
    residual = x
    h = ln(x)
    h = jnp.einsum("lne,ef->lnf", h, model.w1_t, precision=hp) + model.b1[None]
    h = _gelu(h)
    h = ln(h)
    h = jnp.einsum("lnf,fe->lne", h, model.w2_t, precision=hp) + model.b2[None]
    return h + model.wres[None] * residual


if __name__ == "__main__":
    key = jax.random.PRNGKey(0)
    k_x, k_w = jax.random.split(key)

    L, N, E = 16, 4, 32            # seq, batch, embed
    num_heads, ffn_ratio = 4, 2

    x = jax.random.normal(k_x, (L, N, E), jnp.float32)
    model = ParticleBlockPallas(E, num_heads=num_heads, ffn_ratio=ffn_ratio, key=k_w)

    out = model(x, block_n=2)      # grid of 2 steps, 2 batch rows per step
    out = jax.block_until_ready(out)
    assert out.shape == (L, N, E)
    assert bool(jnp.all(jnp.isfinite(out)))

    ref = _reference_forward(x, model)
    err = float(jnp.max(jnp.abs(out - ref)))
    assert err < 2e-3, f"mismatch vs pure-JAX reference: max abs err {err}"

    print("KERNEL_OK")
</pallas_src>

<mosaic_0001>
module attributes {stable_mosaic.version = 11 : i64} {
  func.func @_particle_block_kernel(%arg0: i32, %arg1: memref<2x16x32xf32, #tpu.memory_space<vmem>>, %arg2: memref<32x96xf32, #tpu.memory_space<vmem>>, %arg3: memref<1x96xf32, #tpu.memory_space<vmem>>, %arg4: memref<32x32xf32, #tpu.memory_space<vmem>>, %arg5: memref<1x32xf32, #tpu.memory_space<vmem>>, %arg6: memref<32x64xf32, #tpu.memory_space<vmem>>, %arg7: memref<1x64xf32, #tpu.memory_space<vmem>>, %arg8: memref<64x32xf32, #tpu.memory_space<vmem>>, %arg9: memref<1x32xf32, #tpu.memory_space<vmem>>, %arg10: memref<1x32xf32, #tpu.memory_space<vmem>>, %arg11: memref<2x16x32xf32, #tpu.memory_space<vmem>>) attributes {dimension_semantics = [#tpu.dimension_semantics<parallel>], iteration_bounds = array<i64: 2>, scalar_prefetch = 0 : i64, scratch_operands = 0 : i64, tpu.core_type = #tpu.core_type<tc>, window_params = [{transform_indices = @transform_0, window_bounds = array<i64: 2, 16, 32>}, {pipeline_mode = #tpu.pipeline_mode<synchronous>, transform_indices = @transform_1, window_bounds = array<i64: 32, 96>}, {pipeline_mode = #tpu.pipeline_mode<synchronous>, transform_indices = @transform_2, window_bounds = array<i64: 1, 96>}, {pipeline_mode = #tpu.pipeline_mode<synchronous>, transform_indices = @transform_3, window_bounds = array<i64: 32, 32>}, {pipeline_mode = #tpu.pipeline_mode<synchronous>, transform_indices = @transform_4, window_bounds = array<i64: 1, 32>}, {pipeline_mode = #tpu.pipeline_mode<synchronous>, transform_indices = @transform_5, window_bounds = array<i64: 32, 64>}, {pipeline_mode = #tpu.pipeline_mode<synchronous>, transform_indices = @transform_6, window_bounds = array<i64: 1, 64>}, {pipeline_mode = #tpu.pipeline_mode<synchronous>, transform_indices = @transform_7, window_bounds = array<i64: 64, 32>}, {pipeline_mode = #tpu.pipeline_mode<synchronous>, transform_indices = @transform_8, window_bounds = array<i64: 1, 32>}, {pipeline_mode = #tpu.pipeline_mode<synchronous>, transform_indices = @transform_9, window_bounds = array<i64: 1, 32>}, {transform_indices = @transform_10, window_bounds = array<i64: 2, 16, 32>}]} {
    %c0 = arith.constant 0 : index
    %c0_0 = arith.constant 0 : index
    %0 = vector.load %arg2[%c0, %c0_0] : memref<32x96xf32, #tpu.memory_space<vmem>>, vector<32x96xf32>
    %c0_1 = arith.constant 0 : index
    %c0_2 = arith.constant 0 : index
    %1 = vector.load %arg3[%c0_1, %c0_2] : memref<1x96xf32, #tpu.memory_space<vmem>>, vector<1x96xf32>
    %c0_3 = arith.constant 0 : index
    %c0_4 = arith.constant 0 : index
    %2 = vector.load %arg4[%c0_3, %c0_4] : memref<32x32xf32, #tpu.memory_space<vmem>>, vector<32x32xf32>
    %c0_5 = arith.constant 0 : index
    %c0_6 = arith.constant 0 : index
    %3 = vector.load %arg5[%c0_5, %c0_6] : memref<1x32xf32, #tpu.memory_space<vmem>>, vector<1x32xf32>
    %c0_7 = arith.constant 0 : index
    %c0_8 = arith.constant 0 : index
    %4 = vector.load %arg6[%c0_7, %c0_8] : memref<32x64xf32, #tpu.memory_space<vmem>>, vector<32x64xf32>
    %c0_9 = arith.constant 0 : index
    %c0_10 = arith.constant 0 : index
    %5 = vector.load %arg7[%c0_9, %c0_10] : memref<1x64xf32, #tpu.memory_space<vmem>>, vector<1x64xf32>
    %c0_11 = arith.constant 0 : index
    %c0_12 = arith.constant 0 : index
    %6 = vector.load %arg8[%c0_11, %c0_12] : memref<64x32xf32, #tpu.memory_space<vmem>>, vector<64x32xf32>
    %c0_13 = arith.constant 0 : index
    %c0_14 = arith.constant 0 : index
    %7 = vector.load %arg9[%c0_13, %c0_14] : memref<1x32xf32, #tpu.memory_space<vmem>>, vector<1x32xf32>
    %c0_15 = arith.constant 0 : index
    %c0_16 = arith.constant 0 : index
    %8 = vector.load %arg10[%c0_15, %c0_16] : memref<1x32xf32, #tpu.memory_space<vmem>>, vector<1x32xf32>
    %c0_17 = arith.constant 0 : index
    %c0_18 = arith.constant 0 : index
    %c0_19 = arith.constant 0 : index
    %9 = vector.load %arg1[%c0_17, %c0_18, %c0_19] : memref<2x16x32xf32, #tpu.memory_space<vmem>>, vector<1x16x32xf32>
    %10 = vector.shape_cast %9 : vector<1x16x32xf32> to vector<16x32xf32>
    %cst = arith.constant dense<0.000000e+00> : vector<16xf32>
    %11 = vector.multi_reduction <add>, %10, %cst [1] : vector<16x32xf32> to vector<16xf32>
    %12 = vector.shape_cast %11 : vector<16xf32> to vector<16x1xf32>
    %cst_20 = arith.constant 3.200000e+01 : f32
    %13 = vector.broadcast %cst_20 : f32 to vector<16x1xf32>
    %14 = arith.divf %12, %13 : vector<16x1xf32>
    %15 = vector.broadcast %14 : vector<16x1xf32> to vector<16x32xf32>
    %16 = arith.subf %10, %15 : vector<16x32xf32>
    %17 = arith.mulf %16, %16 : vector<16x32xf32>
    %cst_21 = arith.constant dense<0.000000e+00> : vector<16xf32>
    %18 = vector.multi_reduction <add>, %17, %cst_21 [1] : vector<16x32xf32> to vector<16xf32>
    %19 = vector.shape_cast %18 : vector<16xf32> to vector<16x1xf32>
    %cst_22 = arith.constant 3.200000e+01 : f32
    %20 = vector.broadcast %cst_22 : f32 to vector<16x1xf32>
    %21 = arith.divf %19, %20 : vector<16x1xf32>
    %22 = vector.broadcast %14 : vector<16x1xf32> to vector<16x32xf32>
    %23 = arith.subf %10, %22 : vector<16x32xf32>
    %cst_23 = arith.constant 9.99999974E-6 : f32
    %24 = vector.broadcast %cst_23 : f32 to vector<16x1xf32>
    %25 = arith.addf %21, %24 : vector<16x1xf32>
    %26 = math.rsqrt %25 : vector<16x1xf32>
    %27 = vector.broadcast %26 : vector<16x1xf32> to vector<16x32xf32>
    %28 = arith.mulf %23, %27 : vector<16x32xf32>
    %cst_24 = arith.constant dense<0.000000e+00> : vector<16x96xf32>
    %29 = tpu.matmul %28, %0, %cst_24 {dimension_numbers = #tpu.dot_dimension_numbers<[1], [0], [0], [1], [0, 0, 1, 1], [], []>} : vector<16x32xf32>, vector<32x96xf32>, vector<16x96xf32> -> vector<16x96xf32>
    %30 = vector.broadcast %1 : vector<1x96xf32> to vector<16x96xf32>
    %31 = arith.addf %29, %30 : vector<16x96xf32>
    %32 = vector.extract_strided_slice %31 {offsets = [0, 0], sizes = [16, 32], strides = [1, 1]} : vector<16x96xf32> to vector<16x32xf32>
    %33 = vector.extract_strided_slice %31 {offsets = [0, 32], sizes = [16, 32], strides = [1, 1]} : vector<16x96xf32> to vector<16x32xf32>
    %34 = vector.extract_strided_slice %31 {offsets = [0, 64], sizes = [16, 32], strides = [1, 1]} : vector<16x96xf32> to vector<16x32xf32>
    %cst_25 = arith.constant 0.000000e+00 : f32
    %35 = vector.broadcast %cst_25 : f32 to vector<16x32xf32>
    %36 = vector.broadcast %3 : vector<1x32xf32> to vector<16x32xf32>
    %37 = arith.addf %35, %36 : vector<16x32xf32>
    %38 = vector.extract_strided_slice %32 {offsets = [0, 0], sizes = [16, 8], strides = [1, 1]} : vector<16x32xf32> to vector<16x8xf32>
    %cst_26 = arith.constant 0.353553385 : f32
    %39 = vector.broadcast %cst_26 : f32 to vector<16x8xf32>
    %40 = arith.mulf %38, %39 : vector<16x8xf32>
    %41 = vector.extract_strided_slice %33 {offsets = [0, 0], sizes = [16, 8], strides = [1, 1]} : vector<16x32xf32> to vector<16x8xf32>
    %42 = vector.extract_strided_slice %34 {offsets = [0, 0], sizes = [16, 8], strides = [1, 1]} : vector<16x32xf32> to vector<16x8xf32>
    %cst_27 = arith.constant dense<0.000000e+00> : vector<16x16xf32>
    %43 = tpu.matmul %40, %41, %cst_27 {dimension_numbers = #tpu.dot_dimension_numbers<[1], [1], [0], [0], [0, 0, 1, 0], [], []>} : vector<16x8xf32>, vector<16x8xf32>, vector<16x16xf32> -> vector<16x16xf32>
    %cst_28 = arith.constant dense<0xFF800000> : vector<16xf32>
    %44 = vector.multi_reduction <maximumf>, %43, %cst_28 [1] : vector<16x16xf32> to vector<16xf32>
    %45 = vector.shape_cast %44 : vector<16xf32> to vector<16x1xf32>
    %46 = vector.broadcast %45 : vector<16x1xf32> to vector<16x16xf32>
    %47 = arith.subf %43, %46 : vector<16x16xf32>
    %48 = math.exp %47 : vector<16x16xf32>
    %cst_29 = arith.constant dense<0.000000e+00> : vector<16xf32>
    %49 = vector.multi_reduction <add>, %48, %cst_29 [1] : vector<16x16xf32> to vector<16xf32>
    %50 = vector.shape_cast %49 : vector<16xf32> to vector<16x1xf32>
    %51 = vector.broadcast %50 : vector<16x1xf32> to vector<16x16xf32>
    %52 = arith.divf %48, %51 : vector<16x16xf32>
    %cst_30 = arith.constant dense<0.000000e+00> : vector<16x8xf32>
    %53 = tpu.matmul %52, %42, %cst_30 {dimension_numbers = #tpu.dot_dimension_numbers<[1], [0], [0], [1], [0, 0, 1, 1], [], []>} : vector<16x16xf32>, vector<16x8xf32>, vector<16x8xf32> -> vector<16x8xf32>
    %54 = vector.extract_strided_slice %2 {offsets = [0, 0], sizes = [8, 32], strides = [1, 1]} : vector<32x32xf32> to vector<8x32xf32>
    %cst_31 = arith.constant dense<0.000000e+00> : vector<16x32xf32>
    %55 = tpu.matmul %53, %54, %cst_31 {dimension_numbers = #tpu.dot_dimension_numbers<[1], [0], [0], [1], [0, 0, 1, 1], [], []>} : vector<16x8xf32>, vector<8x32xf32>, vector<16x32xf32> -> vector<16x32xf32>
    %56 = arith.addf %37, %55 : vector<16x32xf32>
    %57 = vector.extract_strided_slice %32 {offsets = [0, 8], sizes = [16, 8], strides = [1, 1]} : vector<16x32xf32> to vector<16x8xf32>
    %cst_32 = arith.constant 0.353553385 : f32
    %58 = vector.broadcast %cst_32 : f32 to vector<16x8xf32>
    %59 = arith.mulf %57, %58 : vector<16x8xf32>
    %60 = vector.extract_strided_slice %33 {offsets = [0, 8], sizes = [16, 8], strides = [1, 1]} : vector<16x32xf32> to vector<16x8xf32>
    %61 = vector.extract_strided_slice %34 {offsets = [0, 8], sizes = [16, 8], strides = [1, 1]} : vector<16x32xf32> to vector<16x8xf32>
    %cst_33 = arith.constant dense<0.000000e+00> : vector<16x16xf32>
    %62 = tpu.matmul %59, %60, %cst_33 {dimension_numbers = #tpu.dot_dimension_numbers<[1], [1], [0], [0], [0, 0, 1, 0], [], []>} : vector<16x8xf32>, vector<16x8xf32>, vector<16x16xf32> -> vector<16x16xf32>
    %cst_34 = arith.constant dense<0xFF800000> : vector<16xf32>
    %63 = vector.multi_reduction <maximumf>, %62, %cst_34 [1] : vector<16x16xf32> to vector<16xf32>
    %64 = vector.shape_cast %63 : vector<16xf32> to vector<16x1xf32>
    %65 = vector.broadcast %64 : vector<16x1xf32> to vector<16x16xf32>
    %66 = arith.subf %62, %65 : vector<16x16xf32>
    %67 = math.exp %66 : vector<16x16xf32>
    %cst_35 = arith.constant dense<0.000000e+00> : vector<16xf32>
    %68 = vector.multi_reduction <add>, %67, %cst_35 [1] : vector<16x16xf32> to vector<16xf32>
    %69 = vector.shape_cast %68 : vector<16xf32> to vector<16x1xf32>
    %70 = vector.broadcast %69 : vector<16x1xf32> to vector<16x16xf32>
    %71 = arith.divf %67, %70 : vector<16x16xf32>
    %cst_36 = arith.constant dense<0.000000e+00> : vector<16x8xf32>
    %72 = tpu.matmul %71, %61, %cst_36 {dimension_numbers = #tpu.dot_dimension_numbers<[1], [0], [0], [1], [0, 0, 1, 1], [], []>} : vector<16x16xf32>, vector<16x8xf32>, vector<16x8xf32> -> vector<16x8xf32>
    %73 = vector.extract_strided_slice %2 {offsets = [8, 0], sizes = [8, 32], strides = [1, 1]} : vector<32x32xf32> to vector<8x32xf32>
    %cst_37 = arith.constant dense<0.000000e+00> : vector<16x32xf32>
    %74 = tpu.matmul %72, %73, %cst_37 {dimension_numbers = #tpu.dot_dimension_numbers<[1], [0], [0], [1], [0, 0, 1, 1], [], []>} : vector<16x8xf32>, vector<8x32xf32>, vector<16x32xf32> -> vector<16x32xf32>
    %75 = arith.addf %56, %74 : vector<16x32xf32>
    %76 = vector.extract_strided_slice %32 {offsets = [0, 16], sizes = [16, 8], strides = [1, 1]} : vector<16x32xf32> to vector<16x8xf32>
    %cst_38 = arith.constant 0.353553385 : f32
    %77 = vector.broadcast %cst_38 : f32 to vector<16x8xf32>
    %78 = arith.mulf %76, %77 : vector<16x8xf32>
    %79 = vector.extract_strided_slice %33 {offsets = [0, 16], sizes = [16, 8], strides = [1, 1]} : vector<16x32xf32> to vector<16x8xf32>
    %80 = vector.extract_strided_slice %34 {offsets = [0, 16], sizes = [16, 8], strides = [1, 1]} : vector<16x32xf32> to vector<16x8xf32>
    %cst_39 = arith.constant dense<0.000000e+00> : vector<16x16xf32>
    %81 = tpu.matmul %78, %79, %cst_39 {dimension_numbers = #tpu.dot_dimension_numbers<[1], [1], [0], [0], [0, 0, 1, 0], [], []>} : vector<16x8xf32>, vector<16x8xf32>, vector<16x16xf32> -> vector<16x16xf32>
    %cst_40 = arith.constant dense<0xFF800000> : vector<16xf32>
    %82 = vector.multi_reduction <maximumf>, %81, %cst_40 [1] : vector<16x16xf32> to vector<16xf32>
    %83 = vector.shape_cast %82 : vector<16xf32> to vector<16x1xf32>
    %84 = vector.broadcast %83 : vector<16x1xf32> to vector<16x16xf32>
    %85 = arith.subf %81, %84 : vector<16x16xf32>
    %86 = math.exp %85 : vector<16x16xf32>
    %cst_41 = arith.constant dense<0.000000e+00> : vector<16xf32>
    %87 = vector.multi_reduction <add>, %86, %cst_41 [1] : vector<16x16xf32> to vector<16xf32>
    %88 = vector.shape_cast %87 : vector<16xf32> to vector<16x1xf32>
    %89 = vector.broadcast %88 : vector<16x1xf32> to vector<16x16xf32>
    %90 = arith.divf %86, %89 : vector<16x16xf32>
    %cst_42 = arith.constant dense<0.000000e+00> : vector<16x8xf32>
    %91 = tpu.matmul %90, %80, %cst_42 {dimension_numbers = #tpu.dot_dimension_numbers<[1], [0], [0], [1], [0, 0, 1, 1], [], []>} : vector<16x16xf32>, vector<16x8xf32>, vector<16x8xf32> -> vector<16x8xf32>
    %92 = vector.extract_strided_slice %2 {offsets = [16, 0], sizes = [8, 32], strides = [1, 1]} : vector<32x32xf32> to vector<8x32xf32>
    %cst_43 = arith.constant dense<0.000000e+00> : vector<16x32xf32>
    %93 = tpu.matmul %91, %92, %cst_43 {dimension_numbers = #tpu.dot_dimension_numbers<[1], [0], [0], [1], [0, 0, 1, 1], [], []>} : vector<16x8xf32>, vector<8x32xf32>, vector<16x32xf32> -> vector<16x32xf32>
    %94 = arith.addf %75, %93 : vector<16x32xf32>
    %95 = vector.extract_strided_slice %32 {offsets = [0, 24], sizes = [16, 8], strides = [1, 1]} : vector<16x32xf32> to vector<16x8xf32>
    %cst_44 = arith.constant 0.353553385 : f32
    %96 = vector.broadcast %cst_44 : f32 to vector<16x8xf32>
    %97 = arith.mulf %95, %96 : vector<16x8xf32>
    %98 = vector.extract_strided_slice %33 {offsets = [0, 24], sizes = [16, 8], strides = [1, 1]} : vector<16x32xf32> to vector<16x8xf32>
    %99 = vector.extract_strided_slice %34 {offsets = [0, 24], sizes = [16, 8], strides = [1, 1]} : vector<16x32xf32> to vector<16x8xf32>
    %cst_45 = arith.constant dense<0.000000e+00> : vector<16x16xf32>
    %100 = tpu.matmul %97, %98, %cst_45 {dimension_numbers = #tpu.dot_dimension_numbers<[1], [1], [0], [0], [0, 0, 1, 0], [], []>} : vector<16x8xf32>, vector<16x8xf32>, vector<16x16xf32> -> vector<16x16xf32>
    %cst_46 = arith.constant dense<0xFF800000> : vector<16xf32>
    %101 = vector.multi_reduction <maximumf>, %100, %cst_46 [1] : vector<16x16xf32> to vector<16xf32>
    %102 = vector.shape_cast %101 : vector<16xf32> to vector<16x1xf32>
    %103 = vector.broadcast %102 : vector<16x1xf32> to vector<16x16xf32>
    %104 = arith.subf %100, %103 : vector<16x16xf32>
    %105 = math.exp %104 : vector<16x16xf32>
    %cst_47 = arith.constant dense<0.000000e+00> : vector<16xf32>
    %106 = vector.multi_reduction <add>, %105, %cst_47 [1] : vector<16x16xf32> to vector<16xf32>
    %107 = vector.shape_cast %106 : vector<16xf32> to vector<16x1xf32>
    %108 = vector.broadcast %107 : vector<16x1xf32> to vector<16x16xf32>
    %109 = arith.divf %105, %108 : vector<16x16xf32>
    %cst_48 = arith.constant dense<0.000000e+00> : vector<16x8xf32>
    %110 = tpu.matmul %109, %99, %cst_48 {dimension_numbers = #tpu.dot_dimension_numbers<[1], [0], [0], [1], [0, 0, 1, 1], [], []>} : vector<16x16xf32>, vector<16x8xf32>, vector<16x8xf32> -> vector<16x8xf32>
    %111 = vector.extract_strided_slice %2 {offsets = [24, 0], sizes = [8, 32], strides = [1, 1]} : vector<32x32xf32> to vector<8x32xf32>
    %cst_49 = arith.constant dense<0.000000e+00> : vector<16x32xf32>
    %112 = tpu.matmul %110, %111, %cst_49 {dimension_numbers = #tpu.dot_dimension_numbers<[1], [0], [0], [1], [0, 0, 1, 1], [], []>} : vector<16x8xf32>, vector<8x32xf32>, vector<16x32xf32> -> vector<16x32xf32>
    %113 = arith.addf %94, %112 : vector<16x32xf32>
    %cst_50 = arith.constant dense<0.000000e+00> : vector<16xf32>
    %114 = vector.multi_reduction <add>, %113, %cst_50 [1] : vector<16x32xf32> to vector<16xf32>
    %115 = vector.shape_cast %114 : vector<16xf32> to vector<16x1xf32>
    %cst_51 = arith.constant 3.200000e+01 : f32
    %116 = vector.broadcast %cst_51 : f32 to vector<16x1xf32>
    %117 = arith.divf %115, %116 : vector<16x1xf32>
    %118 = vector.broadcast %117 : vector<16x1xf32> to vector<16x32xf32>
    %119 = arith.subf %113, %118 : vector<16x32xf32>
    %120 = arith.mulf %119, %119 : vector<16x32xf32>
    %cst_52 = arith.constant dense<0.000000e+00> : vector<16xf32>
    %121 = vector.multi_reduction <add>, %120, %cst_52 [1] : vector<16x32xf32> to vector<16xf32>
    %122 = vector.shape_cast %121 : vector<16xf32> to vector<16x1xf32>
    %cst_53 = arith.constant 3.200000e+01 : f32
    %123 = vector.broadcast %cst_53 : f32 to vector<16x1xf32>
    %124 = arith.divf %122, %123 : vector<16x1xf32>
    %125 = vector.broadcast %117 : vector<16x1xf32> to vector<16x32xf32>
    %126 = arith.subf %113, %125 : vector<16x32xf32>
    %cst_54 = arith.constant 9.99999974E-6 : f32
    %127 = vector.broadcast %cst_54 : f32 to vector<16x1xf32>
    %128 = arith.addf %124, %127 : vector<16x1xf32>
    %129 = math.rsqrt %128 : vector<16x1xf32>
    %130 = vector.broadcast %129 : vector<16x1xf32> to vector<16x32xf32>
    %131 = arith.mulf %126, %130 : vector<16x32xf32>
    %132 = arith.addf %131, %10 : vector<16x32xf32>
    %cst_55 = arith.constant dense<0.000000e+00> : vector<16xf32>
    %133 = vector.multi_reduction <add>, %132, %cst_55 [1] : vector<16x32xf32> to vector<16xf32>
    %134 = vector.shape_cast %133 : vector<16xf32> to vector<16x1xf32>
    %cst_56 = arith.constant 3.200000e+01 : f32
    %135 = vector.broadcast %cst_56 : f32 to vector<16x1xf32>
    %136 = arith.divf %134, %135 : vector<16x1xf32>
    %137 = vector.broadcast %136 : vector<16x1xf32> to vector<16x32xf32>
    %138 = arith.subf %132, %137 : vector<16x32xf32>
    %139 = arith.mulf %138, %138 : vector<16x32xf32>
    %cst_57 = arith.constant dense<0.000000e+00> : vector<16xf32>
    %140 = vector.multi_reduction <add>, %139, %cst_57 [1] : vector<16x32xf32> to vector<16xf32>
    %141 = vector.shape_cast %140 : vector<16xf32> to vector<16x1xf32>
    %cst_58 = arith.constant 3.200000e+01 : f32
    %142 = vector.broadcast %cst_58 : f32 to vector<16x1xf32>
    %143 = arith.divf %141, %142 : vector<16x1xf32>
    %144 = vector.broadcast %136 : vector<16x1xf32> to vector<16x32xf32>
    %145 = arith.subf %132, %144 : vector<16x32xf32>
    %cst_59 = arith.constant 9.99999974E-6 : f32
    %146 = vector.broadcast %cst_59 : f32 to vector<16x1xf32>
    %147 = arith.addf %143, %146 : vector<16x1xf32>
    %148 = math.rsqrt %147 : vector<16x1xf32>
    %149 = vector.broadcast %148 : vector<16x1xf32> to vector<16x32xf32>
    %150 = arith.mulf %145, %149 : vector<16x32xf32>
    %cst_60 = arith.constant dense<0.000000e+00> : vector<16x64xf32>
    %151 = tpu.matmul %150, %4, %cst_60 {dimension_numbers = #tpu.dot_dimension_numbers<[1], [0], [0], [1], [0, 0, 1, 1], [], []>} : vector<16x32xf32>, vector<32x64xf32>, vector<16x64xf32> -> vector<16x64xf32>
    %152 = vector.broadcast %5 : vector<1x64xf32> to vector<16x64xf32>
    %153 = arith.addf %151, %152 : vector<16x64xf32>
    %cst_61 = arith.constant 5.000000e-01 : f32
    %154 = vector.broadcast %cst_61 : f32 to vector<16x64xf32>
    %155 = arith.mulf %154, %153 : vector<16x64xf32>
    %cst_62 = arith.constant 0.707106769 : f32
    %156 = vector.broadcast %cst_62 : f32 to vector<16x64xf32>
    %157 = arith.mulf %153, %156 : vector<16x64xf32>
    %158 = math.absf %157 : vector<16x64xf32>
    %cst_63 = arith.constant 0.327591091 : f32
    %159 = vector.broadcast %cst_63 : f32 to vector<16x64xf32>
    %160 = arith.mulf %159, %158 : vector<16x64xf32>
    %cst_64 = arith.constant 1.000000e+00 : f32
    %161 = vector.broadcast %cst_64 : f32 to vector<16x64xf32>
    %162 = arith.addf %161, %160 : vector<16x64xf32>
    %cst_65 = arith.constant 1.000000e+00 : f32
    %163 = vector.broadcast %cst_65 : f32 to vector<16x64xf32>
    %164 = arith.divf %163, %162 : vector<16x64xf32>
    %cst_66 = arith.constant 1.06140542 : f32
    %165 = vector.broadcast %cst_66 : f32 to vector<16x64xf32>
    %166 = arith.mulf %165, %164 : vector<16x64xf32>
    %cst_67 = arith.constant -1.45315206 : f32
    %167 = vector.broadcast %cst_67 : f32 to vector<16x64xf32>
    %168 = arith.addf %166, %167 : vector<16x64xf32>
    %169 = arith.mulf %168, %164 : vector<16x64xf32>
    %cst_68 = arith.constant 1.42141378 : f32
    %170 = vector.broadcast %cst_68 : f32 to vector<16x64xf32>
    %171 = arith.addf %169, %170 : vector<16x64xf32>
    %172 = arith.mulf %171, %164 : vector<16x64xf32>
    %cst_69 = arith.constant -0.284496725 : f32
    %173 = vector.broadcast %cst_69 : f32 to vector<16x64xf32>
    %174 = arith.addf %172, %173 : vector<16x64xf32>
    %175 = arith.mulf %174, %164 : vector<16x64xf32>
    %cst_70 = arith.constant 0.254829586 : f32
    %176 = vector.broadcast %cst_70 : f32 to vector<16x64xf32>
    %177 = arith.addf %175, %176 : vector<16x64xf32>
    %178 = arith.mulf %177, %164 : vector<16x64xf32>
    %cst_71 = arith.constant 0.000000e+00 : f32
    %179 = vector.broadcast %cst_71 : f32 to vector<16x64xf32>
    %180 = arith.subf %179, %158 : vector<16x64xf32>
    %181 = arith.mulf %180, %158 : vector<16x64xf32>
    %182 = math.exp %181 : vector<16x64xf32>
    %183 = arith.mulf %178, %182 : vector<16x64xf32>
    %cst_72 = arith.constant 1.000000e+00 : f32
    %184 = vector.broadcast %cst_72 : f32 to vector<16x64xf32>
    %185 = arith.subf %184, %183 : vector<16x64xf32>
    %cst_73 = arith.constant 0.000000e+00 : f32
    %186 = vector.broadcast %cst_73 : f32 to vector<16x64xf32>
    %187 = arith.cmpf oge, %157, %186 : vector<16x64xf32>
    %cst_74 = arith.constant 0.000000e+00 : f32
    %188 = vector.broadcast %cst_74 : f32 to vector<16x64xf32>
    %189 = arith.subf %188, %185 : vector<16x64xf32>
    %190 = arith.select %187, %185, %189 : vector<16x64xi1>, vector<16x64xf32>
    %cst_75 = arith.constant 1.000000e+00 : f32
    %191 = vector.broadcast %cst_75 : f32 to vector<16x64xf32>
    %192 = arith.addf %191, %190 : vector<16x64xf32>
    %193 = arith.mulf %155, %192 : vector<16x64xf32>
    %cst_76 = arith.constant dense<0.000000e+00> : vector<16xf32>
    %194 = vector.multi_reduction <add>, %193, %cst_76 [1] : vector<16x64xf32> to vector<16xf32>
    %195 = vector.shape_cast %194 : vector<16xf32> to vector<16x1xf32>
    %cst_77 = arith.constant 6.400000e+01 : f32
    %196 = vector.broadcast %cst_77 : f32 to vector<16x1xf32>
    %197 = arith.divf %195, %196 : vector<16x1xf32>
    %198 = vector.broadcast %197 : vector<16x1xf32> to vector<16x64xf32>
    %199 = arith.subf %193, %198 : vector<16x64xf32>
    %200 = arith.mulf %199, %199 : vector<16x64xf32>
    %cst_78 = arith.constant dense<0.000000e+00> : vector<16xf32>
    %201 = vector.multi_reduction <add>, %200, %cst_78 [1] : vector<16x64xf32> to vector<16xf32>
    %202 = vector.shape_cast %201 : vector<16xf32> to vector<16x1xf32>
    %cst_79 = arith.constant 6.400000e+01 : f32
    %203 = vector.broadcast %cst_79 : f32 to vector<16x1xf32>
    %204 = arith.divf %202, %203 : vector<16x1xf32>
    %205 = vector.broadcast %197 : vector<16x1xf32> to vector<16x64xf32>
    %206 = arith.subf %193, %205 : vector<16x64xf32>
    %cst_80 = arith.constant 9.99999974E-6 : f32
    %207 = vector.broadcast %cst_80 : f32 to vector<16x1xf32>
    %208 = arith.addf %204, %207 : vector<16x1xf32>
    %209 = math.rsqrt %208 : vector<16x1xf32>
    %210 = vector.broadcast %209 : vector<16x1xf32> to vector<16x64xf32>
    %211 = arith.mulf %206, %210 : vector<16x64xf32>
    %cst_81 = arith.constant dense<0.000000e+00> : vector<16x32xf32>
    %212 = tpu.matmul %211, %6, %cst_81 {dimension_numbers = #tpu.dot_dimension_numbers<[1], [0], [0], [1], [0, 0, 1, 1], [], []>} : vector<16x64xf32>, vector<64x32xf32>, vector<16x32xf32> -> vector<16x32xf32>
    %213 = vector.broadcast %7 : vector<1x32xf32> to vector<16x32xf32>
    %214 = arith.addf %212, %213 : vector<16x32xf32>
    %215 = vector.broadcast %8 : vector<1x32xf32> to vector<16x32xf32>
    %216 = arith.mulf %215, %132 : vector<16x32xf32>
    %217 = arith.addf %214, %216 : vector<16x32xf32>
    %c0_82 = arith.constant 0 : index
    %c0_83 = arith.constant 0 : index
    %c0_84 = arith.constant 0 : index
    %218 = vector.load %arg11[%c0_82, %c0_83, %c0_84] : memref<2x16x32xf32, #tpu.memory_space<vmem>>, vector<1x16x32xf32>
    %219 = vector.shape_cast %218 : vector<1x16x32xf32> to vector<16x32xf32>
    %220 = vector.shape_cast %217 : vector<16x32xf32> to vector<1x16x32xf32>
    tpu.vector_store %arg11[%c0_82, %c0_83, %c0_84], %220 {strides = array<i32>} : memref<2x16x32xf32, #tpu.memory_space<vmem>>, vector<1x16x32xf32>,
    %c1 = arith.constant 1 : index
    %c0_85 = arith.constant 0 : index
    %c0_86 = arith.constant 0 : index
    %221 = vector.load %arg1[%c1, %c0_85, %c0_86] : memref<2x16x32xf32, #tpu.memory_space<vmem>>, vector<1x16x32xf32>
    %222 = vector.shape_cast %221 : vector<1x16x32xf32> to vector<16x32xf32>
    %cst_87 = arith.constant dense<0.000000e+00> : vector<16xf32>
    %223 = vector.multi_reduction <add>, %222, %cst_87 [1] : vector<16x32xf32> to vector<16xf32>
    %224 = vector.shape_cast %223 : vector<16xf32> to vector<16x1xf32>
    %cst_88 = arith.constant 3.200000e+01 : f32
    %225 = vector.broadcast %cst_88 : f32 to vector<16x1xf32>
    %226 = arith.divf %224, %225 : vector<16x1xf32>
    %227 = vector.broadcast %226 : vector<16x1xf32> to vector<16x32xf32>
    %228 = arith.subf %222, %227 : vector<16x32xf32>
    %229 = arith.mulf %228, %228 : vector<16x32xf32>
    %cst_89 = arith.constant dense<0.000000e+00> : vector<16xf32>
    %230 = vector.multi_reduction <add>, %229, %cst_89 [1] : vector<16x32xf32> to vector<16xf32>
    %231 = vector.shape_cast %230 : vector<16xf32> to vector<16x1xf32>
    %cst_90 = arith.constant 3.200000e+01 : f32
    %232 = vector.broadcast %cst_90 : f32 to vector<16x1xf32>
    %233 = arith.divf %231, %232 : vector<16x1xf32>
    %234 = vector.broadcast %226 : vector<16x1xf32> to vector<16x32xf32>
    %235 = arith.subf %222, %234 : vector<16x32xf32>
    %cst_91 = arith.constant 9.99999974E-6 : f32
    %236 = vector.broadcast %cst_91 : f32 to vector<16x1xf32>
    %237 = arith.addf %233, %236 : vector<16x1xf32>
    %238 = math.rsqrt %237 : vector<16x1xf32>
    %239 = vector.broadcast %238 : vector<16x1xf32> to vector<16x32xf32>
    %240 = arith.mulf %235, %239 : vector<16x32xf32>
    %cst_92 = arith.constant dense<0.000000e+00> : vector<16x96xf32>
    %241 = tpu.matmul %240, %0, %cst_92 {dimension_numbers = #tpu.dot_dimension_numbers<[1], [0], [0], [1], [0, 0, 1, 1], [], []>} : vector<16x32xf32>, vector<32x96xf32>, vector<16x96xf32> -> vector<16x96xf32>
    %242 = vector.broadcast %1 : vector<1x96xf32> to vector<16x96xf32>
    %243 = arith.addf %241, %242 : vector<16x96xf32>
    %244 = vector.extract_strided_slice %243 {offsets = [0, 0], sizes = [16, 32], strides = [1, 1]} : vector<16x96xf32> to vector<16x32xf32>
    %245 = vector.extract_strided_slice %243 {offsets = [0, 32], sizes = [16, 32], strides = [1, 1]} : vector<16x96xf32> to vector<16x32xf32>
    %246 = vector.extract_strided_slice %243 {offsets = [0, 64], sizes = [16, 32], strides = [1, 1]} : vector<16x96xf32> to vector<16x32xf32>
    %cst_93 = arith.constant 0.000000e+00 : f32
    %247 = vector.broadcast %cst_93 : f32 to vector<16x32xf32>
    %248 = vector.broadcast %3 : vector<1x32xf32> to vector<16x32xf32>
    %249 = arith.addf %247, %248 : vector<16x32xf32>
    %250 = vector.extract_strided_slice %244 {offsets = [0, 0], sizes = [16, 8], strides = [1, 1]} : vector<16x32xf32> to vector<16x8xf32>
    %cst_94 = arith.constant 0.353553385 : f32
    %251 = vector.broadcast %cst_94 : f32 to vector<16x8xf32>
    %252 = arith.mulf %250, %251 : vector<16x8xf32>
    %253 = vector.extract_strided_slice %245 {offsets = [0, 0], sizes = [16, 8], strides = [1, 1]} : vector<16x32xf32> to vector<16x8xf32>
    %254 = vector.extract_strided_slice %246 {offsets = [0, 0], sizes = [16, 8], strides = [1, 1]} : vector<16x32xf32> to vector<16x8xf32>
    %cst_95 = arith.constant dense<0.000000e+00> : vector<16x16xf32>
    %255 = tpu.matmul %252, %253, %cst_95 {dimension_numbers = #tpu.dot_dimension_numbers<[1], [1], [0], [0], [0, 0, 1, 0], [], []>} : vector<16x8xf32>, vector<16x8xf32>, vector<16x16xf32> -> vector<16x16xf32>
    %cst_96 = arith.constant dense<0xFF800000> : vector<16xf32>
    %256 = vector.multi_reduction <maximumf>, %255, %cst_96 [1] : vector<16x16xf32> to vector<16xf32>
    %257 = vector.shape_cast %256 : vector<16xf32> to vector<16x1xf32>
    %258 = vector.broadcast %257 : vector<16x1xf32> to vector<16x16xf32>
    %259 = arith.subf %255, %258 : vector<16x16xf32>
    %260 = math.exp %259 : vector<16x16xf32>
    %cst_97 = arith.constant dense<0.000000e+00> : vector<16xf32>
    %261 = vector.multi_reduction <add>, %260, %cst_97 [1] : vector<16x16xf32> to vector<16xf32>
    %262 = vector.shape_cast %261 : vector<16xf32> to vector<16x1xf32>
    %263 = vector.broadcast %262 : vector<16x1xf32> to vector<16x16xf32>
    %264 = arith.divf %260, %263 : vector<16x16xf32>
    %cst_98 = arith.constant dense<0.000000e+00> : vector<16x8xf32>
    %265 = tpu.matmul %264, %254, %cst_98 {dimension_numbers = #tpu.dot_dimension_numbers<[1], [0], [0], [1], [0, 0, 1, 1], [], []>} : vector<16x16xf32>, vector<16x8xf32>, vector<16x8xf32> -> vector<16x8xf32>
    %266 = vector.extract_strided_slice %2 {offsets = [0, 0], sizes = [8, 32], strides = [1, 1]} : vector<32x32xf32> to vector<8x32xf32>
    %cst_99 = arith.constant dense<0.000000e+00> : vector<16x32xf32>
    %267 = tpu.matmul %265, %266, %cst_99 {dimension_numbers = #tpu.dot_dimension_numbers<[1], [0], [0], [1], [0, 0, 1, 1], [], []>} : vector<16x8xf32>, vector<8x32xf32>, vector<16x32xf32> -> vector<16x32xf32>
    %268 = arith.addf %249, %267 : vector<16x32xf32>
    %269 = vector.extract_strided_slice %244 {offsets = [0, 8], sizes = [16, 8], strides = [1, 1]} : vector<16x32xf32> to vector<16x8xf32>
    %cst_100 = arith.constant 0.353553385 : f32
    %270 = vector.broadcast %cst_100 : f32 to vector<16x8xf32>
    %271 = arith.mulf %269, %270 : vector<16x8xf32>
    %272 = vector.extract_strided_slice %245 {offsets = [0, 8], sizes = [16, 8], strides = [1, 1]} : vector<16x32xf32> to vector<16x8xf32>
    %273 = vector.extract_strided_slice %246 {offsets = [0, 8], sizes = [16, 8], strides = [1, 1]} : vector<16x32xf32> to vector<16x8xf32>
    %cst_101 = arith.constant dense<0.000000e+00> : vector<16x16xf32>
    %274 = tpu.matmul %271, %272, %cst_101 {dimension_numbers = #tpu.dot_dimension_numbers<[1], [1], [0], [0], [0, 0, 1, 0], [], []>} : vector<16x8xf32>, vector<16x8xf32>, vector<16x16xf32> -> vector<16x16xf32>
    %cst_102 = arith.constant dense<0xFF800000> : vector<16xf32>
    %275 = vector.multi_reduction <maximumf>, %274, %cst_102 [1] : vector<16x16xf32> to vector<16xf32>
    %276 = vector.shape_cast %275 : vector<16xf32> to vector<16x1xf32>
    %277 = vector.broadcast %276 : vector<16x1xf32> to vector<16x16xf32>
    %278 = arith.subf %274, %277 : vector<16x16xf32>
    %279 = math.exp %278 : vector<16x16xf32>
    %cst_103 = arith.constant dense<0.000000e+00> : vector<16xf32>
    %280 = vector.multi_reduction <add>, %279, %cst_103 [1] : vector<16x16xf32> to vector<16xf32>
    %281 = vector.shape_cast %280 : vector<16xf32> to vector<16x1xf32>
    %282 = vector.broadcast %281 : vector<16x1xf32> to vector<16x16xf32>
    %283 = arith.divf %279, %282 : vector<16x16xf32>
    %cst_104 = arith.constant dense<0.000000e+00> : vector<16x8xf32>
    %284 = tpu.matmul %283, %273, %cst_104 {dimension_numbers = #tpu.dot_dimension_numbers<[1], [0], [0], [1], [0, 0, 1, 1], [], []>} : vector<16x16xf32>, vector<16x8xf32>, vector<16x8xf32> -> vector<16x8xf32>
    %285 = vector.extract_strided_slice %2 {offsets = [8, 0], sizes = [8, 32], strides = [1, 1]} : vector<32x32xf32> to vector<8x32xf32>
    %cst_105 = arith.constant dense<0.000000e+00> : vector<16x32xf32>
    %286 = tpu.matmul %284, %285, %cst_105 {dimension_numbers = #tpu.dot_dimension_numbers<[1], [0], [0], [1], [0, 0, 1, 1], [], []>} : vector<16x8xf32>, vector<8x32xf32>, vector<16x32xf32> -> vector<16x32xf32>
    %287 = arith.addf %268, %286 : vector<16x32xf32>
    %288 = vector.extract_strided_slice %244 {offsets = [0, 16], sizes = [16, 8], strides = [1, 1]} : vector<16x32xf32> to vector<16x8xf32>
    %cst_106 = arith.constant 0.353553385 : f32
    %289 = vector.broadcast %cst_106 : f32 to vector<16x8xf32>
    %290 = arith.mulf %288, %289 : vector<16x8xf32>
    %291 = vector.extract_strided_slice %245 {offsets = [0, 16], sizes = [16, 8], strides = [1, 1]} : vector<16x32xf32> to vector<16x8xf32>
    %292 = vector.extract_strided_slice %246 {offsets = [0, 16], sizes = [16, 8], strides = [1, 1]} : vector<16x32xf32> to vector<16x8xf32>
    %cst_107 = arith.constant dense<0.000000e+00> : vector<16x16xf32>
    %293 = tpu.matmul %290, %291, %cst_107 {dimension_numbers = #tpu.dot_dimension_numbers<[1], [1], [0], [0], [0, 0, 1, 0], [], []>} : vector<16x8xf32>, vector<16x8xf32>, vector<16x16xf32> -> vector<16x16xf32>
    %cst_108 = arith.constant dense<0xFF800000> : vector<16xf32>
    %294 = vector.multi_reduction <maximumf>, %293, %cst_108 [1] : vector<16x16xf32> to vector<16xf32>
    %295 = vector.shape_cast %294 : vector<16xf32> to vector<16x1xf32>
    %296 = vector.broadcast %295 : vector<16x1xf32> to vector<16x16xf32>
    %297 = arith.subf %293, %296 : vector<16x16xf32>
    %298 = math.exp %297 : vector<16x16xf32>
    %cst_109 = arith.constant dense<0.000000e+00> : vector<16xf32>
    %299 = vector.multi_reduction <add>, %298, %cst_109 [1] : vector<16x16xf32> to vector<16xf32>
    %300 = vector.shape_cast %299 : vector<16xf32> to vector<16x1xf32>
    %301 = vector.broadcast %300 : vector<16x1xf32> to vector<16x16xf32>
    %302 = arith.divf %298, %301 : vector<16x16xf32>
    %cst_110 = arith.constant dense<0.000000e+00> : vector<16x8xf32>
    %303 = tpu.matmul %302, %292, %cst_110 {dimension_numbers = #tpu.dot_dimension_numbers<[1], [0], [0], [1], [0, 0, 1, 1], [], []>} : vector<16x16xf32>, vector<16x8xf32>, vector<16x8xf32> -> vector<16x8xf32>
    %304 = vector.extract_strided_slice %2 {offsets = [16, 0], sizes = [8, 32], strides = [1, 1]} : vector<32x32xf32> to vector<8x32xf32>
    %cst_111 = arith.constant dense<0.000000e+00> : vector<16x32xf32>
    %305 = tpu.matmul %303, %304, %cst_111 {dimension_numbers = #tpu.dot_dimension_numbers<[1], [0], [0], [1], [0, 0, 1, 1], [], []>} : vector<16x8xf32>, vector<8x32xf32>, vector<16x32xf32> -> vector<16x32xf32>
    %306 = arith.addf %287, %305 : vector<16x32xf32>
    %307 = vector.extract_strided_slice %244 {offsets = [0, 24], sizes = [16, 8], strides = [1, 1]} : vector<16x32xf32> to vector<16x8xf32>
    %cst_112 = arith.constant 0.353553385 : f32
    %308 = vector.broadcast %cst_112 : f32 to vector<16x8xf32>
    %309 = arith.mulf %307, %308 : vector<16x8xf32>
    %310 = vector.extract_strided_slice %245 {offsets = [0, 24], sizes = [16, 8], strides = [1, 1]} : vector<16x32xf32> to vector<16x8xf32>
    %311 = vector.extract_strided_slice %246 {offsets = [0, 24], sizes = [16, 8], strides = [1, 1]} : vector<16x32xf32> to vector<16x8xf32>
    %cst_113 = arith.constant dense<0.000000e+00> : vector<16x16xf32>
    %312 = tpu.matmul %309, %310, %cst_113 {dimension_numbers = #tpu.dot_dimension_numbers<[1], [1], [0], [0], [0, 0, 1, 0], [], []>} : vector<16x8xf32>, vector<16x8xf32>, vector<16x16xf32> -> vector<16x16xf32>
    %cst_114 = arith.constant dense<0xFF800000> : vector<16xf32>
    %313 = vector.multi_reduction <maximumf>, %312, %cst_114 [1] : vector<16x16xf32> to vector<16xf32>
    %314 = vector.shape_cast %313 : vector<16xf32> to vector<16x1xf32>
    %315 = vector.broadcast %314 : vector<16x1xf32> to vector<16x16xf32>
    %316 = arith.subf %312, %315 : vector<16x16xf32>
    %317 = math.exp %316 : vector<16x16xf32>
    %cst_115 = arith.constant dense<0.000000e+00> : vector<16xf32>
    %318 = vector.multi_reduction <add>, %317, %cst_115 [1] : vector<16x16xf32> to vector<16xf32>
    %319 = vector.shape_cast %318 : vector<16xf32> to vector<16x1xf32>
    %320 = vector.broadcast %319 : vector<16x1xf32> to vector<16x16xf32>
    %321 = arith.divf %317, %320 : vector<16x16xf32>
    %cst_116 = arith.constant dense<0.000000e+00> : vector<16x8xf32>
    %322 = tpu.matmul %321, %311, %cst_116 {dimension_numbers = #tpu.dot_dimension_numbers<[1], [0], [0], [1], [0, 0, 1, 1], [], []>} : vector<16x16xf32>, vector<16x8xf32>, vector<16x8xf32> -> vector<16x8xf32>
    %323 = vector.extract_strided_slice %2 {offsets = [24, 0], sizes = [8, 32], strides = [1, 1]} : vector<32x32xf32> to vector<8x32xf32>
    %cst_117 = arith.constant dense<0.000000e+00> : vector<16x32xf32>
    %324 = tpu.matmul %322, %323, %cst_117 {dimension_numbers = #tpu.dot_dimension_numbers<[1], [0], [0], [1], [0, 0, 1, 1], [], []>} : vector<16x8xf32>, vector<8x32xf32>, vector<16x32xf32> -> vector<16x32xf32>
    %325 = arith.addf %306, %324 : vector<16x32xf32>
    %cst_118 = arith.constant dense<0.000000e+00> : vector<16xf32>
    %326 = vector.multi_reduction <add>, %325, %cst_118 [1] : vector<16x32xf32> to vector<16xf32>
    %327 = vector.shape_cast %326 : vector<16xf32> to vector<16x1xf32>
    %cst_119 = arith.constant 3.200000e+01 : f32
    %328 = vector.broadcast %cst_119 : f32 to vector<16x1xf32>
    %329 = arith.divf %327, %328 : vector<16x1xf32>
    %330 = vector.broadcast %329 : vector<16x1xf32> to vector<16x32xf32>
    %331 = arith.subf %325, %330 : vector<16x32xf32>
    %332 = arith.mulf %331, %331 : vector<16x32xf32>
    %cst_120 = arith.constant dense<0.000000e+00> : vector<16xf32>
    %333 = vector.multi_reduction <add>, %332, %cst_120 [1] : vector<16x32xf32> to vector<16xf32>
    %334 = vector.shape_cast %333 : vector<16xf32> to vector<16x1xf32>
    %cst_121 = arith.constant 3.200000e+01 : f32
    %335 = vector.broadcast %cst_121 : f32 to vector<16x1xf32>
    %336 = arith.divf %334, %335 : vector<16x1xf32>
    %337 = vector.broadcast %329 : vector<16x1xf32> to vector<16x32xf32>
    %338 = arith.subf %325, %337 : vector<16x32xf32>
    %cst_122 = arith.constant 9.99999974E-6 : f32
    %339 = vector.broadcast %cst_122 : f32 to vector<16x1xf32>
    %340 = arith.addf %336, %339 : vector<16x1xf32>
    %341 = math.rsqrt %340 : vector<16x1xf32>
    %342 = vector.broadcast %341 : vector<16x1xf32> to vector<16x32xf32>
    %343 = arith.mulf %338, %342 : vector<16x32xf32>
    %344 = arith.addf %343, %222 : vector<16x32xf32>
    %cst_123 = arith.constant dense<0.000000e+00> : vector<16xf32>
    %345 = vector.multi_reduction <add>, %344, %cst_123 [1] : vector<16x32xf32> to vector<16xf32>
    %346 = vector.shape_cast %345 : vector<16xf32> to vector<16x1xf32>
    %cst_124 = arith.constant 3.200000e+01 : f32
    %347 = vector.broadcast %cst_124 : f32 to vector<16x1xf32>
    %348 = arith.divf %346, %347 : vector<16x1xf32>
    %349 = vector.broadcast %348 : vector<16x1xf32> to vector<16x32xf32>
    %350 = arith.subf %344, %349 : vector<16x32xf32>
    %351 = arith.mulf %350, %350 : vector<16x32xf32>
    %cst_125 = arith.constant dense<0.000000e+00> : vector<16xf32>
    %352 = vector.multi_reduction <add>, %351, %cst_125 [1] : vector<16x32xf32> to vector<16xf32>
    %353 = vector.shape_cast %352 : vector<16xf32> to vector<16x1xf32>
    %cst_126 = arith.constant 3.200000e+01 : f32
    %354 = vector.broadcast %cst_126 : f32 to vector<16x1xf32>
    %355 = arith.divf %353, %354 : vector<16x1xf32>
    %356 = vector.broadcast %348 : vector<16x1xf32> to vector<16x32xf32>
    %357 = arith.subf %344, %356 : vector<16x32xf32>
    %cst_127 = arith.constant 9.99999974E-6 : f32
    %358 = vector.broadcast %cst_127 : f32 to vector<16x1xf32>
    %359 = arith.addf %355, %358 : vector<16x1xf32>
    %360 = math.rsqrt %359 : vector<16x1xf32>
    %361 = vector.broadcast %360 : vector<16x1xf32> to vector<16x32xf32>
    %362 = arith.mulf %357, %361 : vector<16x32xf32>
    %cst_128 = arith.constant dense<0.000000e+00> : vector<16x64xf32>
    %363 = tpu.matmul %362, %4, %cst_128 {dimension_numbers = #tpu.dot_dimension_numbers<[1], [0], [0], [1], [0, 0, 1, 1], [], []>} : vector<16x32xf32>, vector<32x64xf32>, vector<16x64xf32> -> vector<16x64xf32>
    %364 = vector.broadcast %5 : vector<1x64xf32> to vector<16x64xf32>
    %365 = arith.addf %363, %364 : vector<16x64xf32>
    %cst_129 = arith.constant 5.000000e-01 : f32
    %366 = vector.broadcast %cst_129 : f32 to vector<16x64xf32>
    %367 = arith.mulf %366, %365 : vector<16x64xf32>
    %cst_130 = arith.constant 0.707106769 : f32
    %368 = vector.broadcast %cst_130 : f32 to vector<16x64xf32>
    %369 = arith.mulf %365, %368 : vector<16x64xf32>
    %370 = math.absf %369 : vector<16x64xf32>
    %cst_131 = arith.constant 0.327591091 : f32
    %371 = vector.broadcast %cst_131 : f32 to vector<16x64xf32>
    %372 = arith.mulf %371, %370 : vector<16x64xf32>
    %cst_132 = arith.constant 1.000000e+00 : f32
    %373 = vector.broadcast %cst_132 : f32 to vector<16x64xf32>
    %374 = arith.addf %373, %372 : vector<16x64xf32>
    %cst_133 = arith.constant 1.000000e+00 : f32
    %375 = vector.broadcast %cst_133 : f32 to vector<16x64xf32>
    %376 = arith.divf %375, %374 : vector<16x64xf32>
    %cst_134 = arith.constant 1.06140542 : f32
    %377 = vector.broadcast %cst_134 : f32 to vector<16x64xf32>
    %378 = arith.mulf %377, %376 : vector<16x64xf32>
    %cst_135 = arith.constant -1.45315206 : f32
    %379 = vector.broadcast %cst_135 : f32 to vector<16x64xf32>
    %380 = arith.addf %378, %379 : vector<16x64xf32>
    %381 = arith.mulf %380, %376 : vector<16x64xf32>
    %cst_136 = arith.constant 1.42141378 : f32
    %382 = vector.broadcast %cst_136 : f32 to vector<16x64xf32>
    %383 = arith.addf %381, %382 : vector<16x64xf32>
    %384 = arith.mulf %383, %376 : vector<16x64xf32>
    %cst_137 = arith.constant -0.284496725 : f32
    %385 = vector.broadcast %cst_137 : f32 to vector<16x64xf32>
    %386 = arith.addf %384, %385 : vector<16x64xf32>
    %387 = arith.mulf %386, %376 : vector<16x64xf32>
    %cst_138 = arith.constant 0.254829586 : f32
    %388 = vector.broadcast %cst_138 : f32 to vector<16x64xf32>
    %389 = arith.addf %387, %388 : vector<16x64xf32>
    %390 = arith.mulf %389, %376 : vector<16x64xf32>
    %cst_139 = arith.constant 0.000000e+00 : f32
    %391 = vector.broadcast %cst_139 : f32 to vector<16x64xf32>
    %392 = arith.subf %391, %370 : vector<16x64xf32>
    %393 = arith.mulf %392, %370 : vector<16x64xf32>
    %394 = math.exp %393 : vector<16x64xf32>
    %395 = arith.mulf %390, %394 : vector<16x64xf32>
    %cst_140 = arith.constant 1.000000e+00 : f32
    %396 = vector.broadcast %cst_140 : f32 to vector<16x64xf32>
    %397 = arith.subf %396, %395 : vector<16x64xf32>
    %cst_141 = arith.constant 0.000000e+00 : f32
    %398 = vector.broadcast %cst_141 : f32 to vector<16x64xf32>
    %399 = arith.cmpf oge, %369, %398 : vector<16x64xf32>
    %cst_142 = arith.constant 0.000000e+00 : f32
    %400 = vector.broadcast %cst_142 : f32 to vector<16x64xf32>
    %401 = arith.subf %400, %397 : vector<16x64xf32>
    %402 = arith.select %399, %397, %401 : vector<16x64xi1>, vector<16x64xf32>
    %cst_143 = arith.constant 1.000000e+00 : f32
    %403 = vector.broadcast %cst_143 : f32 to vector<16x64xf32>
    %404 = arith.addf %403, %402 : vector<16x64xf32>
    %405 = arith.mulf %367, %404 : vector<16x64xf32>
    %cst_144 = arith.constant dense<0.000000e+00> : vector<16xf32>
    %406 = vector.multi_reduction <add>, %405, %cst_144 [1] : vector<16x64xf32> to vector<16xf32>
    %407 = vector.shape_cast %406 : vector<16xf32> to vector<16x1xf32>
    %cst_145 = arith.constant 6.400000e+01 : f32
    %408 = vector.broadcast %cst_145 : f32 to vector<16x1xf32>
    %409 = arith.divf %407, %408 : vector<16x1xf32>
    %410 = vector.broadcast %409 : vector<16x1xf32> to vector<16x64xf32>
    %411 = arith.subf %405, %410 : vector<16x64xf32>
    %412 = arith.mulf %411, %411 : vector<16x64xf32>
    %cst_146 = arith.constant dense<0.000000e+00> : vector<16xf32>
    %413 = vector.multi_reduction <add>, %412, %cst_146 [1] : vector<16x64xf32> to vector<16xf32>
    %414 = vector.shape_cast %413 : vector<16xf32> to vector<16x1xf32>
    %cst_147 = arith.constant 6.400000e+01 : f32
    %415 = vector.broadcast %cst_147 : f32 to vector<16x1xf32>
    %416 = arith.divf %414, %415 : vector<16x1xf32>
    %417 = vector.broadcast %409 : vector<16x1xf32> to vector<16x64xf32>
    %418 = arith.subf %405, %417 : vector<16x64xf32>
    %cst_148 = arith.constant 9.99999974E-6 : f32
    %419 = vector.broadcast %cst_148 : f32 to vector<16x1xf32>
    %420 = arith.addf %416, %419 : vector<16x1xf32>
    %421 = math.rsqrt %420 : vector<16x1xf32>
    %422 = vector.broadcast %421 : vector<16x1xf32> to vector<16x64xf32>
    %423 = arith.mulf %418, %422 : vector<16x64xf32>
    %cst_149 = arith.constant dense<0.000000e+00> : vector<16x32xf32>
    %424 = tpu.matmul %423, %6, %cst_149 {dimension_numbers = #tpu.dot_dimension_numbers<[1], [0], [0], [1], [0, 0, 1, 1], [], []>} : vector<16x64xf32>, vector<64x32xf32>, vector<16x32xf32> -> vector<16x32xf32>
    %425 = vector.broadcast %7 : vector<1x32xf32> to vector<16x32xf32>
    %426 = arith.addf %424, %425 : vector<16x32xf32>
    %427 = vector.broadcast %8 : vector<1x32xf32> to vector<16x32xf32>
    %428 = arith.mulf %427, %344 : vector<16x32xf32>
    %429 = arith.addf %426, %428 : vector<16x32xf32>
    %c1_150 = arith.constant 1 : index
    %c0_151 = arith.constant 0 : index
    %c0_152 = arith.constant 0 : index
    %430 = vector.load %arg11[%c1_150, %c0_151, %c0_152] : memref<2x16x32xf32, #tpu.memory_space<vmem>>, vector<1x16x32xf32>
    %431 = vector.shape_cast %430 : vector<1x16x32xf32> to vector<16x32xf32>
    %432 = vector.shape_cast %429 : vector<16x32xf32> to vector<1x16x32xf32>
    tpu.vector_store %arg11[%c1_150, %c0_151, %c0_152], %432 {strides = array<i32>} : memref<2x16x32xf32, #tpu.memory_space<vmem>>, vector<1x16x32xf32>,
    return
  }
  func.func @transform_0(%arg0: i32) -> (i32, i32, i32) {
    %c0_i32 = arith.constant 0 : i32
    %c0_i32_0 = arith.constant 0 : i32
    %c0_i32_1 = arith.constant 0 : i32
    return %arg0, %c0_i32, %c0_i32_0 : i32, i32, i32
  }
  func.func @transform_1(%arg0: i32) -> (i32, i32) {
    %c0_i32 = arith.constant 0 : i32
    %c0_i32_0 = arith.constant 0 : i32
    %c0_i32_1 = arith.constant 0 : i32
    return %c0_i32, %c0_i32_0 : i32, i32
  }
  func.func @transform_2(%arg0: i32) -> (i32, i32) {
    %c0_i32 = arith.constant 0 : i32
    %c0_i32_0 = arith.constant 0 : i32
    %c0_i32_1 = arith.constant 0 : i32
    return %c0_i32, %c0_i32_0 : i32, i32
  }
  func.func @transform_3(%arg0: i32) -> (i32, i32) {
    %c0_i32 = arith.constant 0 : i32
    %c0_i32_0 = arith.constant 0 : i32
    %c0_i32_1 = arith.constant 0 : i32
    return %c0_i32, %c0_i32_0 : i32, i32
  }
  func.func @transform_4(%arg0: i32) -> (i32, i32) {
    %c0_i32 = arith.constant 0 : i32
    %c0_i32_0 = arith.constant 0 : i32
    %c0_i32_1 = arith.constant 0 : i32
    return %c0_i32, %c0_i32_0 : i32, i32
  }
  func.func @transform_5(%arg0: i32) -> (i32, i32) {
    %c0_i32 = arith.constant 0 : i32
    %c0_i32_0 = arith.constant 0 : i32
    %c0_i32_1 = arith.constant 0 : i32
    return %c0_i32, %c0_i32_0 : i32, i32
  }
  func.func @transform_6(%arg0: i32) -> (i32, i32) {
    %c0_i32 = arith.constant 0 : i32
    %c0_i32_0 = arith.constant 0 : i32
    %c0_i32_1 = arith.constant 0 : i32
    return %c0_i32, %c0_i32_0 : i32, i32
  }
  func.func @transform_7(%arg0: i32) -> (i32, i32) {
    %c0_i32 = arith.constant 0 : i32
    %c0_i32_0 = arith.constant 0 : i32
    %c0_i32_1 = arith.constant 0 : i32
    return %c0_i32, %c0_i32_0 : i32, i32
  }
  func.func @transform_8(%arg0: i32) -> (i32, i32) {
    %c0_i32 = arith.constant 0 : i32
    %c0_i32_0 = arith.constant 0 : i32
    %c0_i32_1 = arith.constant 0 : i32
    return %c0_i32, %c0_i32_0 : i32, i32
  }
  func.func @transform_9(%arg0: i32) -> (i32, i32) {
    %c0_i32 = arith.constant 0 : i32
    %c0_i32_0 = arith.constant 0 : i32
    %c0_i32_1 = arith.constant 0 : i32
    return %c0_i32, %c0_i32_0 : i32, i32
  }
  func.func @transform_10(%arg0: i32) -> (i32, i32, i32) {
    %c0_i32 = arith.constant 0 : i32
    %c0_i32_0 = arith.constant 0 : i32
    %c0_i32_1 = arith.constant 0 : i32
    return %arg0, %c0_i32, %c0_i32_0 : i32, i32, i32
  }
}

</mosaic_0001>

<llo_original>
// kernel: tpu_custom_call.1
$region0: #{tpu_custom_call.1}
  #allocation0 [shape = 'u32[]', space=smem, size = 0x4, offset = 0x4, fixed_abs, tag = 'smem constant byte address 0x4 - core index']
  #allocation1 [shape = 'u32[144,128]{1,0:T(1,128)}', space=vmem, size = 0x12000, scoped, tag = 'internal scratch']
  %s0 = inlined_call_operand.vmem [shape: f32[4,16,32], index: 0, kind: input, shape index: {}]
  %s1 = inlined_call_operand.vmem [shape: f32[32,96], index: 1, kind: input, shape index: {}]
  %s2 = inlined_call_operand.vmem [shape: f32[1,96], index: 2, kind: input, shape index: {}]
  %s3 = inlined_call_operand.hbm [shape: f32[32,32], index: 3, kind: input, shape index: {}]
  %s4 = inlined_call_operand.vmem [shape: f32[1,32], index: 4, kind: input, shape index: {}]
  %s5 = inlined_call_operand.hbm [shape: f32[32,64], index: 5, kind: input, shape index: {}]
  %s6 = inlined_call_operand.vmem [shape: f32[1,64], index: 6, kind: input, shape index: {}]
  %s7 = inlined_call_operand.vmem [shape: f32[64,32], index: 7, kind: input, shape index: {}]
  %s8 = inlined_call_operand.vmem [shape: f32[1,32], index: 8, kind: input, shape index: {}]
  %s9 = inlined_call_operand.vmem [shape: f32[1,32], index: 9, kind: input, shape index: {}]
  %s10 = inlined_call_operand.hbm [shape: f32[4,16,32], index: 10, kind: output, shape index: {}]
  %s11 = sld [smem:[#allocation0]]
  $region81: #{tpu_custom_call.1} parent=0
    _
  %s13 = ssub.s32 1, %s11
  %s14 = scalar_select 0, %s13, %s11
  $region1: #{tpu_custom_call.1} parent=0
    #allocation2 [shape = 'u8[16384]{0}', space=vmem, size = 0x4000, scoped, tag = 'input window, operand 3, single buffered']
    #allocation3 [shape = 's32[2]{0}', space=sflag, size = 0x8, scoped, tag = 'scoped memory for tpu_custom_call.1']
    #allocation4 [shape = 's32[2]{0}', space=sflag, size = 0x8, scoped, tag = 'scoped memory for tpu_custom_call.1']
    #allocation5 [shape = 'u8[16384]{0}', space=vmem, size = 0x4000, scoped, tag = 'input window, operand 5, single buffered']
    #allocation6 [shape = 's32[1]{0}', space=sflag, size = 0x4, scoped, tag = 'scoped memory for tpu_custom_call.1']
    #allocation7 [shape = 'u8[32768]{0}', space=vmem, size = 0x8000, scoped, tag = 'output window, operand 0']
    %15 = vsyncpa [#allocation3], 0
    %16 = vsyncpa [#allocation6], 0
    %17 = vsyncpa [#allocation4], 0
    %s18 = scalar_lea.sflag [#allocation4], 1
    %19 = vsyncpa %s18, 0
    loop: start=0, step=1, limit=4
    $region2: #{tpu_custom_call.1} parent=1 // loop_pre_header
      _
    $region3: #{tpu_custom_call.1} parent=1 // loop_header
      %s21 = sphi 0, %s25
      %p22 = scmp.ge.s32.totalorder %s21, 4
      %s31 = sphi 0, %s33
      %s34 = sphi 0, %s31
      %s35 = sphi 0, %s34
      %s51 = sphi 0, %s35
      %s55 = sphi 0, %s55
      %s57 = sphi 0, %s55
      %s58 = sphi 0, %s57
      %s72 = sphi 0, %s58
      %s76 = sphi 0, %s76
      %s78 = sphi 0, %s76
      %s79 = sphi 0, %s78
      %s93 = sphi 0, %s79
      %s97 = sphi 0, %s97
      %s99 = sphi 0, %s97
      %s100 = sphi 0, %s99
      %s114 = sphi 0, %s100
      %s118 = sphi 0, %s118
      %s120 = sphi 0, %s118
      %s121 = sphi 0, %s120
      %s135 = sphi 0, %s121
      %s139 = sphi 0, %s139
      %s141 = sphi 0, %s139
      %s142 = sphi 0, %s141
      %s156 = sphi 0, %s142
      %s160 = sphi 0, %s160
      %s162 = sphi 0, %s160
      %s163 = sphi 0, %s162
      %s177 = sphi 0, %s163
      %s181 = sphi 0, %s181
      %s183 = sphi 0, %s181
      %s184 = sphi 0, %s183
      %s198 = sphi 0, %s184
      %s202 = sphi 0, %s202
      %s204 = sphi 0, %s202
      %s205 = sphi 0, %s204
      %s219 = sphi 0, %s205
      %s223 = sphi 0, %s223
      %s225 = sphi 0, %s223
      %s226 = sphi 0, %s225
      %s240 = sphi 0, %s226
      %s246 = sphi 0, %s248
      %s249 = sphi 0, %s246
      %s250 = sphi 0, %s249
      %s266 = sphi 0, %s250
    $region4: #{tpu_custom_call.1} parent=1 // loop_header_branch
      %24 = sbr.rel (%p22) target = $region8
    $region5: #{tpu_custom_call.1} parent=1 // loop_body
      %s26 = ssub.s32 %s21, 1
      %s27 = ssub.s32 %s21, 2
      %s28 = sadd.s32 %s21, 1
      %s29 = ssub.s32 %s21, %s28
      %p30 = scmp.eq.s32.totalorder %s29, 0
      %s32 = sadd.s32 %s31, 1
      %s33 = scalar_select %p30, %s31, %s32
      %p36 = pneg %p30
      %p37 = scmp.eq.s32.totalorder %s21, 1
      %p38 = por %p36, %p37
      %p39 = scmp.ne.s32.totalorder %s31, %s34
      %p40 = scmp.eq.s32.totalorder %s21, 0
      %p41 = por %p39, %p40
      %p42 = scmp.ne.s32.totalorder %s31, %s34
      %p43 = scmp.eq.s32.totalorder %s26, 1
      %p44 = por %p42, %p43
      %p45 = scmp.ne.s32.totalorder %s34, %s35
      %p46 = scmp.eq.s32.totalorder %s26, 0
      %p47 = por %p45, %p46
      %p48 = scmp.ne.s32.totalorder %s34, %s35
      %p49 = scmp.eq.s32.totalorder %s27, 1
      %p50 = por %p48, %p49
      %p52 = scmp.ne.s32.totalorder %s35, %s51
      %p53 = scmp.eq.s32.totalorder %s27, 0
      %p54 = por %p52, %p53
      %s56 = sadd.s32 %s55, 1
      %p59 = scmp.eq.s32.totalorder %s21, 1
      %p60 = scmp.ne.s32.totalorder %s55, %s57
      %p61 = scmp.eq.s32.totalorder %s21, 0
      %p62 = por %p60, %p61
      %p63 = scmp.ne.s32.totalorder %s55, %s57
      %p64 = scmp.eq.s32.totalorder %s26, 1
      %p65 = por %p63, %p64
      %p66 = scmp.ne.s32.totalorder %s57, %s58
      %p67 = scmp.eq.s32.totalorder %s26, 0
      %p68 = por %p66, %p67
      %p69 = scmp.ne.s32.totalorder %s57, %s58
      %p70 = scmp.eq.s32.totalorder %s27, 1
      %p71 = por %p69, %p70
      %p73 = scmp.ne.s32.totalorder %s58, %s72
      %p74 = scmp.eq.s32.totalorder %s27, 0
      %p75 = por %p73, %p74
      %s77 = sadd.s32 %s76, 1
      %p80 = scmp.eq.s32.totalorder %s21, 1
      %p81 = scmp.ne.s32.totalorder %s76, %s78
      %p82 = scmp.eq.s32.totalorder %s21, 0
      %p83 = por %p81, %p82
      %p84 = scmp.ne.s32.totalorder %s76, %s78
      %p85 = scmp.eq.s32.totalorder %s26, 1
      %p86 = por %p84, %p85
      %p87 = scmp.ne.s32.totalorder %s78, %s79
      %p88 = scmp.eq.s32.totalorder %s26, 0
      %p89 = por %p87, %p88
      %p90 = scmp.ne.s32.totalorder %s78, %s79
      %p91 = scmp.eq.s32.totalorder %s27, 1
      %p92 = por %p90, %p91
      %p94 = scmp.ne.s32.totalorder %s79, %s93
      %p95 = scmp.eq.s32.totalorder %s27, 0
      %p96 = por %p94, %p95
      %s98 = sadd.s32 %s97, 1
      %p101 = scmp.eq.s32.totalorder %s21, 1
      %p102 = scmp.ne.s32.totalorder %s97, %s99
      %p103 = scmp.eq.s32.totalorder %s21, 0
      %p104 = por %p102, %p103
      %p105 = scmp.ne.s32.totalorder %s97, %s99
      %p106 = scmp.eq.s32.totalorder %s26, 1
      %p107 = por %p105, %p106
      %p108 = scmp.ne.s32.totalorder %s99, %s100
      %p109 = scmp.eq.s32.totalorder %s26, 0
      %p110 = por %p108, %p109
      %p111 = scmp.ne.s32.totalorder %s99, %s100
      %p112 = scmp.eq.s32.totalorder %s27, 1
      %p113 = por %p111, %p112
      %p115 = scmp.ne.s32.totalorder %s100, %s114
      %p116 = scmp.eq.s32.totalorder %s27, 0
      %p117 = por %p115, %p116
      %s119 = sadd.s32 %s118, 1
      %p122 = scmp.eq.s32.totalorder %s21, 1
      %p123 = scmp.ne.s32.totalorder %s118, %s120
      %p124 = scmp.eq.s32.totalorder %s21, 0
      %p125 = por %p123, %p124
      %p126 = scmp.ne.s32.totalorder %s118, %s120
      %p127 = scmp.eq.s32.totalorder %s26, 1
      %p128 = por %p126, %p127
      %p129 = scmp.ne.s32.totalorder %s120, %s121
      %p130 = scmp.eq.s32.totalorder %s26, 0
      %p131 = por %p129, %p130
      %p132 = scmp.ne.s32.totalorder %s120, %s121
      %p133 = scmp.eq.s32.totalorder %s27, 1
      %p134 = por %p132, %p133
      %p136 = scmp.ne.s32.totalorder %s121, %s135
      %p137 = scmp.eq.s32.totalorder %s27, 0
      %p138 = por %p136, %p137
      %s140 = sadd.s32 %s139, 1
      %p143 = scmp.eq.s32.totalorder %s21, 1
      %p144 = scmp.ne.s32.totalorder %s139, %s141
      %p145 = scmp.eq.s32.totalorder %s21, 0
      %p146 = por %p144, %p145
      %p147 = scmp.ne.s32.totalorder %s139, %s141
      %p148 = scmp.eq.s32.totalorder %s26, 1
      %p149 = por %p147, %p148
      %p150 = scmp.ne.s32.totalorder %s141, %s142
      %p151 = scmp.eq.s32.totalorder %s26, 0
      %p152 = por %p150, %p151
      %p153 = scmp.ne.s32.totalorder %s141, %s142
      %p154 = scmp.eq.s32.totalorder %s27, 1
      %p155 = por %p153, %p154
      %p157 = scmp.ne.s32.totalorder %s142, %s156
      %p158 = scmp.eq.s32.totalorder %s27, 0
      %p159 = por %p157, %p158
      %s161 = sadd.s32 %s160, 1
      %p164 = scmp.eq.s32.totalorder %s21, 1
      %p165 = scmp.ne.s32.totalorder %s160, %s162
      %p166 = scmp.eq.s32.totalorder %s21, 0
      %p167 = por %p165, %p166
      %p168 = scmp.ne.s32.totalorder %s160, %s162
      %p169 = scmp.eq.s32.totalorder %s26, 1
      %p170 = por %p168, %p169
      %p171 = scmp.ne.s32.totalorder %s162, %s163
      %p172 = scmp.eq.s32.totalorder %s26, 0
      %p173 = por %p171, %p172
      %p174 = scmp.ne.s32.totalorder %s162, %s163
      %p175 = scmp.eq.s32.totalorder %s27, 1
      %p176 = por %p174, %p175
      %p178 = scmp.ne.s32.totalorder %s163, %s177
      %p179 = scmp.eq.s32.totalorder %s27, 0
      %p180 = por %p178, %p179
      %s182 = sadd.s32 %s181, 1
      %p185 = scmp.eq.s32.totalorder %s21, 1
      %p186 = scmp.ne.s32.totalorder %s181, %s183
      %p187 = scmp.eq.s32.totalorder %s21, 0
      %p188 = por %p186, %p187
      %p189 = scmp.ne.s32.totalorder %s181, %s183
      %p190 = scmp.eq.s32.totalorder %s26, 1
      %p191 = por %p189, %p190
      %p192 = scmp.ne.s32.totalorder %s183, %s184
      %p193 = scmp.eq.s32.totalorder %s26, 0
      %p194 = por %p192, %p193
      %p195 = scmp.ne.s32.totalorder %s183, %s184
      %p196 = scmp.eq.s32.totalorder %s27, 1
      %p197 = por %p195, %p196
      %p199 = scmp.ne.s32.totalorder %s184, %s198
      %p200 = scmp.eq.s32.totalorder %s27, 0
      %p201 = por %p199, %p200
      %s203 = sadd.s32 %s202, 1
      %p206 = scmp.eq.s32.totalorder %s21, 1
      %p207 = scmp.ne.s32.totalorder %s202, %s204
      %p208 = scmp.eq.s32.totalorder %s21, 0
      %p209 = por %p207, %p208
      %p210 = scmp.ne.s32.totalorder %s202, %s204
      %p211 = scmp.eq.s32.totalorder %s26, 1
      %p212 = por %p210, %p211
      %p213 = scmp.ne.s32.totalorder %s204, %s205
      %p214 = scmp.eq.s32.totalorder %s26, 0
      %p215 = por %p213, %p214
      %p216 = scmp.ne.s32.totalorder %s204, %s205
      %p217 = scmp.eq.s32.totalorder %s27, 1
      %p218 = por %p216, %p217
      %p220 = scmp.ne.s32.totalorder %s205, %s219
      %p221 = scmp.eq.s32.totalorder %s27, 0
      %p222 = por %p220, %p221
      %s224 = sadd.s32 %s223, 1
      %p227 = scmp.eq.s32.totalorder %s21, 1
      %p228 = scmp.ne.s32.totalorder %s223, %s225
      %p229 = scmp.eq.s32.totalorder %s21, 0
      %p230 = por %p228, %p229
      %p231 = scmp.ne.s32.totalorder %s223, %s225
      %p232 = scmp.eq.s32.totalorder %s26, 1
      %p233 = por %p231, %p232
      %p234 = scmp.ne.s32.totalorder %s225, %s226
      %p235 = scmp.eq.s32.totalorder %s26, 0
      %p236 = por %p234, %p235
      %p237 = scmp.ne.s32.totalorder %s225, %s226
      %p238 = scmp.eq.s32.totalorder %s27, 1
      %p239 = por %p237, %p238
      %p241 = scmp.ne.s32.totalorder %s226, %s240
      %p242 = scmp.eq.s32.totalorder %s27, 0
      %p243 = por %p241, %p242
      %s244 = ssub.s32 %s21, %s28
      %p245 = scmp.eq.s32.totalorder %s244, 0
      %s247 = sadd.s32 %s246, 1
      %s248 = scalar_select %p245, %s246, %s247
      %p251 = pneg %p245
      %p252 = scmp.eq.s32.totalorder %s21, 1
      %p253 = por %p251, %p252
      %p254 = scmp.ne.s32.totalorder %s246, %s249
      %p255 = scmp.eq.s32.totalorder %s21, 0
      %p256 = por %p254, %p255
      %p257 = scmp.ne.s32.totalorder %s246, %s249
      %p258 = scmp.eq.s32.totalorder %s26, 1
      %p259 = por %p257, %p258
      %p260 = scmp.ne.s32.totalorder %s249, %s250
      %p261 = scmp.eq.s32.totalorder %s26, 0
      %p262 = por %p260, %p261
      %p263 = scmp.ne.s32.totalorder %s249, %s250
      %p264 = scmp.eq.s32.totalorder %s27, 1
      %p265 = por %p263, %p264
      %p267 = scmp.ne.s32.totalorder %s250, %s266
      %p268 = scmp.eq.s32.totalorder %s27, 0
      %p269 = por %p267, %p268
      %p270 = scmp.le.s32.totalorder 1, %s21
      %p271 = scmp.lt.s32.totalorder %s21, 3
      %p272 = pnand %p270, %p271
      %p273 = pneg %p272
      // Predicated region
      $region9: #{tpu_custom_call.1} parent=5 // pred_check
        _
      $region10: #{tpu_custom_call.1} parent=5 // pred_check_branch
        %275 = sbr.rel (%p272) target = $region12
      $region11: #{tpu_custom_call.1} parent=5 // pred_region
        %s276 = ssub.s32 %s21, 1
        // Predicated region
        $region13: #{tpu_custom_call.1} parent=11 // pred_check
          %p277 = pneg %p68
        $region14: #{tpu_custom_call.1} parent=11 // pred_check_branch
          %279 = sbr.rel (%p277) target = $region16
        $region15: #{tpu_custom_call.1} parent=11 // pred_region
          _
        $region16: #{tpu_custom_call.1} parent=11 // pred_fallthru
          _
        // Predicated region
        $region17: #{tpu_custom_call.1} parent=11 // pred_check
          %p280 = pneg %p89
        $region18: #{tpu_custom_call.1} parent=11 // pred_check_branch
          %282 = sbr.rel (%p280) target = $region20
        $region19: #{tpu_custom_call.1} parent=11 // pred_region
          _
        $region20: #{tpu_custom_call.1} parent=11 // pred_fallthru
          _
        // Predicated region
        $region21: #{tpu_custom_call.1} parent=11 // pred_check
          %p283 = pneg %p110
        $region22: #{tpu_custom_call.1} parent=11 // pred_check_branch
          %285 = sbr.rel (%p283) target = $region24
        $region23: #{tpu_custom_call.1} parent=11 // pred_region
          %s287 = ssub.s32 512, 512
          %288 = vsyncadd [#allocation3], %s287
          %s289 = sshll.u32 [#allocation2], 4
          %s290 = int_to_ptr.vmem [resolvable:$true] %s289
          %295 = dma.hbm_to_vmem [thread:$0]  %s3, 512, %s290, [#allocation3], 128, 128, 8
        $region24: #{tpu_custom_call.1} parent=11 // pred_fallthru
          _
        // Predicated region
        $region25: #{tpu_custom_call.1} parent=11 // pred_check
          %p296 = pneg %p131
        $region26: #{tpu_custom_call.1} parent=11 // pred_check_branch
          %298 = sbr.rel (%p296) target = $region28
        $region27: #{tpu_custom_call.1} parent=11 // pred_region
          _
        $region28: #{tpu_custom_call.1} parent=11 // pred_fallthru
          _
        // Predicated region
        $region29: #{tpu_custom_call.1} parent=11 // pred_check
          %p299 = pneg %p152
        $region30: #{tpu_custom_call.1} parent=11 // pred_check_branch
          %301 = sbr.rel (%p299) target = $region32
        $region31: #{tpu_custom_call.1} parent=11 // pred_region
          %s303 = ssub.s32 512, 512
          %304 = vsyncadd [#allocation6], %s303
          %s305 = sshll.u32 [#allocation5], 4
          %s306 = int_to_ptr.vmem [resolvable:$true] %s305
          %311 = dma.hbm_to_vmem [thread:$0]  %s5, 512, %s306, [#allocation6], 128, 128, 8
        $region32: #{tpu_custom_call.1} parent=11 // pred_fallthru
          _
        // Predicated region
        $region33: #{tpu_custom_call.1} parent=11 // pred_check
          %p312 = pneg %p173
        $region34: #{tpu_custom_call.1} parent=11 // pred_check_branch
          %314 = sbr.rel (%p312) target = $region36
        $region35: #{tpu_custom_call.1} parent=11 // pred_region
          _
        $region36: #{tpu_custom_call.1} parent=11 // pred_fallthru
          _
        // Predicated region
        $region37: #{tpu_custom_call.1} parent=11 // pred_check
          %p315 = pneg %p194
        $region38: #{tpu_custom_call.1} parent=11 // pred_check_branch
          %317 = sbr.rel (%p315) target = $region40
        $region39: #{tpu_custom_call.1} parent=11 // pred_region
          _
        $region40: #{tpu_custom_call.1} parent=11 // pred_fallthru
          _
        // Predicated region
        $region41: #{tpu_custom_call.1} parent=11 // pred_check
          %p318 = pneg %p215
        $region42: #{tpu_custom_call.1} parent=11 // pred_check_branch
          %320 = sbr.rel (%p318) target = $region44
        $region43: #{tpu_custom_call.1} parent=11 // pred_region
          _
        $region44: #{tpu_custom_call.1} parent=11 // pred_fallthru
          _
        // Predicated region
        $region45: #{tpu_custom_call.1} parent=11 // pred_check
          %p321 = pneg %p236
        $region46: #{tpu_custom_call.1} parent=11 // pred_check_branch
          %323 = sbr.rel (%p321) target = $region48
        $region47: #{tpu_custom_call.1} parent=11 // pred_region
          _
        $region48: #{tpu_custom_call.1} parent=11 // pred_fallthru
          _
      $region12: #{tpu_custom_call.1} parent=5 // pred_fallthru
        _
      %p324 = scmp.lt.s32.totalorder %s21, 2
      // Predicated region
      $region49: #{tpu_custom_call.1} parent=5 // pred_check
        %p325 = pneg %p324
      $region50: #{tpu_custom_call.1} parent=5 // pred_check_branch
        %327 = sbr.rel (%p325) target = $region52
      $region51: #{tpu_custom_call.1} parent=5 // pred_region
        // Predicated region
        $region53: #{tpu_custom_call.1} parent=51 // pred_check
          %p328 = pneg %p41
        $region54: #{tpu_custom_call.1} parent=51 // pred_check_branch
          %330 = sbr.rel (%p328) target = $region56
        $region55: #{tpu_custom_call.1} parent=51 // pred_region
          %s331 = smul.u32 2, %s21
          %p332 = scmp.lt.s32.totalorder %s331, 3
          %s333 = scalar_select %p332, %s331, 3
          %s334 = smul.addr %s333, 2
          %s335 = smul.addr %s334, 8
          %s336 = scalar_lea.vmem %s0, %s335
          %s337 = smul.u32 2, %s21
        $region56: #{tpu_custom_call.1} parent=51 // pred_fallthru
          _
      $region52: #{tpu_custom_call.1} parent=5 // pred_fallthru
        _
      %p338 = scmp.le.s32.totalorder 1, %s21
      %p339 = scmp.lt.s32.totalorder %s21, 3
      %p340 = pnand %p338, %p339
      %p341 = pneg %p340
      // Predicated region
      $region57: #{tpu_custom_call.1} parent=5 // pred_check
        _
      $region58: #{tpu_custom_call.1} parent=5 // pred_check_branch
        %343 = sbr.rel (%p340) target = $region60
      $region59: #{tpu_custom_call.1} parent=5 // pred_region
        %s344 = ssub.s32 %s21, 1
        // Predicated region
        $region61: #{tpu_custom_call.1} parent=59 // pred_check
          %p345 = pneg %p110
        $region62: #{tpu_custom_call.1} parent=59 // pred_check_branch
          %347 = sbr.rel (%p345) target = $region64
        $region63: #{tpu_custom_call.1} parent=59 // pred_region
          %348 = dma.done [#allocation3], 512
        $region64: #{tpu_custom_call.1} parent=59 // pred_fallthru
          _
        // Predicated region
        $region65: #{tpu_custom_call.1} parent=59 // pred_check
          %p349 = pneg %p152
        $region66: #{tpu_custom_call.1} parent=59 // pred_check_branch
          %351 = sbr.rel (%p349) target = $region68
        $region67: #{tpu_custom_call.1} parent=59 // pred_region
          %352 = dma.done [#allocation6], 512
        $region68: #{tpu_custom_call.1} parent=59 // pred_fallthru
          _
        %s353 = smul.u32 2, %s26
        %p354 = scmp.lt.s32.totalorder %s353, 3
        %s355 = scalar_select %p354, %s353, 3
        %s356 = smul.addr %s355, 2
        %s357 = smul.addr %s356, 8
        %s358 = scalar_lea.vmem %s0, %s357
        %p359 = pneg %p47
        %p360 = pneg %p44
        %p361 = pneg %p68
        %p362 = pneg %p65
        %p363 = pneg %p89
        %p364 = pneg %p86
        %p365 = pneg %p110
        %p366 = pneg %p107
        %p367 = pneg %p131
        %p368 = pneg %p128
        %p369 = pneg %p152
        %p370 = pneg %p149
        %p371 = pneg %p173
        %p372 = pneg %p170
        %p373 = pneg %p194
        %p374 = pneg %p191
        %p375 = pneg %p215
        %p376 = pneg %p212
        %p377 = pneg %p236
        %p378 = pneg %p233
        %p379 = pneg %p262
        %p380 = pneg %p259
        %s381 = sand.u32 %s249, 1
        %s382 = scalar_lea.sflag [#allocation4], %s381
        %s383 = sand.u32 %s249, 1
        %s384 = smul.addr %s383, 32
        %s385 = scalar_lea.vmem [#allocation7], %s384
        %s386 = smul.u32 2, %s26
        %p387 = scmp.lt.s32.totalorder %s386, 3
        %s388 = scalar_select %p387, %s386, 3
        %s389 = smul.addr %s388, 2
        %s390 = smul.addr %s389, 8
        %s391 = scalar_lea.vmem %s0, %s390
        %s392 = smul.u32 2, %s26
        %s393 = smul.u32 2, %s26
        %v394 = vld [vmem:[%s1] sm:$0xff]
        %v395 = vld [vmem:[%s1 + $0x8] sm:$0xff]
        %v396 = vld [vmem:[%s1 + $0x10] sm:$0xff]
        %v397 = vld [vmem:[%s1 + $0x18] sm:$0xff]
        %v398 = vld [vmem:[%s2] sm:$0x1]
        %v399 = vld [vmem:[#allocation2] sm:$0xff]
        %v400 = vld [vmem:[#allocation2 + $0x8] sm:$0xff]
        %v401 = vld [vmem:[#allocation2 + $0x10] sm:$0xff]
        %v402 = vld [vmem:[#allocation2 + $0x18] sm:$0xff]
        %v403 = vld [vmem:[%s4] sm:$0x1]
        %v404 = vld [vmem:[#allocation5] sm:$0xff]
        %v405 = vld [vmem:[#allocation5 + $0x8] sm:$0xff]
        %v406 = vld [vmem:[#allocation5 + $0x10] sm:$0xff]
        %v407 = vld [vmem:[#allocation5 + $0x18] sm:$0xff]
        %v408 = vld [vmem:[%s6] sm:$0x1]
        %v409 = vld [vmem:[%s7] sm:$0xff]
        %v410 = vld [vmem:[%s7 + $0x8] sm:$0xff]
        %v411 = vld [vmem:[%s7 + $0x10] sm:$0xff]
        %v412 = vld [vmem:[%s7 + $0x18] sm:$0xff]
        %v413 = vld [vmem:[%s7 + $0x20] sm:$0xff]
        %v414 = vld [vmem:[%s7 + $0x28] sm:$0xff]
        %v415 = vld [vmem:[%s7 + $0x30] sm:$0xff]
        %v416 = vld [vmem:[%s7 + $0x38] sm:$0xff]
        %v417 = vld [vmem:[%s8] sm:$0x1]
        %v418 = vld [vmem:[%s9] sm:$0x1]
        %v419 = vld [vmem:[%s391] sm:$0xff]
        %v420 = vld [vmem:[%s391 + $0x8] sm:$0xff]
        %vm421 = vcmask 261120
        %v422 = vsel %vm421, %v419, 0.0
        %423 = vadd.xlane.f32.xlu0 %v422
        %v424 = vpop.xlane.xlu0 %423
        %v425 = vsel %vm421, %v420, 0.0
        %426 = vadd.xlane.f32.xlu0 %v425
        %v427 = vpop.xlane.xlu0 %426
        %v428 = vrcp.pop 32.0
        %v429 = vmul.f32 %v424, %v428
        %v430 = vmul.f32 %v427, %v428
        %v431 = vsub.f32 %v419, %v429
        %v432 = vsub.f32 %v420, %v430
        %v433 = vmul.f32 %v431, %v431
        %v434 = vmul.f32 %v432, %v432
        %v435 = vsel %vm421, %v433, 0.0
        %436 = vadd.xlane.f32.xlu0 %v435
        %v437 = vpop.xlane.xlu0 %436
        %v438 = vsel %vm421, %v434, 0.0
        %439 = vadd.xlane.f32.xlu0 %v438
        %v440 = vpop.xlane.xlu0 %439
        %v441 = vmul.f32 %v437, %v428
        %v442 = vmul.f32 %v440, %v428
        %v443 = vadd.f32 %v441, 1e-05
        %v444 = vadd.f32 %v442, 1e-05
        %v445 = vrsqrt.pop %v443
        %v446 = vrsqrt.pop %v444
        %v447 = vmul.f32 %v431, %v445
        %v448 = vmul.f32 %v432, %v446
        %v450 = vlaneseq
        %v451 = vshrl.u32 %v450, 7
        %v452 = vsub.s32 0, %v451
        %v453 = vrot.slane %v398, %v452
        %v456 = vsel %vm421, %v447, 0
        %v459 = vsel %vm421, %v448, 0
        %461 = vmatprep.subr.mxu0 0.0
        %462 = vmatpush1.msra.mxu0 %v394
        %463 = vmatprep.subr.mxu0 0.0
        %464 = vmatpush1.msra.mxu0 %v395
        %465 = vmatprep.subr.mxu0 0.0
        %466 = vmatpush1.msra.mxu0 %v396
        %467 = vmatprep.subr.mxu0 0.0
        %468 = vmatpush1.msra.mxu0 %v397
        %469 = vmatprep.subr.mxu0 0.0
        %470 = vmatpush1.msra.mxu0 0.0
        %471 = vmatprep.subr.mxu0 0.0
        %472 = vmatpush1.msra.mxu0 0.0
        %473 = vmatprep.subr.mxu0 0.0
        %474 = vmatpush1.msra.mxu0 0.0
        %475 = vmatprep.subr.mxu0 0.0
        %476 = vmatpush1.msra.mxu0 0.0
        %477 = vmatprep.subr.mxu0 0.0
        %478 = vmatpush1.msra.mxu0 0.0
        %479 = vmatprep.subr.mxu0 0.0
        %480 = vmatpush1.msra.mxu0 0.0
        %481 = vmatprep.subr.mxu0 0.0
        %482 = vmatpush1.msra.mxu0 0.0
        %483 = vmatprep.subr.mxu0 0.0
        %484 = vmatpush1.msra.mxu0 0.0
        %485 = vmatprep.subr.mxu0 0.0
        %486 = vmatpush1.msra.mxu0 0.0
        %487 = vmatprep.subr.mxu0 0.0
        %488 = vmatpush1.msra.mxu0 0.0
        %489 = vmatprep.subr.mxu0 0.0
        %490 = vmatpush1.msra.mxu0 0.0
        %491 = vmatprep.subr.mxu0 0.0
        %492 = vmatpush1.msra.mxu0 0.0
        %493 = vmatprep.subr.mxu0 0.0
        %494 = vmatpush1.msra.mxu0 0.0
        %495 = vmatprep.subr.mxu0 0.0
        %496 = vmatpush1.msra.mxu0 0.0
        %497 = vmatprep.subr.mxu0 0.0
        %498 = vmatpush1.msra.mxu0 0.0
        %499 = vmatprep.subr.mxu0 0.0
        %500 = vmatpush1.msra.mxu0 0.0
        %501 = vmatprep.subr.mxu0 0.0
        %502 = vmatpush1.msra.mxu0 0.0
        %503 = vmatprep.subr.mxu0 0.0
        %504 = vmatpush1.msra.mxu0 0.0
        %505 = vmatprep.subr.mxu0 0.0
        %506 = vmatpush1.msra.mxu0 0.0
        %507 = vmatprep.subr.mxu0 0.0
        %508 = vmatpush1.msra.mxu0 0.0
        %509 = vmatprep.subr.mxu0 0.0
        %510 = vmatpush1.msra.mxu0 0.0
        %511 = vmatprep.subr.mxu0 0.0
        %512 = vmatpush1.msra.mxu0 0.0
        %513 = vmatprep.subr.mxu0 0.0
        %514 = vmatpush1.msra.mxu0 0.0
        %515 = vmatprep.subr.mxu0 0.0
        %516 = vmatpush1.msra.mxu0 0.0
        %517 = vmatprep.subr.mxu0 0.0
        %518 = vmatpush1.msra.mxu0 0.0
        %519 = vmatprep.subr.mxu0 0.0
        %520 = vmatpush1.msra.mxu0 0.0
        %521 = vmatprep.subr.mxu0 0.0
        %522 = vmatpush1.msra.mxu0 0.0
        %523 = vmatprep.subr.mxu0 0.0
        %524 = vmatpush1.msra.mxu0 0.0
        %525 = vmatprep.mubr.f32.mxu0 0.0
        %526 = vmatmul.mubr.f32.gmra.mrb[0].mxu0 %v456
        %v527 = vpop.f32.mrb[0].mxu0
        %v528 = vadd.f32 %v453, %v527
        %v529 = vpop.f32.mrb[0].mxu0
        %530 = vmatprep.mubr.f32.mxu0 0.0
        %531 = vmatmul.mubr.f32.gmra.mrb[0].mxu0 %v459
        %v532 = vpop.f32.mrb[0].mxu0
        %v533 = vadd.f32 %v453, %v532
        %v534 = vpop.f32.mrb[0].mxu0
        %535 = vdwg.mxu0
        %v537 = vlaneseq
        %v538 = vshrl.u32 %v537, 7
        %v539 = vsub.s32 0, %v538
        %v540 = vrot.slane %v403, %v539
        %v542 = vadd.f32 %v540, 0.0
        %v543 = vmul.f32 %v528, 0.35355338
        %v544 = vmul.f32 %v533, 0.35355338
        %547 = vrot.lane.b32.xlu0 %v528, 96
        %v548 = vpop.permute.xlu0 %547
        %549 = vrot.lane.b32.xlu0 %v533, 96
        %v550 = vpop.permute.xlu0 %549
        %vm551 = vcmask 64512
        %v553 = vsel %vm551, %v543, 0
        %v556 = vsel %vm551, %v544, 0
        %v558 = vsel %vm551, %v548, 0
        %v560 = vsel %vm551, %v550, 0
        %562 = vmatprep.subr.mxu0 0.0
        %563 = vmatpush1.xpose.msra.mxu0 %v558
        %564 = vmatprep.subr.mxu0 0.0
        %565 = vmatpush1.xpose.msra.mxu0 %v560
        %566 = vmatprep.subr.mxu0 0.0
        %567 = vmatpush1.xpose.msra.mxu0 0.0
        %568 = vmatprep.subr.mxu0 0.0
        %569 = vmatpush1.xpose.msra.mxu0 0.0
        %570 = vmatprep.subr.mxu0 0.0
        %571 = vmatpush1.xpose.msra.mxu0 0.0
        %572 = vmatprep.subr.mxu0 0.0
        %573 = vmatpush1.xpose.msra.mxu0 0.0
        %574 = vmatprep.subr.mxu0 0.0
        %575 = vmatpush1.xpose.msra.mxu0 0.0
        %576 = vmatprep.subr.mxu0 0.0
        %577 = vmatpush1.xpose.msra.mxu0 0.0
        %578 = vmatprep.subr.mxu0 0.0
        %579 = vmatpush1.xpose.msra.mxu0 0.0
        %580 = vmatprep.subr.mxu0 0.0
        %581 = vmatpush1.xpose.msra.mxu0 0.0
        %582 = vmatprep.subr.mxu0 0.0
        %583 = vmatpush1.xpose.msra.mxu0 0.0
        %584 = vmatprep.subr.mxu0 0.0
        %585 = vmatpush1.xpose.msra.mxu0 0.0
        %586 = vmatprep.subr.mxu0 0.0
        %587 = vmatpush1.xpose.msra.mxu0 0.0
        %588 = vmatprep.subr.mxu0 0.0
        %589 = vmatpush1.xpose.msra.mxu0 0.0
        %590 = vmatprep.subr.mxu0 0.0
        %591 = vmatpush1.xpose.msra.mxu0 0.0
        %592 = vmatprep.subr.mxu0 0.0
        %593 = vmatpush1.xpose.msra.mxu0 0.0
        %594 = vmatprep.subr.mxu0 0.0
        %595 = vmatpush1.xpose.msra.mxu0 0.0
        %596 = vmatprep.subr.mxu0 0.0
        %597 = vmatpush1.xpose.msra.mxu0 0.0
        %598 = vmatprep.subr.mxu0 0.0
        %599 = vmatpush1.xpose.msra.mxu0 0.0
        %600 = vmatprep.subr.mxu0 0.0
        %601 = vmatpush1.xpose.msra.mxu0 0.0
        %602 = vmatprep.subr.mxu0 0.0
        %603 = vmatpush1.xpose.msra.mxu0 0.0
        %604 = vmatprep.subr.mxu0 0.0
        %605 = vmatpush1.xpose.msra.mxu0 0.0
        %606 = vmatprep.subr.mxu0 0.0
        %607 = vmatpush1.xpose.msra.mxu0 0.0
        %608 = vmatprep.subr.mxu0 0.0
        %609 = vmatpush1.xpose.msra.mxu0 0.0
        %610 = vmatprep.subr.mxu0 0.0
        %611 = vmatpush1.xpose.msra.mxu0 0.0
        %612 = vmatprep.subr.mxu0 0.0
        %613 = vmatpush1.xpose.msra.mxu0 0.0
        %614 = vmatprep.subr.mxu0 0.0
        %615 = vmatpush1.xpose.msra.mxu0 0.0
        %616 = vmatprep.subr.mxu0 0.0
        %617 = vmatpush1.xpose.msra.mxu0 0.0
        %618 = vmatprep.subr.mxu0 0.0
        %619 = vmatpush1.xpose.msra.mxu0 0.0
        %620 = vmatprep.subr.mxu0 0.0
        %621 = vmatpush1.xpose.msra.mxu0 0.0
        %622 = vmatprep.subr.mxu0 0.0
        %623 = vmatpush1.xpose.msra.mxu0 0.0
        %624 = vmatprep.subr.mxu0 0.0
        %625 = vmatpush1.xpose.msra.mxu0 0.0
        %626 = vmatprep.mubr.f32.mxu0 0.0
        %627 = vmatmul.mubr.f32.gmra.mrb[0].mxu0 %v553
        %v628 = vpop.f32.mrb[0].mxu0
        %v629 = vadd.f32 0.0, %v628
        %v630 = vpop.f32.mrb[0].mxu0
        %631 = vmatprep.mubr.f32.mxu0 0.0
        %632 = vmatmul.mubr.f32.gmra.mrb[0].mxu0 %v556
        %v633 = vpop.f32.mrb[0].mxu0
        %v634 = vadd.f32 0.0, %v633
        %v635 = vpop.f32.mrb[0].mxu0
        %636 = vdwg.mxu0
        %vm637 = vcmask 130048
        %v638 = vsel %vm637, %v629, -inf
        %639 = vmax.xlane.f32.xlu0 %v638
        %v640 = vpop.xlane.xlu0 %639
        %v641 = vsel %vm637, %v634, -inf
        %642 = vmax.xlane.f32.xlu0 %v641
        %v643 = vpop.xlane.xlu0 %642
        %v644 = vsub.f32 %v629, %v640
        %v645 = vsub.f32 %v634, %v643
        %v646 = vmul.f32 %v644, 1.442695
        %v647 = vpow.pop %v646
        %v648 = vmul.f32 %v645, 1.442695
        %v649 = vpow.pop %v648
        %v650 = vsel %vm637, %v647, 0.0
        %651 = vadd.xlane.f32.xlu0 %v650
        %v652 = vpop.xlane.xlu0 %651
        %v653 = vsel %vm637, %v649, 0.0
        %654 = vadd.xlane.f32.xlu0 %v653
        %v655 = vpop.xlane.xlu0 %654
        %v656 = vrcp.pop %v652
        %v657 = vmul.f32 %v647, %v656
        %v658 = vrcp.pop %v655
        %v659 = vmul.f32 %v649, %v658
        %660 = vrot.lane.b32.xlu0 %v528, 64
        %v661 = vpop.permute.xlu0 %660
        %662 = vrot.lane.b32.xlu0 %v533, 64
        %v663 = vpop.permute.xlu0 %662
        %v667 = vsel %vm637, %v657, 0
        %v670 = vsel %vm637, %v659, 0
        %672 = vmatprep.subr.mxu0 0.0
        %673 = vmatpush1.msra.mxu0 %v661
        %674 = vmatprep.subr.mxu0 0.0
        %675 = vmatpush1.msra.mxu0 %v663
        %676 = vmatprep.subr.mxu0 0.0
        %677 = vmatpush1.msra.mxu0 0.0
        %678 = vmatprep.subr.mxu0 0.0
        %679 = vmatpush1.msra.mxu0 0.0
        %680 = vmatprep.subr.mxu0 0.0
        %681 = vmatpush1.msra.mxu0 0.0
        %682 = vmatprep.subr.mxu0 0.0
        %683 = vmatpush1.msra.mxu0 0.0
        %684 = vmatprep.subr.mxu0 0.0
        %685 = vmatpush1.msra.mxu0 0.0
        %686 = vmatprep.subr.mxu0 0.0
        %687 = vmatpush1.msra.mxu0 0.0
        %688 = vmatprep.subr.mxu0 0.0
        %689 = vmatpush1.msra.mxu0 0.0
        %690 = vmatprep.subr.mxu0 0.0
        %691 = vmatpush1.msra.mxu0 0.0
        %692 = vmatprep.subr.mxu0 0.0
        %693 = vmatpush1.msra.mxu0 0.0
        %694 = vmatprep.subr.mxu0 0.0
        %695 = vmatpush1.msra.mxu0 0.0
        %696 = vmatprep.subr.mxu0 0.0
        %697 = vmatpush1.msra.mxu0 0.0
        %698 = vmatprep.subr.mxu0 0.0
        %699 = vmatpush1.msra.mxu0 0.0
        %700 = vmatprep.subr.mxu0 0.0
        %701 = vmatpush1.msra.mxu0 0.0
        %702 = vmatprep.subr.mxu0 0.0
        %703 = vmatpush1.msra.mxu0 0.0
        %704 = vmatprep.subr.mxu0 0.0
        %705 = vmatpush1.msra.mxu0 0.0
        %706 = vmatprep.subr.mxu0 0.0
        %707 = vmatpush1.msra.mxu0 0.0
        %708 = vmatprep.subr.mxu0 0.0
        %709 = vmatpush1.msra.mxu0 0.0
        %710 = vmatprep.subr.mxu0 0.0
        %711 = vmatpush1.msra.mxu0 0.0
        %712 = vmatprep.subr.mxu0 0.0
        %713 = vmatpush1.msra.mxu0 0.0
        %714 = vmatprep.subr.mxu0 0.0
        %715 = vmatpush1.msra.mxu0 0.0
        %716 = vmatprep.subr.mxu0 0.0
        %717 = vmatpush1.msra.mxu0 0.0
        %718 = vmatprep.subr.mxu0 0.0
        %719 = vmatpush1.msra.mxu0 0.0
        %720 = vmatprep.subr.mxu0 0.0
        %721 = vmatpush1.msra.mxu0 0.0
        %722 = vmatprep.subr.mxu0 0.0
        %723 = vmatpush1.msra.mxu0 0.0
        %724 = vmatprep.subr.mxu0 0.0
        %725 = vmatpush1.msra.mxu0 0.0
        %726 = vmatprep.subr.mxu0 0.0
        %727 = vmatpush1.msra.mxu0 0.0
        %728 = vmatprep.subr.mxu0 0.0
        %729 = vmatpush1.msra.mxu0 0.0
        %730 = vmatprep.subr.mxu0 0.0
        %731 = vmatpush1.msra.mxu0 0.0
        %732 = vmatprep.subr.mxu0 0.0
        %733 = vmatpush1.msra.mxu0 0.0
        %734 = vmatprep.subr.mxu0 0.0
        %735 = vmatpush1.msra.mxu0 0.0
        %736 = vmatprep.mubr.f32.mxu0 0.0
        %737 = vmatmul.mubr.f32.gmra.mrb[0].mxu0 %v667
        %v738 = vpop.f32.mrb[0].mxu0
        %v739 = vadd.f32 0.0, %v738
        %v740 = vpop.f32.mrb[0].mxu0
        %741 = vmatprep.mubr.f32.mxu0 0.0
        %742 = vmatmul.mubr.f32.gmra.mrb[0].mxu0 %v670
        %v743 = vpop.f32.mrb[0].mxu0
        %v744 = vadd.f32 0.0, %v743
        %v745 = vpop.f32.mrb[0].mxu0
        %746 = vdwg.mxu0
        %v748 = vsel %vm551, %v739, 0
        %v751 = vsel %vm551, %v744, 0
        %753 = vmatprep.subr.mxu0 0.0
        %754 = vmatpush1.msra.mxu0 %v399
        %755 = vmatprep.subr.mxu0 0.0
        %756 = vmatpush1.msra.mxu0 0.0
        %757 = vmatprep.subr.mxu0 0.0
        %758 = vmatpush1.msra.mxu0 0.0
        %759 = vmatprep.subr.mxu0 0.0
        %760 = vmatpush1.msra.mxu0 0.0
        %761 = vmatprep.subr.mxu0 0.0
        %762 = vmatpush1.msra.mxu0 0.0
        %763 = vmatprep.subr.mxu0 0.0
        %764 = vmatpush1.msra.mxu0 0.0
        %765 = vmatprep.subr.mxu0 0.0
        %766 = vmatpush1.msra.mxu0 0.0
        %767 = vmatprep.subr.mxu0 0.0
        %768 = vmatpush1.msra.mxu0 0.0
        %769 = vmatprep.subr.mxu0 0.0
        %770 = vmatpush1.msra.mxu0 0.0
        %771 = vmatprep.subr.mxu0 0.0
        %772 = vmatpush1.msra.mxu0 0.0
        %773 = vmatprep.subr.mxu0 0.0
        %774 = vmatpush1.msra.mxu0 0.0
        %775 = vmatprep.subr.mxu0 0.0
        %776 = vmatpush1.msra.mxu0 0.0
        %777 = vmatprep.subr.mxu0 0.0
        %778 = vmatpush1.msra.mxu0 0.0
        %779 = vmatprep.subr.mxu0 0.0
        %780 = vmatpush1.msra.mxu0 0.0
        %781 = vmatprep.subr.mxu0 0.0
        %782 = vmatpush1.msra.mxu0 0.0
        %783 = vmatprep.subr.mxu0 0.0
        %784 = vmatpush1.msra.mxu0 0.0
        %785 = vmatprep.subr.mxu0 0.0
        %786 = vmatpush1.msra.mxu0 0.0
        %787 = vmatprep.subr.mxu0 0.0
        %788 = vmatpush1.msra.mxu0 0.0
        %789 = vmatprep.subr.mxu0 0.0
        %790 = vmatpush1.msra.mxu0 0.0
        %791 = vmatprep.subr.mxu0 0.0
        %792 = vmatpush1.msra.mxu0 0.0
        %793 = vmatprep.subr.mxu0 0.0
        %794 = vmatpush1.msra.mxu0 0.0
        %795 = vmatprep.subr.mxu0 0.0
        %796 = vmatpush1.msra.mxu0 0.0
        %797 = vmatprep.subr.mxu0 0.0
        %798 = vmatpush1.msra.mxu0 0.0
        %799 = vmatprep.subr.mxu0 0.0
        %800 = vmatpush1.msra.mxu0 0.0
        %801 = vmatprep.subr.mxu0 0.0
        %802 = vmatpush1.msra.mxu0 0.0
        %803 = vmatprep.subr.mxu0 0.0
        %804 = vmatpush1.msra.mxu0 0.0
        %805 = vmatprep.subr.mxu0 0.0
        %806 = vmatpush1.msra.mxu0 0.0
        %807 = vmatprep.subr.mxu0 0.0
        %808 = vmatpush1.msra.mxu0 0.0
        %809 = vmatprep.subr.mxu0 0.0
        %810 = vmatpush1.msra.mxu0 0.0
        %811 = vmatprep.subr.mxu0 0.0
        %812 = vmatpush1.msra.mxu0 0.0
        %813 = vmatprep.subr.mxu0 0.0
        %814 = vmatpush1.msra.mxu0 0.0
        %815 = vmatprep.subr.mxu0 0.0
        %816 = vmatpush1.msra.mxu0 0.0
        %817 = vmatprep.mubr.f32.mxu0 0.0
        %818 = vmatmul.mubr.f32.gmra.mrb[0].mxu0 %v748
        %v819 = vpop.f32.mrb[0].mxu0
        %v820 = vadd.f32 0.0, %v819
        %v821 = vpop.f32.mrb[0].mxu0
        %822 = vmatprep.mubr.f32.mxu0 0.0
        %823 = vmatmul.mubr.f32.gmra.mrb[0].mxu0 %v751
        %v824 = vpop.f32.mrb[0].mxu0
        %v825 = vadd.f32 0.0, %v824
        %v826 = vpop.f32.mrb[0].mxu0
        %827 = vdwg.mxu0
        %v828 = vadd.f32 %v542, %v820
        %v829 = vadd.f32 %v542, %v825
        %830 = vrot.lane.b32.xlu0 %v543, 120
        %v831 = vpop.permute.xlu0 %830
        %832 = vrot.lane.b32.xlu0 %v544, 120
        %v833 = vpop.permute.xlu0 %832
        %834 = vrot.lane.b32.xlu0 %v528, 88
        %v835 = vpop.permute.xlu0 %834
        %836 = vrot.lane.b32.xlu0 %v533, 88
        %v837 = vpop.permute.xlu0 %836
        %v838 = vsel %vm551, %v831, 0
        %v840 = vsel %vm551, %v833, 0
        %v842 = vsel %vm551, %v835, 0
        %v844 = vsel %vm551, %v837, 0
        %846 = vmatprep.subr.mxu0 0.0
        %847 = vmatpush1.xpose.msra.mxu0 %v842
        %848 = vmatprep.subr.mxu0 0.0
        %849 = vmatpush1.xpose.msra.mxu0 %v844
        %850 = vmatprep.subr.mxu0 0.0
        %851 = vmatpush1.xpose.msra.mxu0 0.0
        %852 = vmatprep.subr.mxu0 0.0
        %853 = vmatpush1.xpose.msra.mxu0 0.0
        %854 = vmatprep.subr.mxu0 0.0
        %855 = vmatpush1.xpose.msra.mxu0 0.0
        %856 = vmatprep.subr.mxu0 0.0
        %857 = vmatpush1.xpose.msra.mxu0 0.0
        %858 = vmatprep.subr.mxu0 0.0
        %859 = vmatpush1.xpose.msra.mxu0 0.0
        %860 = vmatprep.subr.mxu0 0.0
        %861 = vmatpush1.xpose.msra.mxu0 0.0
        %862 = vmatprep.subr.mxu0 0.0
        %863 = vmatpush1.xpose.msra.mxu0 0.0
        %864 = vmatprep.subr.mxu0 0.0
        %865 = vmatpush1.xpose.msra.mxu0 0.0
        %866 = vmatprep.subr.mxu0 0.0
        %867 = vmatpush1.xpose.msra.mxu0 0.0
        %868 = vmatprep.subr.mxu0 0.0
        %869 = vmatpush1.xpose.msra.mxu0 0.0
        %870 = vmatprep.subr.mxu0 0.0
        %871 = vmatpush1.xpose.msra.mxu0 0.0
        %872 = vmatprep.subr.mxu0 0.0
        %873 = vmatpush1.xpose.msra.mxu0 0.0
        %874 = vmatprep.subr.mxu0 0.0
        %875 = vmatpush1.xpose.msra.mxu0 0.0
        %876 = vmatprep.subr.mxu0 0.0
        %877 = vmatpush1.xpose.msra.mxu0 0.0
        %878 = vmatprep.subr.mxu0 0.0
        %879 = vmatpush1.xpose.msra.mxu0 0.0
        %880 = vmatprep.subr.mxu0 0.0
        %881 = vmatpush1.xpose.msra.mxu0 0.0
        %882 = vmatprep.subr.mxu0 0.0
        %883 = vmatpush1.xpose.msra.mxu0 0.0
        %884 = vmatprep.subr.mxu0 0.0
        %885 = vmatpush1.xpose.msra.mxu0 0.0
        %886 = vmatprep.subr.mxu0 0.0
        %887 = vmatpush1.xpose.msra.mxu0 0.0
        %888 = vmatprep.subr.mxu0 0.0
        %889 = vmatpush1.xpose.msra.mxu0 0.0
        %890 = vmatprep.subr.mxu0 0.0
        %891 = vmatpush1.xpose.msra.mxu0 0.0
        %892 = vmatprep.subr.mxu0 0.0
        %893 = vmatpush1.xpose.msra.mxu0 0.0
        %894 = vmatprep.subr.mxu0 0.0
        %895 = vmatpush1.xpose.msra.mxu0 0.0
        %896 = vmatprep.subr.mxu0 0.0
        %897 = vmatpush1.xpose.msra.mxu0 0.0
        %898 = vmatprep.subr.mxu0 0.0
        %899 = vmatpush1.xpose.msra.mxu0 0.0
        %900 = vmatprep.subr.mxu0 0.0
        %901 = vmatpush1.xpose.msra.mxu0 0.0
        %902 = vmatprep.subr.mxu0 0.0
        %903 = vmatpush1.xpose.msra.mxu0 0.0
        %904 = vmatprep.subr.mxu0 0.0
        %905 = vmatpush1.xpose.msra.mxu0 0.0
        %906 = vmatprep.subr.mxu0 0.0
        %907 = vmatpush1.xpose.msra.mxu0 0.0
        %908 = vmatprep.subr.mxu0 0.0
        %909 = vmatpush1.xpose.msra.mxu0 0.0
        %910 = vmatprep.mubr.f32.mxu0 0.0
        %911 = vmatmul.mubr.f32.gmra.mrb[0].mxu0 %v838
        %v912 = vpop.f32.mrb[0].mxu0
        %v913 = vadd.f32 0.0, %v912
        %v914 = vpop.f32.mrb[0].mxu0
        %915 = vmatprep.mubr.f32.mxu0 0.0
        %916 = vmatmul.mubr.f32.gmra.mrb[0].mxu0 %v840
        %v917 = vpop.f32.mrb[0].mxu0
        %v918 = vadd.f32 0.0, %v917
        %v919 = vpop.f32.mrb[0].mxu0
        %920 = vdwg.mxu0
        %v921 = vsel %vm637, %v913, -inf
        %922 = vmax.xlane.f32.xlu0 %v921
        %v923 = vpop.xlane.xlu0 %922
        %v924 = vsel %vm637, %v918, -inf
        %925 = vmax.xlane.f32.xlu0 %v924
        %v926 = vpop.xlane.xlu0 %925
        %v927 = vsub.f32 %v913, %v923
        %v928 = vsub.f32 %v918, %v926
        %v929 = vmul.f32 %v927, 1.442695
        %v930 = vpow.pop %v929
        %v931 = vmul.f32 %v928, 1.442695
        %v932 = vpow.pop %v931
        %v933 = vsel %vm637, %v930, 0.0
        %934 = vadd.xlane.f32.xlu0 %v933
        %v935 = vpop.xlane.xlu0 %934
        %v936 = vsel %vm637, %v932, 0.0
        %937 = vadd.xlane.f32.xlu0 %v936
        %v938 = vpop.xlane.xlu0 %937
        %v939 = vrcp.pop %v935
        %v940 = vmul.f32 %v930, %v939
        %v941 = vrcp.pop %v938
        %v942 = vmul.f32 %v932, %v941
        %943 = vrot.lane.b32.xlu0 %v528, 56
        %v944 = vpop.permute.xlu0 %943
        %945 = vrot.lane.b32.xlu0 %v533, 56
        %v946 = vpop.permute.xlu0 %945
        %v950 = vsel %vm637, %v940, 0
        %v953 = vsel %vm637, %v942, 0
        %955 = vmatprep.subr.mxu0 0.0
        %956 = vmatpush1.msra.mxu0 %v944
        %957 = vmatprep.subr.mxu0 0.0
        %958 = vmatpush1.msra.mxu0 %v946
        %959 = vmatprep.subr.mxu0 0.0
        %960 = vmatpush1.msra.mxu0 0.0
        %961 = vmatprep.subr.mxu0 0.0
        %962 = vmatpush1.msra.mxu0 0.0
        %963 = vmatprep.subr.mxu0 0.0
        %964 = vmatpush1.msra.mxu0 0.0
        %965 = vmatprep.subr.mxu0 0.0
        %966 = vmatpush1.msra.mxu0 0.0
        %967 = vmatprep.subr.mxu0 0.0
        %968 = vmatpush1.msra.mxu0 0.0
        %969 = vmatprep.subr.mxu0 0.0
        %970 = vmatpush1.msra.mxu0 0.0
        %971 = vmatprep.subr.mxu0 0.0
        %972 = vmatpush1.msra.mxu0 0.0
        %973 = vmatprep.subr.mxu0 0.0
        %974 = vmatpush1.msra.mxu0 0.0
        %975 = vmatprep.subr.mxu0 0.0
        %976 = vmatpush1.msra.mxu0 0.0
        %977 = vmatprep.subr.mxu0 0.0
        %978 = vmatpush1.msra.mxu0 0.0
        %979 = vmatprep.subr.mxu0 0.0
        %980 = vmatpush1.msra.mxu0 0.0
        %981 = vmatprep.subr.mxu0 0.0
        %982 = vmatpush1.msra.mxu0 0.0
        %983 = vmatprep.subr.mxu0 0.0
        %984 = vmatpush1.msra.mxu0 0.0
        %985 = vmatprep.subr.mxu0 0.0
        %986 = vmatpush1.msra.mxu0 0.0
        %987 = vmatprep.subr.mxu0 0.0
        %988 = vmatpush1.msra.mxu0 0.0
        %989 = vmatprep.subr.mxu0 0.0
        %990 = vmatpush1.msra.mxu0 0.0
        %991 = vmatprep.subr.mxu0 0.0
        %992 = vmatpush1.msra.mxu0 0.0
        %993 = vmatprep.subr.mxu0 0.0
        %994 = vmatpush1.msra.mxu0 0.0
        %995 = vmatprep.subr.mxu0 0.0
        %996 = vmatpush1.msra.mxu0 0.0
        %997 = vmatprep.subr.mxu0 0.0
        %998 = vmatpush1.msra.mxu0 0.0
        %999 = vmatprep.subr.mxu0 0.0
        %1000 = vmatpush1.msra.mxu0 0.0
        %1001 = vmatprep.subr.mxu0 0.0
        %1002 = vmatpush1.msra.mxu0 0.0
        %1003 = vmatprep.subr.mxu0 0.0
        %1004 = vmatpush1.msra.mxu0 0.0
        %1005 = vmatprep.subr.mxu0 0.0
        %1006 = vmatpush1.msra.mxu0 0.0
        %1007 = vmatprep.subr.mxu0 0.0
        %1008 = vmatpush1.msra.mxu0 0.0
        %1009 = vmatprep.subr.mxu0 0.0
        %1010 = vmatpush1.msra.mxu0 0.0
        %1011 = vmatprep.subr.mxu0 0.0
        %1012 = vmatpush1.msra.mxu0 0.0
        %1013 = vmatprep.subr.mxu0 0.0
        %1014 = vmatpush1.msra.mxu0 0.0
        %1015 = vmatprep.subr.mxu0 0.0
        %1016 = vmatpush1.msra.mxu0 0.0
        %1017 = vmatprep.subr.mxu0 0.0
        %1018 = vmatpush1.msra.mxu0 0.0
        %1019 = vmatprep.mubr.f32.mxu0 0.0
        %1020 = vmatmul.mubr.f32.gmra.mrb[0].mxu0 %v950
        %v1021 = vpop.f32.mrb[0].mxu0
        %v1022 = vadd.f32 0.0, %v1021
        %v1023 = vpop.f32.mrb[0].mxu0
        %1024 = vmatprep.mubr.f32.mxu0 0.0
        %1025 = vmatmul.mubr.f32.gmra.mrb[0].mxu0 %v953
        %v1026 = vpop.f32.mrb[0].mxu0
        %v1027 = vadd.f32 0.0, %v1026
        %v1028 = vpop.f32.mrb[0].mxu0
        %1029 = vdwg.mxu0
        %v1031 = vsel %vm551, %v1022, 0
        %v1034 = vsel %vm551, %v1027, 0
        %1036 = vmatprep.subr.mxu0 0.0
        %1037 = vmatpush1.msra.mxu0 %v400
        %1038 = vmatprep.subr.mxu0 0.0
        %1039 = vmatpush1.msra.mxu0 0.0
        %1040 = vmatprep.subr.mxu0 0.0
        %1041 = vmatpush1.msra.mxu0 0.0
        %1042 = vmatprep.subr.mxu0 0.0
        %1043 = vmatpush1.msra.mxu0 0.0
        %1044 = vmatprep.subr.mxu0 0.0
        %1045 = vmatpush1.msra.mxu0 0.0
        %1046 = vmatprep.subr.mxu0 0.0
        %1047 = vmatpush1.msra.mxu0 0.0
        %1048 = vmatprep.subr.mxu0 0.0
        %1049 = vmatpush1.msra.mxu0 0.0
        %1050 = vmatprep.subr.mxu0 0.0
        %1051 = vmatpush1.msra.mxu0 0.0
        %1052 = vmatprep.subr.mxu0 0.0
        %1053 = vmatpush1.msra.mxu0 0.0
        %1054 = vmatprep.subr.mxu0 0.0
        %1055 = vmatpush1.msra.mxu0 0.0
        %1056 = vmatprep.subr.mxu0 0.0
        %1057 = vmatpush1.msra.mxu0 0.0
        %1058 = vmatprep.subr.mxu0 0.0
        %1059 = vmatpush1.msra.mxu0 0.0
        %1060 = vmatprep.subr.mxu0 0.0
        %1061 = vmatpush1.msra.mxu0 0.0
        %1062 = vmatprep.subr.mxu0 0.0
        %1063 = vmatpush1.msra.mxu0 0.0
        %1064 = vmatprep.subr.mxu0 0.0
        %1065 = vmatpush1.msra.mxu0 0.0
        %1066 = vmatprep.subr.mxu0 0.0
        %1067 = vmatpush1.msra.mxu0 0.0
        %1068 = vmatprep.subr.mxu0 0.0
        %1069 = vmatpush1.msra.mxu0 0.0
        %1070 = vmatprep.subr.mxu0 0.0
        %1071 = vmatpush1.msra.mxu0 0.0
        %1072 = vmatprep.subr.mxu0 0.0
        %1073 = vmatpush1.msra.mxu0 0.0
        %1074 = vmatprep.subr.mxu0 0.0
        %1075 = vmatpush1.msra.mxu0 0.0
        %1076 = vmatprep.subr.mxu0 0.0
        %1077 = vmatpush1.msra.mxu0 0.0
        %1078 = vmatprep.subr.mxu0 0.0
        %1079 = vmatpush1.msra.mxu0 0.0
        %1080 = vmatprep.subr.mxu0 0.0
        %1081 = vmatpush1.msra.mxu0 0.0
        %1082 = vmatprep.subr.mxu0 0.0
        %1083 = vmatpush1.msra.mxu0 0.0
        %1084 = vmatprep.subr.mxu0 0.0
        %1085 = vmatpush1.msra.mxu0 0.0
        %1086 = vmatprep.subr.mxu0 0.0
        %1087 = vmatpush1.msra.mxu0 0.0
        %1088 = vmatprep.subr.mxu0 0.0
        %1089 = vmatpush1.msra.mxu0 0.0
        %1090 = vmatprep.subr.mxu0 0.0
        %1091 = vmatpush1.msra.mxu0 0.0
        %1092 = vmatprep.subr.mxu0 0.0
        %1093 = vmatpush1.msra.mxu0 0.0
        %1094 = vmatprep.subr.mxu0 0.0
        %1095 = vmatpush1.msra.mxu0 0.0
        %1096 = vmatprep.subr.mxu0 0.0
        %1097 = vmatpush1.msra.mxu0 0.0
        %1098 = vmatprep.subr.mxu0 0.0
        %1099 = vmatpush1.msra.mxu0 0.0
        %1100 = vmatprep.mubr.f32.mxu0 0.0
        %1101 = vmatmul.mubr.f32.gmra.mrb[0].mxu0 %v1031
        %v1102 = vpop.f32.mrb[0].mxu0
        %v1103 = vadd.f32 0.0, %v1102
        %v1104 = vpop.f32.mrb[0].mxu0
        %1105 = vmatprep.mubr.f32.mxu0 0.0
        %1106 = vmatmul.mubr.f32.gmra.mrb[0].mxu0 %v1034
        %v1107 = vpop.f32.mrb[0].mxu0
        %v1108 = vadd.f32 0.0, %v1107
        %v1109 = vpop.f32.mrb[0].mxu0
        %1110 = vdwg.mxu0
        %v1111 = vadd.f32 %v828, %v1103
        %v1112 = vadd.f32 %v829, %v1108
        %1113 = vrot.lane.b32.xlu0 %v543, 112
        %v1114 = vpop.permute.xlu0 %1113
        %1115 = vrot.lane.b32.xlu0 %v544, 112
        %v1116 = vpop.permute.xlu0 %1115
        %1117 = vrot.lane.b32.xlu0 %v528, 80
        %v1118 = vpop.permute.xlu0 %1117
        %1119 = vrot.lane.b32.xlu0 %v533, 80
        %v1120 = vpop.permute.xlu0 %1119
        %v1121 = vsel %vm551, %v1114, 0
        %v1123 = vsel %vm551, %v1116, 0
        %v1125 = vsel %vm551, %v1118, 0
        %v1127 = vsel %vm551, %v1120, 0
        %1129 = vmatprep.subr.mxu0 0.0
        %1130 = vmatpush1.xpose.msra.mxu0 %v1125
        %1131 = vmatprep.subr.mxu0 0.0
        %1132 = vmatpush1.xpose.msra.mxu0 %v1127
        %1133 = vmatprep.subr.mxu0 0.0
        %1134 = vmatpush1.xpose.msra.mxu0 0.0
        %1135 = vmatprep.subr.mxu0 0.0
        %1136 = vmatpush1.xpose.msra.mxu0 0.0
        %1137 = vmatprep.subr.mxu0 0.0
        %1138 = vmatpush1.xpose.msra.mxu0 0.0
        %1139 = vmatprep.subr.mxu0 0.0
        %1140 = vmatpush1.xpose.msra.mxu0 0.0
        %1141 = vmatprep.subr.mxu0 0.0
        %1142 = vmatpush1.xpose.msra.mxu0 0.0
        %1143 = vmatprep.subr.mxu0 0.0
        %1144 = vmatpush1.xpose.msra.mxu0 0.0
        %1145 = vmatprep.subr.mxu0 0.0
        %1146 = vmatpush1.xpose.msra.mxu0 0.0
        %1147 = vmatprep.subr.mxu0 0.0
        %1148 = vmatpush1.xpose.msra.mxu0 0.0
        %1149 = vmatprep.subr.mxu0 0.0
        %1150 = vmatpush1.xpose.msra.mxu0 0.0
        %1151 = vmatprep.subr.mxu0 0.0
        %1152 = vmatpush1.xpose.msra.mxu0 0.0
        %1153 = vmatprep.subr.mxu0 0.0
        %1154 = vmatpush1.xpose.msra.mxu0 0.0
        %1155 = vmatprep.subr.mxu0 0.0
        %1156 = vmatpush1.xpose.msra.mxu0 0.0
        %1157 = vmatprep.subr.mxu0 0.0
        %1158 = vmatpush1.xpose.msra.mxu0 0.0
        %1159 = vmatprep.subr.mxu0 0.0
        %1160 = vmatpush1.xpose.msra.mxu0 0.0
        %1161 = vmatprep.subr.mxu0 0.0
        %1162 = vmatpush1.xpose.msra.mxu0 0.0
        %1163 = vmatprep.subr.mxu0 0.0
        %1164 = vmatpush1.xpose.msra.mxu0 0.0
        %1165 = vmatprep.subr.mxu0 0.0
        %1166 = vmatpush1.xpose.msra.mxu0 0.0
        %1167 = vmatprep.subr.mxu0 0.0
        %1168 = vmatpush1.xpose.msra.mxu0 0.0
        %1169 = vmatprep.subr.mxu0 0.0
        %1170 = vmatpush1.xpose.msra.mxu0 0.0
        %1171 = vmatprep.subr.mxu0 0.0
        %1172 = vmatpush1.xpose.msra.mxu0 0.0
        %1173 = vmatprep.subr.mxu0 0.0
        %1174 = vmatpush1.xpose.msra.mxu0 0.0
        %1175 = vmatprep.subr.mxu0 0.0
        %1176 = vmatpush1.xpose.msra.mxu0 0.0
        %1177 = vmatprep.subr.mxu0 0.0
        %1178 = vmatpush1.xpose.msra.mxu0 0.0
        %1179 = vmatprep.subr.mxu0 0.0
        %1180 = vmatpush1.xpose.msra.mxu0 0.0
        %1181 = vmatprep.subr.mxu0 0.0
        %1182 = vmatpush1.xpose.msra.mxu0 0.0
        %1183 = vmatprep.subr.mxu0 0.0
        %1184 = vmatpush1.xpose.msra.mxu0 0.0
        %1185 = vmatprep.subr.mxu0 0.0
        %1186 = vmatpush1.xpose.msra.mxu0 0.0
        %1187 = vmatprep.subr.mxu0 0.0
        %1188 = vmatpush1.xpose.msra.mxu0 0.0
        %1189 = vmatprep.subr.mxu0 0.0
        %1190 = vmatpush1.xpose.msra.mxu0 0.0
        %1191 = vmatprep.subr.mxu0 0.0
        %1192 = vmatpush1.xpose.msra.mxu0 0.0
        %1193 = vmatprep.mubr.f32.mxu0 0.0
        %1194 = vmatmul.mubr.f32.gmra.mrb[0].mxu0 %v1121
        %v1195 = vpop.f32.mrb[0].mxu0
        %v1196 = vadd.f32 0.0, %v1195
        %v1197 = vpop.f32.mrb[0].mxu0
        %1198 = vmatprep.mubr.f32.mxu0 0.0
        %1199 = vmatmul.mubr.f32.gmra.mrb[0].mxu0 %v1123
        %v1200 = vpop.f32.mrb[0].mxu0
        %v1201 = vadd.f32 0.0, %v1200
        %v1202 = vpop.f32.mrb[0].mxu0
        %1203 = vdwg.mxu0
        %v1204 = vsel %vm637, %v1196, -inf
        %1205 = vmax.xlane.f32.xlu0 %v1204
        %v1206 = vpop.xlane.xlu0 %1205
        %v1207 = vsel %vm637, %v1201, -inf
        %1208 = vmax.xlane.f32.xlu0 %v1207
        %v1209 = vpop.xlane.xlu0 %1208
        %v1210 = vsub.f32 %v1196, %v1206
        %v1211 = vsub.f32 %v1201, %v1209
        %v1212 = vmul.f32 %v1210, 1.442695
        %v1213 = vpow.pop %v1212
        %v1214 = vmul.f32 %v1211, 1.442695
        %v1215 = vpow.pop %v1214
        %v1216 = vsel %vm637, %v1213, 0.0
        %1217 = vadd.xlane.f32.xlu0 %v1216
        %v1218 = vpop.xlane.xlu0 %1217
        %v1219 = vsel %vm637, %v1215, 0.0
        %1220 = vadd.xlane.f32.xlu0 %v1219
        %v1221 = vpop.xlane.xlu0 %1220
        %v1222 = vrcp.pop %v1218
        %v1223 = vmul.f32 %v1213, %v1222
        %v1224 = vrcp.pop %v1221
        %v1225 = vmul.f32 %v1215, %v1224
        %1226 = vrot.lane.b32.xlu0 %v528, 48
        %v1227 = vpop.permute.xlu0 %1226
        %1228 = vrot.lane.b32.xlu0 %v533, 48
        %v1229 = vpop.permute.xlu0 %1228
        %v1233 = vsel %vm637, %v1223, 0
        %v1236 = vsel %vm637, %v1225, 0
        %1238 = vmatprep.subr.mxu0 0.0
        %1239 = vmatpush1.msra.mxu0 %v1227
        %1240 = vmatprep.subr.mxu0 0.0
        %1241 = vmatpush1.msra.mxu0 %v1229
        %1242 = vmatprep.subr.mxu0 0.0
        %1243 = vmatpush1.msra.mxu0 0.0
        %1244 = vmatprep.subr.mxu0 0.0
        %1245 = vmatpush1.msra.mxu0 0.0
        %1246 = vmatprep.subr.mxu0 0.0
        %1247 = vmatpush1.msra.mxu0 0.0
        %1248 = vmatprep.subr.mxu0 0.0
        %1249 = vmatpush1.msra.mxu0 0.0
        %1250 = vmatprep.subr.mxu0 0.0
        %1251 = vmatpush1.msra.mxu0 0.0
        %1252 = vmatprep.subr.mxu0 0.0
        %1253 = vmatpush1.msra.mxu0 0.0
        %1254 = vmatprep.subr.mxu0 0.0
        %1255 = vmatpush1.msra.mxu0 0.0
        %1256 = vmatprep.subr.mxu0 0.0
        %1257 = vmatpush1.msra.mxu0 0.0
        %1258 = vmatprep.subr.mxu0 0.0
        %1259 = vmatpush1.msra.mxu0 0.0
        %1260 = vmatprep.subr.mxu0 0.0
        %1261 = vmatpush1.msra.mxu0 0.0
        %1262 = vmatprep.subr.mxu0 0.0
        %1263 = vmatpush1.msra.mxu0 0.0
        %1264 = vmatprep.subr.mxu0 0.0
        %1265 = vmatpush1.msra.mxu0 0.0
        %1266 = vmatprep.subr.mxu0 0.0
        %1267 = vmatpush1.msra.mxu0 0.0
        %1268 = vmatprep.subr.mxu0 0.0
        %1269 = vmatpush1.msra.mxu0 0.0
        %1270 = vmatprep.subr.mxu0 0.0
        %1271 = vmatpush1.msra.mxu0 0.0
        %1272 = vmatprep.subr.mxu0 0.0
        %1273 = vmatpush1.msra.mxu0 0.0
        %1274 = vmatprep.subr.mxu0 0.0
        %1275 = vmatpush1.msra.mxu0 0.0
        %1276 = vmatprep.subr.mxu0 0.0
        %1277 = vmatpush1.msra.mxu0 0.0
        %1278 = vmatprep.subr.mxu0 0.0
        %1279 = vmatpush1.msra.mxu0 0.0
        %1280 = vmatprep.subr.mxu0 0.0
        %1281 = vmatpush1.msra.mxu0 0.0
        %1282 = vmatprep.subr.mxu0 0.0
        %1283 = vmatpush1.msra.mxu0 0.0
        %1284 = vmatprep.subr.mxu0 0.0
        %1285 = vmatpush1.msra.mxu0 0.0
        %1286 = vmatprep.subr.mxu0 0.0
        %1287 = vmatpush1.msra.mxu0 0.0
        %1288 = vmatprep.subr.mxu0 0.0
        %1289 = vmatpush1.msra.mxu0 0.0
        %1290 = vmatprep.subr.mxu0 0.0
        %1291 = vmatpush1.msra.mxu0 0.0
        %1292 = vmatprep.subr.mxu0 0.0
        %1293 = vmatpush1.msra.mxu0 0.0
        %1294 = vmatprep.subr.mxu0 0.0
        %1295 = vmatpush1.msra.mxu0 0.0
        %1296 = vmatprep.subr.mxu0 0.0
        %1297 = vmatpush1.msra.mxu0 0.0
        %1298 = vmatprep.subr.mxu0 0.0
        %1299 = vmatpush1.msra.mxu0 0.0
        %1300 = vmatprep.subr.mxu0 0.0
        %1301 = vmatpush1.msra.mxu0 0.0
        %1302 = vmatprep.mubr.f32.mxu0 0.0
        %1303 = vmatmul.mubr.f32.gmra.mrb[0].mxu0 %v1233
        %v1304 = vpop.f32.mrb[0].mxu0
        %v1305 = vadd.f32 0.0, %v1304
        %v1306 = vpop.f32.mrb[0].mxu0
        %1307 = vmatprep.mubr.f32.mxu0 0.0
        %1308 = vmatmul.mubr.f32.gmra.mrb[0].mxu0 %v1236
        %v1309 = vpop.f32.mrb[0].mxu0
        %v1310 = vadd.f32 0.0, %v1309
        %v1311 = vpop.f32.mrb[0].mxu0
        %1312 = vdwg.mxu0
        %v1314 = vsel %vm551, %v1305, 0
        %v1317 = vsel %vm551, %v1310, 0
        %1319 = vmatprep.subr.mxu0 0.0
        %1320 = vmatpush1.msra.mxu0 %v401
        %1321 = vmatprep.subr.mxu0 0.0
        %1322 = vmatpush1.msra.mxu0 0.0
        %1323 = vmatprep.subr.mxu0 0.0
        %1324 = vmatpush1.msra.mxu0 0.0
        %1325 = vmatprep.subr.mxu0 0.0
        %1326 = vmatpush1.msra.mxu0 0.0
        %1327 = vmatprep.subr.mxu0 0.0
        %1328 = vmatpush1.msra.mxu0 0.0
        %1329 = vmatprep.subr.mxu0 0.0
        %1330 = vmatpush1.msra.mxu0 0.0
        %1331 = vmatprep.subr.mxu0 0.0
        %1332 = vmatpush1.msra.mxu0 0.0
        %1333 = vmatprep.subr.mxu0 0.0
        %1334 = vmatpush1.msra.mxu0 0.0
        %1335 = vmatprep.subr.mxu0 0.0
        %1336 = vmatpush1.msra.mxu0 0.0
        %1337 = vmatprep.subr.mxu0 0.0
        %1338 = vmatpush1.msra.mxu0 0.0
        %1339 = vmatprep.subr.mxu0 0.0
        %1340 = vmatpush1.msra.mxu0 0.0
        %1341 = vmatprep.subr.mxu0 0.0
        %1342 = vmatpush1.msra.mxu0 0.0
        %1343 = vmatprep.subr.mxu0 0.0
        %1344 = vmatpush1.msra.mxu0 0.0
        %1345 = vmatprep.subr.mxu0 0.0
        %1346 = vmatpush1.msra.mxu0 0.0
        %1347 = vmatprep.subr.mxu0 0.0
        %1348 = vmatpush1.msra.mxu0 0.0
        %1349 = vmatprep.subr.mxu0 0.0
        %1350 = vmatpush1.msra.mxu0 0.0
        %1351 = vmatprep.subr.mxu0 0.0
        %1352 = vmatpush1.msra.mxu0 0.0
        %1353 = vmatprep.subr.mxu0 0.0
        %1354 = vmatpush1.msra.mxu0 0.0
        %1355 = vmatprep.subr.mxu0 0.0
        %1356 = vmatpush1.msra.mxu0 0.0
        %1357 = vmatprep.subr.mxu0 0.0
        %1358 = vmatpush1.msra.mxu0 0.0
        %1359 = vmatprep.subr.mxu0 0.0
        %1360 = vmatpush1.msra.mxu0 0.0
        %1361 = vmatprep.subr.mxu0 0.0
        %1362 = vmatpush1.msra.mxu0 0.0
        %1363 = vmatprep.subr.mxu0 0.0
        %1364 = vmatpush1.msra.mxu0 0.0
        %1365 = vmatprep.subr.mxu0 0.0
        %1366 = vmatpush1.msra.mxu0 0.0
        %1367 = vmatprep.subr.mxu0 0.0
        %1368 = vmatpush1.msra.mxu0 0.0
        %1369 = vmatprep.subr.mxu0 0.0
        %1370 = vmatpush1.msra.mxu0 0.0
        %1371 = vmatprep.subr.mxu0 0.0
        %1372 = vmatpush1.msra.mxu0 0.0
        %1373 = vmatprep.subr.mxu0 0.0
        %1374 = vmatpush1.msra.mxu0 0.0
        %1375 = vmatprep.subr.mxu0 0.0
        %1376 = vmatpush1.msra.mxu0 0.0
        %1377 = vmatprep.subr.mxu0 0.0
        %1378 = vmatpush1.msra.mxu0 0.0
        %1379 = vmatprep.subr.mxu0 0.0
        %1380 = vmatpush1.msra.mxu0 0.0
        %1381 = vmatprep.subr.mxu0 0.0
        %1382 = vmatpush1.msra.mxu0 0.0
        %1383 = vmatprep.mubr.f32.mxu0 0.0
        %1384 = vmatmul.mubr.f32.gmra.mrb[0].mxu0 %v1314
        %v1385 = vpop.f32.mrb[0].mxu0
        %v1386 = vadd.f32 0.0, %v1385
        %v1387 = vpop.f32.mrb[0].mxu0
        %1388 = vmatprep.mubr.f32.mxu0 0.0
        %1389 = vmatmul.mubr.f32.gmra.mrb[0].mxu0 %v1317
        %v1390 = vpop.f32.mrb[0].mxu0
        %v1391 = vadd.f32 0.0, %v1390
        %v1392 = vpop.f32.mrb[0].mxu0
        %1393 = vdwg.mxu0
        %v1394 = vadd.f32 %v1111, %v1386
        %v1395 = vadd.f32 %v1112, %v1391
        %1396 = vrot.lane.b32.xlu0 %v543, 104
        %v1397 = vpop.permute.xlu0 %1396
        %1398 = vrot.lane.b32.xlu0 %v544, 104
        %v1399 = vpop.permute.xlu0 %1398
        %1400 = vrot.lane.b32.xlu0 %v528, 72
        %v1401 = vpop.permute.xlu0 %1400
        %1402 = vrot.lane.b32.xlu0 %v533, 72
        %v1403 = vpop.permute.xlu0 %1402
        %v1404 = vsel %vm551, %v1397, 0
        %v1406 = vsel %vm551, %v1399, 0
        %v1408 = vsel %vm551, %v1401, 0
        %v1410 = vsel %vm551, %v1403, 0
        %1412 = vmatprep.subr.mxu0 0.0
        %1413 = vmatpush1.xpose.msra.mxu0 %v1408
        %1414 = vmatprep.subr.mxu0 0.0
        %1415 = vmatpush1.xpose.msra.mxu0 %v1410
        %1416 = vmatprep.subr.mxu0 0.0
        %1417 = vmatpush1.xpose.msra.mxu0 0.0
        %1418 = vmatprep.subr.mxu0 0.0
        %1419 = vmatpush1.xpose.msra.mxu0 0.0
        %1420 = vmatprep.subr.mxu0 0.0
        %1421 = vmatpush1.xpose.msra.mxu0 0.0
        %1422 = vmatprep.subr.mxu0 0.0
        %1423 = vmatpush1.xpose.msra.mxu0 0.0
        %1424 = vmatprep.subr.mxu0 0.0
        %1425 = vmatpush1.xpose.msra.mxu0 0.0
        %1426 = vmatprep.subr.mxu0 0.0
        %1427 = vmatpush1.xpose.msra.mxu0 0.0
        %1428 = vmatprep.subr.mxu0 0.0
        %1429 = vmatpush1.xpose.msra.mxu0 0.0
        %1430 = vmatprep.subr.mxu0 0.0
        %1431 = vmatpush1.xpose.msra.mxu0 0.0
        %1432 = vmatprep.subr.mxu0 0.0
        %1433 = vmatpush1.xpose.msra.mxu0 0.0
        %1434 = vmatprep.subr.mxu0 0.0
        %1435 = vmatpush1.xpose.msra.mxu0 0.0
        %1436 = vmatprep.subr.mxu0 0.0
        %1437 = vmatpush1.xpose.msra.mxu0 0.0
        %1438 = vmatprep.subr.mxu0 0.0
        %1439 = vmatpush1.xpose.msra.mxu0 0.0
        %1440 = vmatprep.subr.mxu0 0.0
        %1441 = vmatpush1.xpose.msra.mxu0 0.0
        %1442 = vmatprep.subr.mxu0 0.0
        %1443 = vmatpush1.xpose.msra.mxu0 0.0
        %1444 = vmatprep.subr.mxu0 0.0
        %1445 = vmatpush1.xpose.msra.mxu0 0.0
        %1446 = vmatprep.subr.mxu0 0.0
        %1447 = vmatpush1.xpose.msra.mxu0 0.0
        %1448 = vmatprep.subr.mxu0 0.0
        %1449 = vmatpush1.xpose.msra.mxu0 0.0
        %1450 = vmatprep.subr.mxu0 0.0
        %1451 = vmatpush1.xpose.msra.mxu0 0.0
        %1452 = vmatprep.subr.mxu0 0.0
        %1453 = vmatpush1.xpose.msra.mxu0 0.0
        %1454 = vmatprep.subr.mxu0 0.0
        %1455 = vmatpush1.xpose.msra.mxu0 0.0
        %1456 = vmatprep.subr.mxu0 0.0
        %1457 = vmatpush1.xpose.msra.mxu0 0.0
        %1458 = vmatprep.subr.mxu0 0.0
        %1459 = vmatpush1.xpose.msra.mxu0 0.0
        %1460 = vmatprep.subr.mxu0 0.0
        %1461 = vmatpush1.xpose.msra.mxu0 0.0
        %1462 = vmatprep.subr.mxu0 0.0
        %1463 = vmatpush1.xpose.msra.mxu0 0.0
        %1464 = vmatprep.subr.mxu0 0.0
        %1465 = vmatpush1.xpose.msra.mxu0 0.0
        %1466 = vmatprep.subr.mxu0 0.0
        %1467 = vmatpush1.xpose.msra.mxu0 0.0
        %1468 = vmatprep.subr.mxu0 0.0
        %1469 = vmatpush1.xpose.msra.mxu0 0.0
        %1470 = vmatprep.subr.mxu0 0.0
        %1471 = vmatpush1.xpose.msra.mxu0 0.0
        %1472 = vmatprep.subr.mxu0 0.0
        %1473 = vmatpush1.xpose.msra.mxu0 0.0
        %1474 = vmatprep.subr.mxu0 0.0
        %1475 = vmatpush1.xpose.msra.mxu0 0.0
        %1476 = vmatprep.mubr.f32.mxu0 0.0
        %1477 = vmatmul.mubr.f32.gmra.mrb[0].mxu0 %v1404
        %v1478 = vpop.f32.mrb[0].mxu0
        %v1479 = vadd.f32 0.0, %v1478
        %v1480 = vpop.f32.mrb[0].mxu0
        %1481 = vmatprep.mubr.f32.mxu0 0.0
        %1482 = vmatmul.mubr.f32.gmra.mrb[0].mxu0 %v1406
        %v1483 = vpop.f32.mrb[0].mxu0
        %v1484 = vadd.f32 0.0, %v1483
        %v1485 = vpop.f32.mrb[0].mxu0
        %1486 = vdwg.mxu0
        %v1487 = vsel %vm637, %v1479, -inf
        %1488 = vmax.xlane.f32.xlu0 %v1487
        %v1489 = vpop.xlane.xlu0 %1488
        %v1490 = vsel %vm637, %v1484, -inf
        %1491 = vmax.xlane.f32.xlu0 %v1490
        %v1492 = vpop.xlane.xlu0 %1491
        %v1493 = vsub.f32 %v1479, %v1489
        %v1494 = vsub.f32 %v1484, %v1492
        %v1495 = vmul.f32 %v1493, 1.442695
        %v1496 = vpow.pop %v1495
        %v1497 = vmul.f32 %v1494, 1.442695
        %v1498 = vpow.pop %v1497
        %v1499 = vsel %vm637, %v1496, 0.0
        %1500 = vadd.xlane.f32.xlu0 %v1499
        %v1501 = vpop.xlane.xlu0 %1500
        %v1502 = vsel %vm637, %v1498, 0.0
        %1503 = vadd.xlane.f32.xlu0 %v1502
        %v1504 = vpop.xlane.xlu0 %1503
        %v1505 = vrcp.pop %v1501
        %v1506 = vmul.f32 %v1496, %v1505
        %v1507 = vrcp.pop %v1504
        %v1508 = vmul.f32 %v1498, %v1507
        %1509 = vrot.lane.b32.xlu0 %v528, 40
        %v1510 = vpop.permute.xlu0 %1509
        %1511 = vrot.lane.b32.xlu0 %v533, 40
        %v1512 = vpop.permute.xlu0 %1511
        %v1516 = vsel %vm637, %v1506, 0
        %v1519 = vsel %vm637, %v1508, 0
        %1521 = vmatprep.subr.mxu0 0.0
        %1522 = vmatpush1.msra.mxu0 %v1510
        %1523 = vmatprep.subr.mxu0 0.0
        %1524 = vmatpush1.msra.mxu0 %v1512
        %1525 = vmatprep.subr.mxu0 0.0
        %1526 = vmatpush1.msra.mxu0 0.0
        %1527 = vmatprep.subr.mxu0 0.0
        %1528 = vmatpush1.msra.mxu0 0.0
        %1529 = vmatprep.subr.mxu0 0.0
        %1530 = vmatpush1.msra.mxu0 0.0
        %1531 = vmatprep.subr.mxu0 0.0
        %1532 = vmatpush1.msra.mxu0 0.0
        %1533 = vmatprep.subr.mxu0 0.0
        %1534 = vmatpush1.msra.mxu0 0.0
        %1535 = vmatprep.subr.mxu0 0.0
        %1536 = vmatpush1.msra.mxu0 0.0
        %1537 = vmatprep.subr.mxu0 0.0
        %1538 = vmatpush1.msra.mxu0 0.0
        %1539 = vmatprep.subr.mxu0 0.0
        %1540 = vmatpush1.msra.mxu0 0.0
        %1541 = vmatprep.subr.mxu0 0.0
        %1542 = vmatpush1.msra.mxu0 0.0
        %1543 = vmatprep.subr.mxu0 0.0
        %1544 = vmatpush1.msra.mxu0 0.0
        %1545 = vmatprep.subr.mxu0 0.0
        %1546 = vmatpush1.msra.mxu0 0.0
        %1547 = vmatprep.subr.mxu0 0.0
        %1548 = vmatpush1.msra.mxu0 0.0
        %1549 = vmatprep.subr.mxu0 0.0
        %1550 = vmatpush1.msra.mxu0 0.0
        %1551 = vmatprep.subr.mxu0 0.0
        %1552 = vmatpush1.msra.mxu0 0.0
        %1553 = vmatprep.subr.mxu0 0.0
        %1554 = vmatpush1.msra.mxu0 0.0
        %1555 = vmatprep.subr.mxu0 0.0
        %1556 = vmatpush1.msra.mxu0 0.0
        %1557 = vmatprep.subr.mxu0 0.0
        %1558 = vmatpush1.msra.mxu0 0.0
        %1559 = vmatprep.subr.mxu0 0.0
        %1560 = vmatpush1.msra.mxu0 0.0
        %1561 = vmatprep.subr.mxu0 0.0
        %1562 = vmatpush1.msra.mxu0 0.0
        %1563 = vmatprep.subr.mxu0 0.0
        %1564 = vmatpush1.msra.mxu0 0.0
        %1565 = vmatprep.subr.mxu0 0.0
        %1566 = vmatpush1.msra.mxu0 0.0
        %1567 = vmatprep.subr.mxu0 0.0
        %1568 = vmatpush1.msra.mxu0 0.0
        %1569 = vmatprep.subr.mxu0 0.0
        %1570 = vmatpush1.msra.mxu0 0.0
        %1571 = vmatprep.subr.mxu0 0.0
        %1572 = vmatpush1.msra.mxu0 0.0
        %1573 = vmatprep.subr.mxu0 0.0
        %1574 = vmatpush1.msra.mxu0 0.0
        %1575 = vmatprep.subr.mxu0 0.0
        %1576 = vmatpush1.msra.mxu0 0.0
        %1577 = vmatprep.subr.mxu0 0.0
        %1578 = vmatpush1.msra.mxu0 0.0
        %1579 = vmatprep.subr.mxu0 0.0
        %1580 = vmatpush1.msra.mxu0 0.0
        %1581 = vmatprep.subr.mxu0 0.0
        %1582 = vmatpush1.msra.mxu0 0.0
        %1583 = vmatprep.subr.mxu0 0.0
        %1584 = vmatpush1.msra.mxu0 0.0
        %1585 = vmatprep.mubr.f32.mxu0 0.0
        %1586 = vmatmul.mubr.f32.gmra.mrb[0].mxu0 %v1516
        %v1587 = vpop.f32.mrb[0].mxu0
        %v1588 = vadd.f32 0.0, %v1587
        %v1589 = vpop.f32.mrb[0].mxu0
        %1590 = vmatprep.mubr.f32.mxu0 0.0
        %1591 = vmatmul.mubr.f32.gmra.mrb[0].mxu0 %v1519
        %v1592 = vpop.f32.mrb[0].mxu0
        %v1593 = vadd.f32 0.0, %v1592
        %v1594 = vpop.f32.mrb[0].mxu0
        %1595 = vdwg.mxu0
        %v1597 = vsel %vm551, %v1588, 0
        %v1600 = vsel %vm551, %v1593, 0
        %1602 = vmatprep.subr.mxu0 0.0
        %1603 = vmatpush1.msra.mxu0 %v402
        %1604 = vmatprep.subr.mxu0 0.0
        %1605 = vmatpush1.msra.mxu0 0.0
        %1606 = vmatprep.subr.mxu0 0.0
        %1607 = vmatpush1.msra.mxu0 0.0
        %1608 = vmatprep.subr.mxu0 0.0
        %1609 = vmatpush1.msra.mxu0 0.0
        %1610 = vmatprep.subr.mxu0 0.0
        %1611 = vmatpush1.msra.mxu0 0.0
        %1612 = vmatprep.subr.mxu0 0.0
        %1613 = vmatpush1.msra.mxu0 0.0
        %1614 = vmatprep.subr.mxu0 0.0
        %1615 = vmatpush1.msra.mxu0 0.0
        %1616 = vmatprep.subr.mxu0 0.0
        %1617 = vmatpush1.msra.mxu0 0.0
        %1618 = vmatprep.subr.mxu0 0.0
        %1619 = vmatpush1.msra.mxu0 0.0
        %1620 = vmatprep.subr.mxu0 0.0
        %1621 = vmatpush1.msra.mxu0 0.0
        %1622 = vmatprep.subr.mxu0 0.0
        %1623 = vmatpush1.msra.mxu0 0.0
        %1624 = vmatprep.subr.mxu0 0.0
        %1625 = vmatpush1.msra.mxu0 0.0
        %1626 = vmatprep.subr.mxu0 0.0
        %1627 = vmatpush1.msra.mxu0 0.0
        %1628 = vmatprep.subr.mxu0 0.0
        %1629 = vmatpush1.msra.mxu0 0.0
        %1630 = vmatprep.subr.mxu0 0.0
        %1631 = vmatpush1.msra.mxu0 0.0
        %1632 = vmatprep.subr.mxu0 0.0
        %1633 = vmatpush1.msra.mxu0 0.0
        %1634 = vmatprep.subr.mxu0 0.0
        %1635 = vmatpush1.msra.mxu0 0.0
        %1636 = vmatprep.subr.mxu0 0.0
        %1637 = vmatpush1.msra.mxu0 0.0
        %1638 = vmatprep.subr.mxu0 0.0
        %1639 = vmatpush1.msra.mxu0 0.0
        %1640 = vmatprep.subr.mxu0 0.0
        %1641 = vmatpush1.msra.mxu0 0.0
        %1642 = vmatprep.subr.mxu0 0.0
        %1643 = vmatpush1.msra.mxu0 0.0
        %1644 = vmatprep.subr.mxu0 0.0
        %1645 = vmatpush1.msra.mxu0 0.0
        %1646 = vmatprep.subr.mxu0 0.0
        %1647 = vmatpush1.msra.mxu0 0.0
        %1648 = vmatprep.subr.mxu0 0.0
        %1649 = vmatpush1.msra.mxu0 0.0
        %1650 = vmatprep.subr.mxu0 0.0
        %1651 = vmatpush1.msra.mxu0 0.0
        %1652 = vmatprep.subr.mxu0 0.0
        %1653 = vmatpush1.msra.mxu0 0.0
        %1654 = vmatprep.subr.mxu0 0.0
        %1655 = vmatpush1.msra.mxu0 0.0
        %1656 = vmatprep.subr.mxu0 0.0
        %1657 = vmatpush1.msra.mxu0 0.0
        %1658 = vmatprep.subr.mxu0 0.0
        %1659 = vmatpush1.msra.mxu0 0.0
        %1660 = vmatprep.subr.mxu0 0.0
        %1661 = vmatpush1.msra.mxu0 0.0
        %1662 = vmatprep.subr.mxu0 0.0
        %1663 = vmatpush1.msra.mxu0 0.0
        %1664 = vmatprep.subr.mxu0 0.0
        %1665 = vmatpush1.msra.mxu0 0.0
        %1666 = vmatprep.mubr.f32.mxu0 0.0
        %1667 = vmatmul.mubr.f32.gmra.mrb[0].mxu0 %v1597
        %v1668 = vpop.f32.mrb[0].mxu0
        %v1669 = vadd.f32 0.0, %v1668
        %v1670 = vpop.f32.mrb[0].mxu0
        %1671 = vmatprep.mubr.f32.mxu0 0.0
        %1672 = vmatmul.mubr.f32.gmra.mrb[0].mxu0 %v1600
        %v1673 = vpop.f32.mrb[0].mxu0
        %v1674 = vadd.f32 0.0, %v1673
        %v1675 = vpop.f32.mrb[0].mxu0
        %1676 = vdwg.mxu0
        %v1677 = vadd.f32 %v1394, %v1669
        %v1678 = vadd.f32 %v1395, %v1674
        %v1679 = vsel %vm421, %v1677, 0.0
        %1680 = vadd.xlane.f32.xlu0 %v1679
        %v1681 = vpop.xlane.xlu0 %1680
        %v1682 = vsel %vm421, %v1678, 0.0
        %1683 = vadd.xlane.f32.xlu0 %v1682
        %v1684 = vpop.xlane.xlu0 %1683
        %v1685 = vmul.f32 %v1681, %v428
        %v1686 = vmul.f32 %v1684, %v428
        %v1687 = vsub.f32 %v1677, %v1685
        %v1688 = vsub.f32 %v1678, %v1686
        %v1689 = vmul.f32 %v1687, %v1687
        %v1690 = vmul.f32 %v1688, %v1688
        %v1691 = vsel %vm421, %v1689, 0.0
        %1692 = vadd.xlane.f32.xlu0 %v1691
        %v1693 = vpop.xlane.xlu0 %1692
        %v1694 = vsel %vm421, %v1690, 0.0
        %1695 = vadd.xlane.f32.xlu0 %v1694
        %v1696 = vpop.xlane.xlu0 %1695
        %v1697 = vmul.f32 %v1693, %v428
        %v1698 = vmul.f32 %v1696, %v428
        %v1699 = vadd.f32 %v1697, 1e-05
        %v1700 = vadd.f32 %v1698, 1e-05
        %v1701 = vrsqrt.pop %v1699
        %v1702 = vrsqrt.pop %v1700
        %v1703 = vmul.f32 %v1687, %v1701
        %v1704 = vmul.f32 %v1688, %v1702
        %v1705 = vadd.f32 %v1703, %v419
        %v1706 = vadd.f32 %v1704, %v420
        %v1707 = vsel %vm421, %v1705, 0.0
        %1708 = vadd.xlane.f32.xlu0 %v1707
        %v1709 = vpop.xlane.xlu0 %1708
        %v1710 = vsel %vm421, %v1706, 0.0
        %1711 = vadd.xlane.f32.xlu0 %v1710
        %v1712 = vpop.xlane.xlu0 %1711
        %v1713 = vmul.f32 %v1709, %v428
        %v1714 = vmul.f32 %v1712, %v428
        %v1715 = vsub.f32 %v1705, %v1713
        %v1716 = vsub.f32 %v1706, %v1714
        %v1717 = vmul.f32 %v1715, %v1715
        %v1718 = vmul.f32 %v1716, %v1716
        %v1719 = vsel %vm421, %v1717, 0.0
        %1720 = vadd.xlane.f32.xlu0 %v1719
        %v1721 = vpop.xlane.xlu0 %1720
        %v1722 = vsel %vm421, %v1718, 0.0
        %1723 = vadd.xlane.f32.xlu0 %v1722
        %v1724 = vpop.xlane.xlu0 %1723
        %v1725 = vmul.f32 %v1721, %v428
        %v1726 = vmul.f32 %v1724, %v428
        %v1727 = vadd.f32 %v1725, 1e-05
        %v1728 = vadd.f32 %v1726, 1e-05
        %v1729 = vrsqrt.pop %v1727
        %v1730 = vrsqrt.pop %v1728
        %v1731 = vmul.f32 %v1715, %v1729
        %v1732 = vmul.f32 %v1716, %v1730
        %v1734 = vlaneseq
        %v1735 = vshrl.u32 %v1734, 7
        %v1736 = vsub.s32 0, %v1735
        %v1737 = vrot.slane %v408, %v1736
        %v1740 = vsel %vm421, %v1731, 0
        %v1743 = vsel %vm421, %v1732, 0
        %1745 = vmatprep.subr.mxu0 0.0
        %1746 = vmatpush1.msra.mxu0 %v404
        %1747 = vmatprep.subr.mxu0 0.0
        %1748 = vmatpush1.msra.mxu0 %v405
        %1749 = vmatprep.subr.mxu0 0.0
        %1750 = vmatpush1.msra.mxu0 %v406
        %1751 = vmatprep.subr.mxu0 0.0
        %1752 = vmatpush1.msra.mxu0 %v407
        %1753 = vmatprep.subr.mxu0 0.0
        %1754 = vmatpush1.msra.mxu0 0.0
        %1755 = vmatprep.subr.mxu0 0.0
        %1756 = vmatpush1.msra.mxu0 0.0
        %1757 = vmatprep.subr.mxu0 0.0
        %1758 = vmatpush1.msra.mxu0 0.0
        %1759 = vmatprep.subr.mxu0 0.0
        %1760 = vmatpush1.msra.mxu0 0.0
        %1761 = vmatprep.subr.mxu0 0.0
        %1762 = vmatpush1.msra.mxu0 0.0
        %1763 = vmatprep.subr.mxu0 0.0
        %1764 = vmatpush1.msra.mxu0 0.0
        %1765 = vmatprep.subr.mxu0 0.0
        %1766 = vmatpush1.msra.mxu0 0.0
        %1767 = vmatprep.subr.mxu0 0.0
        %1768 = vmatpush1.msra.mxu0 0.0
        %1769 = vmatprep.subr.mxu0 0.0
        %1770 = vmatpush1.msra.mxu0 0.0
        %1771 = vmatprep.subr.mxu0 0.0
        %1772 = vmatpush1.msra.mxu0 0.0
        %1773 = vmatprep.subr.mxu0 0.0
        %1774 = vmatpush1.msra.mxu0 0.0
        %1775 = vmatprep.subr.mxu0 0.0
        %1776 = vmatpush1.msra.mxu0 0.0
        %1777 = vmatprep.subr.mxu0 0.0
        %1778 = vmatpush1.msra.mxu0 0.0
        %1779 = vmatprep.subr.mxu0 0.0
        %1780 = vmatpush1.msra.mxu0 0.0
        %1781 = vmatprep.subr.mxu0 0.0
        %1782 = vmatpush1.msra.mxu0 0.0
        %1783 = vmatprep.subr.mxu0 0.0
        %1784 = vmatpush1.msra.mxu0 0.0
        %1785 = vmatprep.subr.mxu0 0.0
        %1786 = vmatpush1.msra.mxu0 0.0
        %1787 = vmatprep.subr.mxu0 0.0
        %1788 = vmatpush1.msra.mxu0 0.0
        %1789 = vmatprep.subr.mxu0 0.0
        %1790 = vmatpush1.msra.mxu0 0.0
        %1791 = vmatprep.subr.mxu0 0.0
        %1792 = vmatpush1.msra.mxu0 0.0
        %1793 = vmatprep.subr.mxu0 0.0
        %1794 = vmatpush1.msra.mxu0 0.0
        %1795 = vmatprep.subr.mxu0 0.0
        %1796 = vmatpush1.msra.mxu0 0.0
        %1797 = vmatprep.subr.mxu0 0.0
        %1798 = vmatpush1.msra.mxu0 0.0
        %1799 = vmatprep.subr.mxu0 0.0
        %1800 = vmatpush1.msra.mxu0 0.0
        %1801 = vmatprep.subr.mxu0 0.0
        %1802 = vmatpush1.msra.mxu0 0.0
        %1803 = vmatprep.subr.mxu0 0.0
        %1804 = vmatpush1.msra.mxu0 0.0
        %1805 = vmatprep.subr.mxu0 0.0
        %1806 = vmatpush1.msra.mxu0 0.0
        %1807 = vmatprep.subr.mxu0 0.0
        %1808 = vmatpush1.msra.mxu0 0.0
        %1809 = vmatprep.mubr.f32.mxu0 0.0
        %1810 = vmatmul.mubr.f32.gmra.mrb[0].mxu0 %v1740
        %v1811 = vpop.f32.mrb[0].mxu0
        %v1812 = vadd.f32 %v1737, %v1811
        %v1813 = vpop.f32.mrb[0].mxu0
        %1814 = vmatprep.mubr.f32.mxu0 0.0
        %1815 = vmatmul.mubr.f32.gmra.mrb[0].mxu0 %v1743
        %v1816 = vpop.f32.mrb[0].mxu0
        %v1817 = vadd.f32 %v1737, %v1816
        %v1818 = vpop.f32.mrb[0].mxu0
        %1819 = vdwg.mxu0
        %v1820 = vmul.f32 %v1812, 0.5
        %v1821 = vmul.f32 %v1817, 0.5
        %v1822 = vmul.f32 %v1812, 0.70710677
        %v1823 = vmul.f32 %v1817, 0.70710677
        %v1824 = vand.u32 2147483647, %v1822
        %v1825 = vand.u32 2147483647, %v1823
        %v1826 = vmul.f32 %v1824, 0.3275911
        %v1827 = vmul.f32 %v1825, 0.3275911
        %v1828 = vadd.f32 %v1826, 1.0
        %v1829 = vadd.f32 %v1827, 1.0
        %v1830 = vrcp.pop %v1828
        %v1831 = vmul.f32 1.0, %v1830
        %v1832 = vrcp.pop %v1829
        %v1833 = vmul.f32 1.0, %v1832
        %v1834 = vmul.f32 %v1831, 1.0614054
        %v1835 = vmul.f32 %v1833, 1.0614054
        %v1836 = vadd.f32 %v1834, -1.4531521
        %v1837 = vadd.f32 %v1835, -1.4531521
        %v1838 = vmul.f32 %v1836, %v1831
        %v1839 = vmul.f32 %v1837, %v1833
        %v1840 = vadd.f32 %v1838, 1.4214138
        %v1841 = vadd.f32 %v1839, 1.4214138
        %v1842 = vmul.f32 %v1840, %v1831
        %v1843 = vmul.f32 %v1841, %v1833
        %v1844 = vadd.f32 %v1842, -0.28449672
        %v1845 = vadd.f32 %v1843, -0.28449672
        %v1846 = vmul.f32 %v1844, %v1831
        %v1847 = vmul.f32 %v1845, %v1833
        %v1848 = vadd.f32 %v1846, 0.2548296
        %v1849 = vadd.f32 %v1847, 0.2548296
        %v1850 = vmul.f32 %v1848, %v1831
        %v1851 = vmul.f32 %v1849, %v1833
        %v1852 = vsub.f32 0.0, %v1824
        %v1853 = vsub.f32 0.0, %v1825
        %v1854 = vmul.f32 %v1852, %v1824
        %v1855 = vmul.f32 %v1853, %v1825
        %v1856 = vmul.f32 %v1854, 1.442695
        %v1857 = vpow.pop %v1856
        %v1858 = vmul.f32 %v1855, 1.442695
        %v1859 = vpow.pop %v1858
        %v1860 = vmul.f32 %v1850, %v1857
        %v1861 = vmul.f32 %v1851, %v1859
        %v1862 = vsub.f32 1.0, %v1860
        %v1863 = vsub.f32 1.0, %v1861
        %vm1864 = vcmp.ge.f32.partialorder %v1822, 0.0
        %vm1865 = vcmp.ge.f32.partialorder %v1823, 0.0
        %v1866 = vsub.f32 0.0, %v1862
        %v1867 = vsub.f32 0.0, %v1863
        %v1868 = vsel %vm1864, %v1862, %v1866
        %v1869 = vsel %vm1865, %v1863, %v1867
        %v1870 = vadd.f32 %v1868, 1.0
        %v1871 = vadd.f32 %v1869, 1.0
        %v1872 = vmul.f32 %v1820, %v1870
        %v1873 = vmul.f32 %v1821, %v1871
        %vm1874 = vcmask 523264
        %v1875 = vsel %vm1874, %v1872, 0.0
        %1876 = vadd.xlane.f32.xlu0 %v1875
        %v1877 = vpop.xlane.xlu0 %1876
        %v1878 = vsel %vm1874, %v1873, 0.0
        %1879 = vadd.xlane.f32.xlu0 %v1878
        %v1880 = vpop.xlane.xlu0 %1879
        %v1881 = vrcp.pop 64.0
        %v1882 = vmul.f32 %v1877, %v1881
        %v1883 = vmul.f32 %v1880, %v1881
        %v1884 = vsub.f32 %v1872, %v1882
        %v1885 = vsub.f32 %v1873, %v1883
        %v1886 = vmul.f32 %v1884, %v1884
        %v1887 = vmul.f32 %v1885, %v1885
        %v1888 = vsel %vm1874, %v1886, 0.0
        %1889 = vadd.xlane.f32.xlu0 %v1888
        %v1890 = vpop.xlane.xlu0 %1889
        %v1891 = vsel %vm1874, %v1887, 0.0
        %1892 = vadd.xlane.f32.xlu0 %v1891
        %v1893 = vpop.xlane.xlu0 %1892
        %v1894 = vmul.f32 %v1890, %v1881
        %v1895 = vmul.f32 %v1893, %v1881
        %v1896 = vadd.f32 %v1894, 1e-05
        %v1897 = vadd.f32 %v1895, 1e-05
        %v1898 = vrsqrt.pop %v1896
        %v1899 = vrsqrt.pop %v1897
        %v1900 = vmul.f32 %v1884, %v1898
        %v1901 = vmul.f32 %v1885, %v1899
        %v1903 = vlaneseq
        %v1904 = vshrl.u32 %v1903, 7
        %v1905 = vsub.s32 0, %v1904
        %v1906 = vrot.slane %v417, %v1905
        %v1909 = vsel %vm1874, %v1900, 0
        %v1912 = vsel %vm1874, %v1901, 0
        %1914 = vmatprep.subr.mxu0 0.0
        %1915 = vmatpush1.msra.mxu0 %v409
        %1916 = vmatprep.subr.mxu0 0.0
        %1917 = vmatpush1.msra.mxu0 %v410
        %1918 = vmatprep.subr.mxu0 0.0
        %1919 = vmatpush1.msra.mxu0 %v411
        %1920 = vmatprep.subr.mxu0 0.0
        %1921 = vmatpush1.msra.mxu0 %v412
        %1922 = vmatprep.subr.mxu0 0.0
        %1923 = vmatpush1.msra.mxu0 %v413
        %1924 = vmatprep.subr.mxu0 0.0
        %1925 = vmatpush1.msra.mxu0 %v414
        %1926 = vmatprep.subr.mxu0 0.0
        %1927 = vmatpush1.msra.mxu0 %v415
        %1928 = vmatprep.subr.mxu0 0.0
        %1929 = vmatpush1.msra.mxu0 %v416
        %1930 = vmatprep.subr.mxu0 0.0
        %1931 = vmatpush1.msra.mxu0 0.0
        %1932 = vmatprep.subr.mxu0 0.0
        %1933 = vmatpush1.msra.mxu0 0.0
        %1934 = vmatprep.subr.mxu0 0.0
        %1935 = vmatpush1.msra.mxu0 0.0
        %1936 = vmatprep.subr.mxu0 0.0
        %1937 = vmatpush1.msra.mxu0 0.0
        %1938 = vmatprep.subr.mxu0 0.0
        %1939 = vmatpush1.msra.mxu0 0.0
        %1940 = vmatprep.subr.mxu0 0.0
        %1941 = vmatpush1.msra.mxu0 0.0
        %1942 = vmatprep.subr.mxu0 0.0
        %1943 = vmatpush1.msra.mxu0 0.0
        %1944 = vmatprep.subr.mxu0 0.0
        %1945 = vmatpush1.msra.mxu0 0.0
        %1946 = vmatprep.subr.mxu0 0.0
        %1947 = vmatpush1.msra.mxu0 0.0
        %1948 = vmatprep.subr.mxu0 0.0
        %1949 = vmatpush1.msra.mxu0 0.0
        %1950 = vmatprep.subr.mxu0 0.0
        %1951 = vmatpush1.msra.mxu0 0.0
        %1952 = vmatprep.subr.mxu0 0.0
        %1953 = vmatpush1.msra.mxu0 0.0
        %1954 = vmatprep.subr.mxu0 0.0
        %1955 = vmatpush1.msra.mxu0 0.0
        %1956 = vmatprep.subr.mxu0 0.0
        %1957 = vmatpush1.msra.mxu0 0.0
        %1958 = vmatprep.subr.mxu0 0.0
        %1959 = vmatpush1.msra.mxu0 0.0
        %1960 = vmatprep.subr.mxu0 0.0
        %1961 = vmatpush1.msra.mxu0 0.0
        %1962 = vmatprep.subr.mxu0 0.0
        %1963 = vmatpush1.msra.mxu0 0.0
        %1964 = vmatprep.subr.mxu0 0.0
        %1965 = vmatpush1.msra.mxu0 0.0
        %1966 = vmatprep.subr.mxu0 0.0
        %1967 = vmatpush1.msra.mxu0 0.0
        %1968 = vmatprep.subr.mxu0 0.0
        %1969 = vmatpush1.msra.mxu0 0.0
        %1970 = vmatprep.subr.mxu0 0.0
        %1971 = vmatpush1.msra.mxu0 0.0
        %1972 = vmatprep.subr.mxu0 0.0
        %1973 = vmatpush1.msra.mxu0 0.0
        %1974 = vmatprep.subr.mxu0 0.0
        %1975 = vmatpush1.msra.mxu0 0.0
        %1976 = vmatprep.subr.mxu0 0.0
        %1977 = vmatpush1.msra.mxu0 0.0
        %1978 = vmatprep.mubr.f32.mxu0 0.0
        %1979 = vmatmul.mubr.f32.gmra.mrb[0].mxu0 %v1909
        %v1980 = vpop.f32.mrb[0].mxu0
        %v1981 = vadd.f32 %v1906, %v1980
        %v1982 = vpop.f32.mrb[0].mxu0
        %1983 = vmatprep.mubr.f32.mxu0 0.0
        %1984 = vmatmul.mubr.f32.gmra.mrb[0].mxu0 %v1912
        %v1985 = vpop.f32.mrb[0].mxu0
        %v1986 = vadd.f32 %v1906, %v1985
        %v1987 = vpop.f32.mrb[0].mxu0
        %1988 = vdwg.mxu0
        %v1990 = vlaneseq
        %v1991 = vshrl.u32 %v1990, 7
        %v1992 = vsub.s32 0, %v1991
        %v1993 = vrot.slane %v418, %v1992
        %v1995 = vmul.f32 %v1993, %v1705
        %v1996 = vmul.f32 %v1993, %v1706
        %v1997 = vadd.f32 %v1981, %v1995
        %v1998 = vadd.f32 %v1986, %v1996
        %1999 = vst.msk [vmem:[%s385] sm:$0xff] %vm421, %v1997
        %2000 = vst.msk [vmem:[%s385 + $0x8] sm:$0xff] %vm421, %v1998
        %s2001 = scalar_lea.vmem %s391, 16
        %v2002 = vld [vmem:[%s2001] sm:$0xff]
        %v2003 = vld [vmem:[%s2001 + $0x8] sm:$0xff]
        %v2004 = vsel %vm421, %v2002, 0.0
        %2005 = vadd.xlane.f32.xlu0 %v2004
        %v2006 = vpop.xlane.xlu0 %2005
        %v2007 = vsel %vm421, %v2003, 0.0
        %2008 = vadd.xlane.f32.xlu0 %v2007
        %v2009 = vpop.xlane.xlu0 %2008
        %v2010 = vmul.f32 %v2006, %v428
        %v2011 = vmul.f32 %v2009, %v428
        %v2012 = vsub.f32 %v2002, %v2010
        %v2013 = vsub.f32 %v2003, %v2011
        %v2014 = vmul.f32 %v2012, %v2012
        %v2015 = vmul.f32 %v2013, %v2013
        %v2016 = vsel %vm421, %v2014, 0.0
        %2017 = vadd.xlane.f32.xlu0 %v2016
        %v2018 = vpop.xlane.xlu0 %2017
        %v2019 = vsel %vm421, %v2015, 0.0
        %2020 = vadd.xlane.f32.xlu0 %v2019
        %v2021 = vpop.xlane.xlu0 %2020
        %v2022 = vmul.f32 %v2018, %v428
        %v2023 = vmul.f32 %v2021, %v428
        %v2024 = vadd.f32 %v2022, 1e-05
        %v2025 = vadd.f32 %v2023, 1e-05
        %v2026 = vrsqrt.pop %v2024
        %v2027 = vrsqrt.pop %v2025
        %v2028 = vmul.f32 %v2012, %v2026
        %v2029 = vmul.f32 %v2013, %v2027
        %v2031 = vsel %vm421, %v2028, 0
        %v2034 = vsel %vm421, %v2029, 0
        %2036 = vmatprep.subr.mxu0 0.0
        %2037 = vmatpush1.msra.mxu0 %v394
        %2038 = vmatprep.subr.mxu0 0.0
        %2039 = vmatpush1.msra.mxu0 %v395
        %2040 = vmatprep.subr.mxu0 0.0
        %2041 = vmatpush1.msra.mxu0 %v396
        %2042 = vmatprep.subr.mxu0 0.0
        %2043 = vmatpush1.msra.mxu0 %v397
        %2044 = vmatprep.subr.mxu0 0.0
        %2045 = vmatpush1.msra.mxu0 0.0
        %2046 = vmatprep.subr.mxu0 0.0
        %2047 = vmatpush1.msra.mxu0 0.0
        %2048 = vmatprep.subr.mxu0 0.0
        %2049 = vmatpush1.msra.mxu0 0.0
        %2050 = vmatprep.subr.mxu0 0.0
        %2051 = vmatpush1.msra.mxu0 0.0
        %2052 = vmatprep.subr.mxu0 0.0
        %2053 = vmatpush1.msra.mxu0 0.0
        %2054 = vmatprep.subr.mxu0 0.0
        %2055 = vmatpush1.msra.mxu0 0.0
        %2056 = vmatprep.subr.mxu0 0.0
        %2057 = vmatpush1.msra.mxu0 0.0
        %2058 = vmatprep.subr.mxu0 0.0
        %2059 = vmatpush1.msra.mxu0 0.0
        %2060 = vmatprep.subr.mxu0 0.0
        %2061 = vmatpush1.msra.mxu0 0.0
        %2062 = vmatprep.subr.mxu0 0.0
        %2063 = vmatpush1.msra.mxu0 0.0
        %2064 = vmatprep.subr.mxu0 0.0
        %2065 = vmatpush1.msra.mxu0 0.0
        %2066 = vmatprep.subr.mxu0 0.0
        %2067 = vmatpush1.msra.mxu0 0.0
        %2068 = vmatprep.subr.mxu0 0.0
        %2069 = vmatpush1.msra.mxu0 0.0
        %2070 = vmatprep.subr.mxu0 0.0
        %2071 = vmatpush1.msra.mxu0 0.0
        %2072 = vmatprep.subr.mxu0 0.0
        %2073 = vmatpush1.msra.mxu0 0.0
        %2074 = vmatprep.subr.mxu0 0.0
        %2075 = vmatpush1.msra.mxu0 0.0
        %2076 = vmatprep.subr.mxu0 0.0
        %2077 = vmatpush1.msra.mxu0 0.0
        %2078 = vmatprep.subr.mxu0 0.0
        %2079 = vmatpush1.msra.mxu0 0.0
        %2080 = vmatprep.subr.mxu0 0.0
        %2081 = vmatpush1.msra.mxu0 0.0
        %2082 = vmatprep.subr.mxu0 0.0
        %2083 = vmatpush1.msra.mxu0 0.0
        %2084 = vmatprep.subr.mxu0 0.0
        %2085 = vmatpush1.msra.mxu0 0.0
        %2086 = vmatprep.subr.mxu0 0.0
        %2087 = vmatpush1.msra.mxu0 0.0
        %2088 = vmatprep.subr.mxu0 0.0
        %2089 = vmatpush1.msra.mxu0 0.0
        %2090 = vmatprep.subr.mxu0 0.0
        %2091 = vmatpush1.msra.mxu0 0.0
        %2092 = vmatprep.subr.mxu0 0.0
        %2093 = vmatpush1.msra.mxu0 0.0
        %2094 = vmatprep.subr.mxu0 0.0
        %2095 = vmatpush1.msra.mxu0 0.0
        %2096 = vmatprep.subr.mxu0 0.0
        %2097 = vmatpush1.msra.mxu0 0.0
        %2098 = vmatprep.subr.mxu0 0.0
        %2099 = vmatpush1.msra.mxu0 0.0
        %2100 = vmatprep.mubr.f32.mxu0 0.0
        %2101 = vmatmul.mubr.f32.gmra.mrb[0].mxu0 %v2031
        %v2102 = vpop.f32.mrb[0].mxu0
        %v2103 = vadd.f32 %v453, %v2102
        %v2104 = vpop.f32.mrb[0].mxu0
        %2105 = vmatprep.mubr.f32.mxu0 0.0
        %2106 = vmatmul.mubr.f32.gmra.mrb[0].mxu0 %v2034
        %v2107 = vpop.f32.mrb[0].mxu0
        %v2108 = vadd.f32 %v453, %v2107
        %v2109 = vpop.f32.mrb[0].mxu0
        %2110 = vdwg.mxu0
        %v2111 = vmul.f32 %v2103, 0.35355338
        %v2112 = vmul.f32 %v2108, 0.35355338
        %2115 = vrot.lane.b32.xlu0 %v2103, 96
        %v2116 = vpop.permute.xlu0 %2115
        %2117 = vrot.lane.b32.xlu0 %v2108, 96
        %v2118 = vpop.permute.xlu0 %2117
        %v2120 = vsel %vm551, %v2111, 0
        %v2123 = vsel %vm551, %v2112, 0
        %v2125 = vsel %vm551, %v2116, 0
        %v2127 = vsel %vm551, %v2118, 0
        %2129 = vmatprep.subr.mxu0 0.0
        %2130 = vmatpush1.xpose.msra.mxu0 %v2125
        %2131 = vmatprep.subr.mxu0 0.0
        %2132 = vmatpush1.xpose.msra.mxu0 %v2127
        %2133 = vmatprep.subr.mxu0 0.0
        %2134 = vmatpush1.xpose.msra.mxu0 0.0
        %2135 = vmatprep.subr.mxu0 0.0
        %2136 = vmatpush1.xpose.msra.mxu0 0.0
        %2137 = vmatprep.subr.mxu0 0.0
        %2138 = vmatpush1.xpose.msra.mxu0 0.0
        %2139 = vmatprep.subr.mxu0 0.0
        %2140 = vmatpush1.xpose.msra.mxu0 0.0
        %2141 = vmatprep.subr.mxu0 0.0
        %2142 = vmatpush1.xpose.msra.mxu0 0.0
        %2143 = vmatprep.subr.mxu0 0.0
        %2144 = vmatpush1.xpose.msra.mxu0 0.0
        %2145 = vmatprep.subr.mxu0 0.0
        %2146 = vmatpush1.xpose.msra.mxu0 0.0
        %2147 = vmatprep.subr.mxu0 0.0
        %2148 = vmatpush1.xpose.msra.mxu0 0.0
        %2149 = vmatprep.subr.mxu0 0.0
        %2150 = vmatpush1.xpose.msra.mxu0 0.0
        %2151 = vmatprep.subr.mxu0 0.0
        %2152 = vmatpush1.xpose.msra.mxu0 0.0
        %2153 = vmatprep.subr.mxu0 0.0
        %2154 = vmatpush1.xpose.msra.mxu0 0.0
        %2155 = vmatprep.subr.mxu0 0.0
        %2156 = vmatpush1.xpose.msra.mxu0 0.0
        %2157 = vmatprep.subr.mxu0 0.0
        %2158 = vmatpush1.xpose.msra.mxu0 0.0
        %2159 = vmatprep.subr.mxu0 0.0
        %2160 = vmatpush1.xpose.msra.mxu0 0.0
        %2161 = vmatprep.subr.mxu0 0.0
        %2162 = vmatpush1.xpose.msra.mxu0 0.0
        %2163 = vmatprep.subr.mxu0 0.0
        %2164 = vmatpush1.xpose.msra.mxu0 0.0
        %2165 = vmatprep.subr.mxu0 0.0
        %2166 = vmatpush1.xpose.msra.mxu0 0.0
        %2167 = vmatprep.subr.mxu0 0.0
        %2168 = vmatpush1.xpose.msra.mxu0 0.0
        %2169 = vmatprep.subr.mxu0 0.0
        %2170 = vmatpush1.xpose.msra.mxu0 0.0
        %2171 = vmatprep.subr.mxu0 0.0
        %2172 = vmatpush1.xpose.msra.mxu0 0.0
        %2173 = vmatprep.subr.mxu0 0.0
        %2174 = vmatpush1.xpose.msra.mxu0 0.0
        %2175 = vmatprep.subr.mxu0 0.0
        %2176 = vmatpush1.xpose.msra.mxu0 0.0
        %2177 = vmatprep.subr.mxu0 0.0
        %2178 = vmatpush1.xpose.msra.mxu0 0.0
        %2179 = vmatprep.subr.mxu0 0.0
        %2180 = vmatpush1.xpose.msra.mxu0 0.0
        %2181 = vmatprep.subr.mxu0 0.0
        %2182 = vmatpush1.xpose.msra.mxu0 0.0
        %2183 = vmatprep.subr.mxu0 0.0
        %2184 = vmatpush1.xpose.msra.mxu0 0.0
        %2185 = vmatprep.subr.mxu0 0.0
        %2186 = vmatpush1.xpose.msra.mxu0 0.0
        %2187 = vmatprep.subr.mxu0 0.0
        %2188 = vmatpush1.xpose.msra.mxu0 0.0
        %2189 = vmatprep.subr.mxu0 0.0
        %2190 = vmatpush1.xpose.msra.mxu0 0.0
        %2191 = vmatprep.subr.mxu0 0.0
        %2192 = vmatpush1.xpose.msra.mxu0 0.0
        %2193 = vmatprep.mubr.f32.mxu0 0.0
        %2194 = vmatmul.mubr.f32.gmra.mrb[0].mxu0 %v2120
        %v2195 = vpop.f32.mrb[0].mxu0
        %v2196 = vadd.f32 0.0, %v2195
        %v2197 = vpop.f32.mrb[0].mxu0
        %2198 = vmatprep.mubr.f32.mxu0 0.0
        %2199 = vmatmul.mubr.f32.gmra.mrb[0].mxu0 %v2123
        %v2200 = vpop.f32.mrb[0].mxu0
        %v2201 = vadd.f32 0.0, %v2200
        %v2202 = vpop.f32.mrb[0].mxu0
        %2203 = vdwg.mxu0
        %v2204 = vsel %vm637, %v2196, -inf
        %2205 = vmax.xlane.f32.xlu0 %v2204
        %v2206 = vpop.xlane.xlu0 %2205
        %v2207 = vsel %vm637, %v2201, -inf
        %2208 = vmax.xlane.f32.xlu0 %v2207
        %v2209 = vpop.xlane.xlu0 %2208
        %v2210 = vsub.f32 %v2196, %v2206
        %v2211 = vsub.f32 %v2201, %v2209
        %v2212 = vmul.f32 %v2210, 1.442695
        %v2213 = vpow.pop %v2212
        %v2214 = vmul.f32 %v2211, 1.442695
        %v2215 = vpow.pop %v2214
        %v2216 = vsel %vm637, %v2213, 0.0
        %2217 = vadd.xlane.f32.xlu0 %v2216
        %v2218 = vpop.xlane.xlu0 %2217
        %v2219 = vsel %vm637, %v2215, 0.0
        %2220 = vadd.xlane.f32.xlu0 %v2219
        %v2221 = vpop.xlane.xlu0 %2220
        %v2222 = vrcp.pop %v2218
        %v2223 = vmul.f32 %v2213, %v2222
        %v2224 = vrcp.pop %v2221
        %v2225 = vmul.f32 %v2215, %v2224
        %2226 = vrot.lane.b32.xlu0 %v2103, 64
        %v2227 = vpop.permute.xlu0 %2226
        %2228 = vrot.lane.b32.xlu0 %v2108, 64
        %v2229 = vpop.permute.xlu0 %2228
        %v2233 = vsel %vm637, %v2223, 0
        %v2236 = vsel %vm637, %v2225, 0
        %2238 = vmatprep.subr.mxu0 0.0
        %2239 = vmatpush1.msra.mxu0 %v2227
        %2240 = vmatprep.subr.mxu0 0.0
        %2241 = vmatpush1.msra.mxu0 %v2229
        %2242 = vmatprep.subr.mxu0 0.0
        %2243 = vmatpush1.msra.mxu0 0.0
        %2244 = vmatprep.subr.mxu0 0.0
        %2245 = vmatpush1.msra.mxu0 0.0
        %2246 = vmatprep.subr.mxu0 0.0
        %2247 = vmatpush1.msra.mxu0 0.0
        %2248 = vmatprep.subr.mxu0 0.0
        %2249 = vmatpush1.msra.mxu0 0.0
        %2250 = vmatprep.subr.mxu0 0.0
        %2251 = vmatpush1.msra.mxu0 0.0
        %2252 = vmatprep.subr.mxu0 0.0
        %2253 = vmatpush1.msra.mxu0 0.0
        %2254 = vmatprep.subr.mxu0 0.0
        %2255 = vmatpush1.msra.mxu0 0.0
        %2256 = vmatprep.subr.mxu0 0.0
        %2257 = vmatpush1.msra.mxu0 0.0
        %2258 = vmatprep.subr.mxu0 0.0
        %2259 = vmatpush1.msra.mxu0 0.0
        %2260 = vmatprep.subr.mxu0 0.0
        %2261 = vmatpush1.msra.mxu0 0.0
        %2262 = vmatprep.subr.mxu0 0.0
        %2263 = vmatpush1.msra.mxu0 0.0
        %2264 = vmatprep.subr.mxu0 0.0
        %2265 = vmatpush1.msra.mxu0 0.0
        %2266 = vmatprep.subr.mxu0 0.0
        %2267 = vmatpush1.msra.mxu0 0.0
        %2268 = vmatprep.subr.mxu0 0.0
        %2269 = vmatpush1.msra.mxu0 0.0
        %2270 = vmatprep.subr.mxu0 0.0
        %2271 = vmatpush1.msra.mxu0 0.0
        %2272 = vmatprep.subr.mxu0 0.0
        %2273 = vmatpush1.msra.mxu0 0.0
        %2274 = vmatprep.subr.mxu0 0.0
        %2275 = vmatpush1.msra.mxu0 0.0
        %2276 = vmatprep.subr.mxu0 0.0
        %2277 = vmatpush1.msra.mxu0 0.0
        %2278 = vmatprep.subr.mxu0 0.0
        %2279 = vmatpush1.msra.mxu0 0.0
        %2280 = vmatprep.subr.mxu0 0.0
        %2281 = vmatpush1.msra.mxu0 0.0
        %2282 = vmatprep.subr.mxu0 0.0
        %2283 = vmatpush1.msra.mxu0 0.0
        %2284 = vmatprep.subr.mxu0 0.0
        %2285 = vmatpush1.msra.mxu0 0.0
        %2286 = vmatprep.subr.mxu0 0.0
        %2287 = vmatpush1.msra.mxu0 0.0
        %2288 = vmatprep.subr.mxu0 0.0
        %2289 = vmatpush1.msra.mxu0 0.0
        %2290 = vmatprep.subr.mxu0 0.0
        %2291 = vmatpush1.msra.mxu0 0.0
        %2292 = vmatprep.subr.mxu0 0.0
        %2293 = vmatpush1.msra.mxu0 0.0
        %2294 = vmatprep.subr.mxu0 0.0
        %2295 = vmatpush1.msra.mxu0 0.0
        %2296 = vmatprep.subr.mxu0 0.0
        %2297 = vmatpush1.msra.mxu0 0.0
        %2298 = vmatprep.subr.mxu0 0.0
        %2299 = vmatpush1.msra.mxu0 0.0
        %2300 = vmatprep.subr.mxu0 0.0
        %2301 = vmatpush1.msra.mxu0 0.0
        %2302 = vmatprep.mubr.f32.mxu0 0.0
        %2303 = vmatmul.mubr.f32.gmra.mrb[0].mxu0 %v2233
        %v2304 = vpop.f32.mrb[0].mxu0
        %v2305 = vadd.f32 0.0, %v2304
        %v2306 = vpop.f32.mrb[0].mxu0
        %2307 = vmatprep.mubr.f32.mxu0 0.0
        %2308 = vmatmul.mubr.f32.gmra.mrb[0].mxu0 %v2236
        %v2309 = vpop.f32.mrb[0].mxu0
        %v2310 = vadd.f32 0.0, %v2309
        %v2311 = vpop.f32.mrb[0].mxu0
        %2312 = vdwg.mxu0
        %v2314 = vsel %vm551, %v2305, 0
        %v2317 = vsel %vm551, %v2310, 0
        %2319 = vmatprep.subr.mxu0 0.0
        %2320 = vmatpush1.msra.mxu0 %v399
        %2321 = vmatprep.subr.mxu0 0.0
        %2322 = vmatpush1.msra.mxu0 0.0
        %2323 = vmatprep.subr.mxu0 0.0
        %2324 = vmatpush1.msra.mxu0 0.0
        %2325 = vmatprep.subr.mxu0 0.0
        %2326 = vmatpush1.msra.mxu0 0.0
        %2327 = vmatprep.subr.mxu0 0.0
        %2328 = vmatpush1.msra.mxu0 0.0
        %2329 = vmatprep.subr.mxu0 0.0
        %2330 = vmatpush1.msra.mxu0 0.0
        %2331 = vmatprep.subr.mxu0 0.0
        %2332 = vmatpush1.msra.mxu0 0.0
        %2333 = vmatprep.subr.mxu0 0.0
        %2334 = vmatpush1.msra.mxu0 0.0
        %2335 = vmatprep.subr.mxu0 0.0
        %2336 = vmatpush1.msra.mxu0 0.0
        %2337 = vmatprep.subr.mxu0 0.0
        %2338 = vmatpush1.msra.mxu0 0.0
        %2339 = vmatprep.subr.mxu0 0.0
        %2340 = vmatpush1.msra.mxu0 0.0
        %2341 = vmatprep.subr.mxu0 0.0
        %2342 = vmatpush1.msra.mxu0 0.0
        %2343 = vmatprep.subr.mxu0 0.0
        %2344 = vmatpush1.msra.mxu0 0.0
        %2345 = vmatprep.subr.mxu0 0.0
        %2346 = vmatpush1.msra.mxu0 0.0
        %2347 = vmatprep.subr.mxu0 0.0
        %2348 = vmatpush1.msra.mxu0 0.0
        %2349 = vmatprep.subr.mxu0 0.0
        %2350 = vmatpush1.msra.mxu0 0.0
        %2351 = vmatprep.subr.mxu0 0.0
        %2352 = vmatpush1.msra.mxu0 0.0
        %2353 = vmatprep.subr.mxu0 0.0
        %2354 = vmatpush1.msra.mxu0 0.0
        %2355 = vmatprep.subr.mxu0 0.0
        %2356 = vmatpush1.msra.mxu0 0.0
        %2357 = vmatprep.subr.mxu0 0.0
        %2358 = vmatpush1.msra.mxu0 0.0
        %2359 = vmatprep.subr.mxu0 0.0
        %2360 = vmatpush1.msra.mxu0 0.0
        %2361 = vmatprep.subr.mxu0 0.0
        %2362 = vmatpush1.msra.mxu0 0.0
        %2363 = vmatprep.subr.mxu0 0.0
        %2364 = vmatpush1.msra.mxu0 0.0
        %2365 = vmatprep.subr.mxu0 0.0
        %2366 = vmatpush1.msra.mxu0 0.0
        %2367 = vmatprep.subr.mxu0 0.0
        %2368 = vmatpush1.msra.mxu0 0.0
        %2369 = vmatprep.subr.mxu0 0.0
        %2370 = vmatpush1.msra.mxu0 0.0
        %2371 = vmatprep.subr.mxu0 0.0
        %2372 = vmatpush1.msra.mxu0 0.0
        %2373 = vmatprep.subr.mxu0 0.0
        %2374 = vmatpush1.msra.mxu0 0.0
        %2375 = vmatprep.subr.mxu0 0.0
        %2376 = vmatpush1.msra.mxu0 0.0
        %2377 = vmatprep.subr.mxu0 0.0
        %2378 = vmatpush1.msra.mxu0 0.0
        %2379 = vmatprep.subr.mxu0 0.0
        %2380 = vmatpush1.msra.mxu0 0.0
        %2381 = vmatprep.subr.mxu0 0.0
        %2382 = vmatpush1.msra.mxu0 0.0
        %2383 = vmatprep.mubr.f32.mxu0 0.0
        %2384 = vmatmul.mubr.f32.gmra.mrb[0].mxu0 %v2314
        %v2385 = vpop.f32.mrb[0].mxu0
        %v2386 = vadd.f32 0.0, %v2385
        %v2387 = vpop.f32.mrb[0].mxu0
        %2388 = vmatprep.mubr.f32.mxu0 0.0
        %2389 = vmatmul.mubr.f32.gmra.mrb[0].mxu0 %v2317
        %v2390 = vpop.f32.mrb[0].mxu0
        %v2391 = vadd.f32 0.0, %v2390
        %v2392 = vpop.f32.mrb[0].mxu0
        %2393 = vdwg.mxu0
        %v2394 = vadd.f32 %v542, %v2386
        %v2395 = vadd.f32 %v542, %v2391
        %2396 = vrot.lane.b32.xlu0 %v2111, 120
        %v2397 = vpop.permute.xlu0 %2396
        %2398 = vrot.lane.b32.xlu0 %v2112, 120
        %v2399 = vpop.permute.xlu0 %2398
        %2400 = vrot.lane.b32.xlu0 %v2103, 88
        %v2401 = vpop.permute.xlu0 %2400
        %2402 = vrot.lane.b32.xlu0 %v2108, 88
        %v2403 = vpop.permute.xlu0 %2402
        %v2404 = vsel %vm551, %v2397, 0
        %v2406 = vsel %vm551, %v2399, 0
        %v2408 = vsel %vm551, %v2401, 0
        %v2410 = vsel %vm551, %v2403, 0
        %2412 = vmatprep.subr.mxu0 0.0
        %2413 = vmatpush1.xpose.msra.mxu0 %v2408
        %2414 = vmatprep.subr.mxu0 0.0
        %2415 = vmatpush1.xpose.msra.mxu0 %v2410
        %2416 = vmatprep.subr.mxu0 0.0
        %2417 = vmatpush1.xpose.msra.mxu0 0.0
        %2418 = vmatprep.subr.mxu0 0.0
        %2419 = vmatpush1.xpose.msra.mxu0 0.0
        %2420 = vmatprep.subr.mxu0 0.0
        %2421 = vmatpush1.xpose.msra.mxu0 0.0
        %2422 = vmatprep.subr.mxu0 0.0
        %2423 = vmatpush1.xpose.msra.mxu0 0.0
        %2424 = vmatprep.subr.mxu0 0.0
        %2425 = vmatpush1.xpose.msra.mxu0 0.0
        %2426 = vmatprep.subr.mxu0 0.0
        %2427 = vmatpush1.xpose.msra.mxu0 0.0
        %2428 = vmatprep.subr.mxu0 0.0
        %2429 = vmatpush1.xpose.msra.mxu0 0.0
        %2430 = vmatprep.subr.mxu0 0.0
        %2431 = vmatpush1.xpose.msra.mxu0 0.0
        %2432 = vmatprep.subr.mxu0 0.0
        %2433 = vmatpush1.xpose.msra.mxu0 0.0
        %2434 = vmatprep.subr.mxu0 0.0
        %2435 = vmatpush1.xpose.msra.mxu0 0.0
        %2436 = vmatprep.subr.mxu0 0.0
        %2437 = vmatpush1.xpose.msra.mxu0 0.0
        %2438 = vmatprep.subr.mxu0 0.0
        %2439 = vmatpush1.xpose.msra.mxu0 0.0
        %2440 = vmatprep.subr.mxu0 0.0
        %2441 = vmatpush1.xpose.msra.mxu0 0.0
        %2442 = vmatprep.subr.mxu0 0.0
        %2443 = vmatpush1.xpose.msra.mxu0 0.0
        %2444 = vmatprep.subr.mxu0 0.0
        %2445 = vmatpush1.xpose.msra.mxu0 0.0
        %2446 = vmatprep.subr.mxu0 0.0
        %2447 = vmatpush1.xpose.msra.mxu0 0.0
        %2448 = vmatprep.subr.mxu0 0.0
        %2449 = vmatpush1.xpose.msra.mxu0 0.0
        %2450 = vmatprep.subr.mxu0 0.0
        %2451 = vmatpush1.xpose.msra.mxu0 0.0
        %2452 = vmatprep.subr.mxu0 0.0
        %2453 = vmatpush1.xpose.msra.mxu0 0.0
        %2454 = vmatprep.subr.mxu0 0.0
        %2455 = vmatpush1.xpose.msra.mxu0 0.0
        %2456 = vmatprep.subr.mxu0 0.0
        %2457 = vmatpush1.xpose.msra.mxu0 0.0
        %2458 = vmatprep.subr.mxu0 0.0
        %2459 = vmatpush1.xpose.msra.mxu0 0.0
        %2460 = vmatprep.subr.mxu0 0.0
        %2461 = vmatpush1.xpose.msra.mxu0 0.0
        %2462 = vmatprep.subr.mxu0 0.0
        %2463 = vmatpush1.xpose.msra.mxu0 0.0
        %2464 = vmatprep.subr.mxu0 0.0
        %2465 = vmatpush1.xpose.msra.mxu0 0.0
        %2466 = vmatprep.subr.mxu0 0.0
        %2467 = vmatpush1.xpose.msra.mxu0 0.0
        %2468 = vmatprep.subr.mxu0 0.0
        %2469 = vmatpush1.xpose.msra.mxu0 0.0
        %2470 = vmatprep.subr.mxu0 0.0
        %2471 = vmatpush1.xpose.msra.mxu0 0.0
        %2472 = vmatprep.subr.mxu0 0.0
        %2473 = vmatpush1.xpose.msra.mxu0 0.0
        %2474 = vmatprep.subr.mxu0 0.0
        %2475 = vmatpush1.xpose.msra.mxu0 0.0
        %2476 = vmatprep.mubr.f32.mxu0 0.0
        %2477 = vmatmul.mubr.f32.gmra.mrb[0].mxu0 %v2404
        %v2478 = vpop.f32.mrb[0].mxu0
        %v2479 = vadd.f32 0.0, %v2478
        %v2480 = vpop.f32.mrb[0].mxu0
        %2481 = vmatprep.mubr.f32.mxu0 0.0
        %2482 = vmatmul.mubr.f32.gmra.mrb[0].mxu0 %v2406
        %v2483 = vpop.f32.mrb[0].mxu0
        %v2484 = vadd.f32 0.0, %v2483
        %v2485 = vpop.f32.mrb[0].mxu0
        %2486 = vdwg.mxu0
        %v2487 = vsel %vm637, %v2479, -inf
        %2488 = vmax.xlane.f32.xlu0 %v2487
        %v2489 = vpop.xlane.xlu0 %2488
        %v2490 = vsel %vm637, %v2484, -inf
        %2491 = vmax.xlane.f32.xlu0 %v2490
        %v2492 = vpop.xlane.xlu0 %2491
        %v2493 = vsub.f32 %v2479, %v2489
        %v2494 = vsub.f32 %v2484, %v2492
        %v2495 = vmul.f32 %v2493, 1.442695
        %v2496 = vpow.pop %v2495
        %v2497 = vmul.f32 %v2494, 1.442695
        %v2498 = vpow.pop %v2497
        %v2499 = vsel %vm637, %v2496, 0.0
        %2500 = vadd.xlane.f32.xlu0 %v2499
        %v2501 = vpop.xlane.xlu0 %2500
        %v2502 = vsel %vm637, %v2498, 0.0
        %2503 = vadd.xlane.f32.xlu0 %v2502
        %v2504 = vpop.xlane.xlu0 %2503
        %v2505 = vrcp.pop %v2501
        %v2506 = vmul.f32 %v2496, %v2505
        %v2507 = vrcp.pop %v2504
        %v2508 = vmul.f32 %v2498, %v2507
        %2509 = vrot.lane.b32.xlu0 %v2103, 56
        %v2510 = vpop.permute.xlu0 %2509
        %2511 = vrot.lane.b32.xlu0 %v2108, 56
        %v2512 = vpop.permute.xlu0 %2511
        %v2516 = vsel %vm637, %v2506, 0
        %v2519 = vsel %vm637, %v2508, 0
        %2521 = vmatprep.subr.mxu0 0.0
        %2522 = vmatpush1.msra.mxu0 %v2510
        %2523 = vmatprep.subr.mxu0 0.0
        %2524 = vmatpush1.msra.mxu0 %v2512
        %2525 = vmatprep.subr.mxu0 0.0
        %2526 = vmatpush1.msra.mxu0 0.0
        %2527 = vmatprep.subr.mxu0 0.0
        %2528 = vmatpush1.msra.mxu0 0.0
        %2529 = vmatprep.subr.mxu0 0.0
        %2530 = vmatpush1.msra.mxu0 0.0
        %2531 = vmatprep.subr.mxu0 0.0
        %2532 = vmatpush1.msra.mxu0 0.0
        %2533 = vmatprep.subr.mxu0 0.0
        %2534 = vmatpush1.msra.mxu0 0.0
        %2535 = vmatprep.subr.mxu0 0.0
        %2536 = vmatpush1.msra.mxu0 0.0
        %2537 = vmatprep.subr.mxu0 0.0
        %2538 = vmatpush1.msra.mxu0 0.0
        %2539 = vmatprep.subr.mxu0 0.0
        %2540 = vmatpush1.msra.mxu0 0.0
        %2541 = vmatprep.subr.mxu0 0.0
        %2542 = vmatpush1.msra.mxu0 0.0
        %2543 = vmatprep.subr.mxu0 0.0
        %2544 = vmatpush1.msra.mxu0 0.0
        %2545 = vmatprep.subr.mxu0 0.0
        %2546 = vmatpush1.msra.mxu0 0.0
        %2547 = vmatprep.subr.mxu0 0.0
        %2548 = vmatpush1.msra.mxu0 0.0
        %2549 = vmatprep.subr.mxu0 0.0
        %2550 = vmatpush1.msra.mxu0 0.0
        %2551 = vmatprep.subr.mxu0 0.0
        %2552 = vmatpush1.msra.mxu0 0.0
        %2553 = vmatprep.subr.mxu0 0.0
        %2554 = vmatpush1.msra.mxu0 0.0
        %2555 = vmatprep.subr.mxu0 0.0
        %2556 = vmatpush1.msra.mxu0 0.0
        %2557 = vmatprep.subr.mxu0 0.0
        %2558 = vmatpush1.msra.mxu0 0.0
        %2559 = vmatprep.subr.mxu0 0.0
        %2560 = vmatpush1.msra.mxu0 0.0
        %2561 = vmatprep.subr.mxu0 0.0
        %2562 = vmatpush1.msra.mxu0 0.0
        %2563 = vmatprep.subr.mxu0 0.0
        %2564 = vmatpush1.msra.mxu0 0.0
        %2565 = vmatprep.subr.mxu0 0.0
        %2566 = vmatpush1.msra.mxu0 0.0
        %2567 = vmatprep.subr.mxu0 0.0
        %2568 = vmatpush1.msra.mxu0 0.0
        %2569 = vmatprep.subr.mxu0 0.0
        %2570 = vmatpush1.msra.mxu0 0.0
        %2571 = vmatprep.subr.mxu0 0.0
        %2572 = vmatpush1.msra.mxu0 0.0
        %2573 = vmatprep.subr.mxu0 0.0
        %2574 = vmatpush1.msra.mxu0 0.0
        %2575 = vmatprep.subr.mxu0 0.0
        %2576 = vmatpush1.msra.mxu0 0.0
        %2577 = vmatprep.subr.mxu0 0.0
        %2578 = vmatpush1.msra.mxu0 0.0
        %2579 = vmatprep.subr.mxu0 0.0
        %2580 = vmatpush1.msra.mxu0 0.0
        %2581 = vmatprep.subr.mxu0 0.0
        %2582 = vmatpush1.msra.mxu0 0.0
        %2583 = vmatprep.subr.mxu0 0.0
        %2584 = vmatpush1.msra.mxu0 0.0
        %2585 = vmatprep.mubr.f32.mxu0 0.0
        %2586 = vmatmul.mubr.f32.gmra.mrb[0].mxu0 %v2516
        %v2587 = vpop.f32.mrb[0].mxu0
        %v2588 = vadd.f32 0.0, %v2587
        %v2589 = vpop.f32.mrb[0].mxu0
        %2590 = vmatprep.mubr.f32.mxu0 0.0
        %2591 = vmatmul.mubr.f32.gmra.mrb[0].mxu0 %v2519
        %v2592 = vpop.f32.mrb[0].mxu0
        %v2593 = vadd.f32 0.0, %v2592
        %v2594 = vpop.f32.mrb[0].mxu0
        %2595 = vdwg.mxu0
        %v2597 = vsel %vm551, %v2588, 0
        %v2600 = vsel %vm551, %v2593, 0
        %2602 = vmatprep.subr.mxu0 0.0
        %2603 = vmatpush1.msra.mxu0 %v400
        %2604 = vmatprep.subr.mxu0 0.0
        %2605 = vmatpush1.msra.mxu0 0.0
        %2606 = vmatprep.subr.mxu0 0.0
        %2607 = vmatpush1.msra.mxu0 0.0
        %2608 = vmatprep.subr.mxu0 0.0
        %2609 = vmatpush1.msra.mxu0 0.0
        %2610 = vmatprep.subr.mxu0 0.0
        %2611 = vmatpush1.msra.mxu0 0.0
        %2612 = vmatprep.subr.mxu0 0.0
        %2613 = vmatpush1.msra.mxu0 0.0
        %2614 = vmatprep.subr.mxu0 0.0
        %2615 = vmatpush1.msra.mxu0 0.0
        %2616 = vmatprep.subr.mxu0 0.0
        %2617 = vmatpush1.msra.mxu0 0.0
        %2618 = vmatprep.subr.mxu0 0.0
        %2619 = vmatpush1.msra.mxu0 0.0
        %2620 = vmatprep.subr.mxu0 0.0
        %2621 = vmatpush1.msra.mxu0 0.0
        %2622 = vmatprep.subr.mxu0 0.0
        %2623 = vmatpush1.msra.mxu0 0.0
        %2624 = vmatprep.subr.mxu0 0.0
        %2625 = vmatpush1.msra.mxu0 0.0
        %2626 = vmatprep.subr.mxu0 0.0
        %2627 = vmatpush1.msra.mxu0 0.0
        %2628 = vmatprep.subr.mxu0 0.0
        %2629 = vmatpush1.msra.mxu0 0.0
        %2630 = vmatprep.subr.mxu0 0.0
        %2631 = vmatpush1.msra.mxu0 0.0
        %2632 = vmatprep.subr.mxu0 0.0
        %2633 = vmatpush1.msra.mxu0 0.0
        %2634 = vmatprep.subr.mxu0 0.0
        %2635 = vmatpush1.msra.mxu0 0.0
        %2636 = vmatprep.subr.mxu0 0.0
        %2637 = vmatpush1.msra.mxu0 0.0
        %2638 = vmatprep.subr.mxu0 0.0
        %2639 = vmatpush1.msra.mxu0 0.0
        %2640 = vmatprep.subr.mxu0 0.0
        %2641 = vmatpush1.msra.mxu0 0.0
        %2642 = vmatprep.subr.mxu0 0.0
        %2643 = vmatpush1.msra.mxu0 0.0
        %2644 = vmatprep.subr.mxu0 0.0
        %2645 = vmatpush1.msra.mxu0 0.0
        %2646 = vmatprep.subr.mxu0 0.0
        %2647 = vmatpush1.msra.mxu0 0.0
        %2648 = vmatprep.subr.mxu0 0.0
        %2649 = vmatpush1.msra.mxu0 0.0
        %2650 = vmatprep.subr.mxu0 0.0
        %2651 = vmatpush1.msra.mxu0 0.0
        %2652 = vmatprep.subr.mxu0 0.0
        %2653 = vmatpush1.msra.mxu0 0.0
        %2654 = vmatprep.subr.mxu0 0.0
        %2655 = vmatpush1.msra.mxu0 0.0
        %2656 = vmatprep.subr.mxu0 0.0
        %2657 = vmatpush1.msra.mxu0 0.0
        %2658 = vmatprep.subr.mxu0 0.0
        %2659 = vmatpush1.msra.mxu0 0.0
        %2660 = vmatprep.subr.mxu0 0.0
        %2661 = vmatpush1.msra.mxu0 0.0
        %2662 = vmatprep.subr.mxu0 0.0
        %2663 = vmatpush1.msra.mxu0 0.0
        %2664 = vmatprep.subr.mxu0 0.0
        %2665 = vmatpush1.msra.mxu0 0.0
        %2666 = vmatprep.mubr.f32.mxu0 0.0
        %2667 = vmatmul.mubr.f32.gmra.mrb[0].mxu0 %v2597
        %v2668 = vpop.f32.mrb[0].mxu0
        %v2669 = vadd.f32 0.0, %v2668
        %v2670 = vpop.f32.mrb[0].mxu0
        %2671 = vmatprep.mubr.f32.mxu0 0.0
        %2672 = vmatmul.mubr.f32.gmra.mrb[0].mxu0 %v2600
        %v2673 = vpop.f32.mrb[0].mxu0
        %v2674 = vadd.f32 0.0, %v2673
        %v2675 = vpop.f32.mrb[0].mxu0
        %2676 = vdwg.mxu0
        %v2677 = vadd.f32 %v2394, %v2669
        %v2678 = vadd.f32 %v2395, %v2674
        %2679 = vrot.lane.b32.xlu0 %v2111, 112
        %v2680 = vpop.permute.xlu0 %2679
        %2681 = vrot.lane.b32.xlu0 %v2112, 112
        %v2682 = vpop.permute.xlu0 %2681
        %2683 = vrot.lane.b32.xlu0 %v2103, 80
        %v2684 = vpop.permute.xlu0 %2683
        %2685 = vrot.lane.b32.xlu0 %v2108, 80
        %v2686 = vpop.permute.xlu0 %2685
        %v2687 = vsel %vm551, %v2680, 0
        %v2689 = vsel %vm551, %v2682, 0
        %v2691 = vsel %vm551, %v2684, 0
        %v2693 = vsel %vm551, %v2686, 0
        %2695 = vmatprep.subr.mxu0 0.0
        %2696 = vmatpush1.xpose.msra.mxu0 %v2691
        %2697 = vmatprep.subr.mxu0 0.0
        %2698 = vmatpush1.xpose.msra.mxu0 %v2693
        %2699 = vmatprep.subr.mxu0 0.0
        %2700 = vmatpush1.xpose.msra.mxu0 0.0
        %2701 = vmatprep.subr.mxu0 0.0
        %2702 = vmatpush1.xpose.msra.mxu0 0.0
        %2703 = vmatprep.subr.mxu0 0.0
        %2704 = vmatpush1.xpose.msra.mxu0 0.0
        %2705 = vmatprep.subr.mxu0 0.0
        %2706 = vmatpush1.xpose.msra.mxu0 0.0
        %2707 = vmatprep.subr.mxu0 0.0
        %2708 = vmatpush1.xpose.msra.mxu0 0.0
        %2709 = vmatprep.subr.mxu0 0.0
        %2710 = vmatpush1.xpose.msra.mxu0 0.0
        %2711 = vmatprep.subr.mxu0 0.0
        %2712 = vmatpush1.xpose.msra.mxu0 0.0
        %2713 = vmatprep.subr.mxu0 0.0
        %2714 = vmatpush1.xpose.msra.mxu0 0.0
        %2715 = vmatprep.subr.mxu0 0.0
        %2716 = vmatpush1.xpose.msra.mxu0 0.0
        %2717 = vmatprep.subr.mxu0 0.0
        %2718 = vmatpush1.xpose.msra.mxu0 0.0
        %2719 = vmatprep.subr.mxu0 0.0
        %2720 = vmatpush1.xpose.msra.mxu0 0.0
        %2721 = vmatprep.subr.mxu0 0.0
        %2722 = vmatpush1.xpose.msra.mxu0 0.0
        %2723 = vmatprep.subr.mxu0 0.0
        %2724 = vmatpush1.xpose.msra.mxu0 0.0
        %2725 = vmatprep.subr.mxu0 0.0
        %2726 = vmatpush1.xpose.msra.mxu0 0.0
        %2727 = vmatprep.subr.mxu0 0.0
        %2728 = vmatpush1.xpose.msra.mxu0 0.0
        %2729 = vmatprep.subr.mxu0 0.0
        %2730 = vmatpush1.xpose.msra.mxu0 0.0
        %2731 = vmatprep.subr.mxu0 0.0
        %2732 = vmatpush1.xpose.msra.mxu0 0.0
        %2733 = vmatprep.subr.mxu0 0.0
        %2734 = vmatpush1.xpose.msra.mxu0 0.0
        %2735 = vmatprep.subr.mxu0 0.0
        %2736 = vmatpush1.xpose.msra.mxu0 0.0
        %2737 = vmatprep.subr.mxu0 0.0
        %2738 = vmatpush1.xpose.msra.mxu0 0.0
        %2739 = vmatprep.subr.mxu0 0.0
        %2740 = vmatpush1.xpose.msra.mxu0 0.0
        %2741 = vmatprep.subr.mxu0 0.0
        %2742 = vmatpush1.xpose.msra.mxu0 0.0
        %2743 = vmatprep.subr.mxu0 0.0
        %2744 = vmatpush1.xpose.msra.mxu0 0.0
        %2745 = vmatprep.subr.mxu0 0.0
        %2746 = vmatpush1.xpose.msra.mxu0 0.0
        %2747 = vmatprep.subr.mxu0 0.0
        %2748 = vmatpush1.xpose.msra.mxu0 0.0
        %2749 = vmatprep.subr.mxu0 0.0
        %2750 = vmatpush1.xpose.msra.mxu0 0.0
        %2751 = vmatprep.subr.mxu0 0.0
        %2752 = vmatpush1.xpose.msra.mxu0 0.0
        %2753 = vmatprep.subr.mxu0 0.0
        %2754 = vmatpush1.xpose.msra.mxu0 0.0
        %2755 = vmatprep.subr.mxu0 0.0
        %2756 = vmatpush1.xpose.msra.mxu0 0.0
        %2757 = vmatprep.subr.mxu0 0.0
        %2758 = vmatpush1.xpose.msra.mxu0 0.0
        %2759 = vmatprep.mubr.f32.mxu0 0.0
        %2760 = vmatmul.mubr.f32.gmra.mrb[0].mxu0 %v2687
        %v2761 = vpop.f32.mrb[0].mxu0
        %v2762 = vadd.f32 0.0, %v2761
        %v2763 = vpop.f32.mrb[0].mxu0
        %2764 = vmatprep.mubr.f32.mxu0 0.0
        %2765 = vmatmul.mubr.f32.gmra.mrb[0].mxu0 %v2689
        %v2766 = vpop.f32.mrb[0].mxu0
        %v2767 = vadd.f32 0.0, %v2766
        %v2768 = vpop.f32.mrb[0].mxu0
        %2769 = vdwg.mxu0
        %v2770 = vsel %vm637, %v2762, -inf
        %2771 = vmax.xlane.f32.xlu0 %v2770
        %v2772 = vpop.xlane.xlu0 %2771
        %v2773 = vsel %vm637, %v2767, -inf
        %2774 = vmax.xlane.f32.xlu0 %v2773
        %v2775 = vpop.xlane.xlu0 %2774
        %v2776 = vsub.f32 %v2762, %v2772
        %v2777 = vsub.f32 %v2767, %v2775
        %v2778 = vmul.f32 %v2776, 1.442695
        %v2779 = vpow.pop %v2778
        %v2780 = vmul.f32 %v2777, 1.442695
        %v2781 = vpow.pop %v2780
        %v2782 = vsel %vm637, %v2779, 0.0
        %2783 = vadd.xlane.f32.xlu0 %v2782
        %v2784 = vpop.xlane.xlu0 %2783
        %v2785 = vsel %vm637, %v2781, 0.0
        %2786 = vadd.xlane.f32.xlu0 %v2785
        %v2787 = vpop.xlane.xlu0 %2786
        %v2788 = vrcp.pop %v2784
        %v2789 = vmul.f32 %v2779, %v2788
        %v2790 = vrcp.pop %v2787
        %v2791 = vmul.f32 %v2781, %v2790
        %2792 = vrot.lane.b32.xlu0 %v2103, 48
        %v2793 = vpop.permute.xlu0 %2792
        %2794 = vrot.lane.b32.xlu0 %v2108, 48
        %v2795 = vpop.permute.xlu0 %2794
        %v2799 = vsel %vm637, %v2789, 0
        %v2802 = vsel %vm637, %v2791, 0
        %2804 = vmatprep.subr.mxu0 0.0
        %2805 = vmatpush1.msra.mxu0 %v2793
        %2806 = vmatprep.subr.mxu0 0.0
        %2807 = vmatpush1.msra.mxu0 %v2795
        %2808 = vmatprep.subr.mxu0 0.0
        %2809 = vmatpush1.msra.mxu0 0.0
        %2810 = vmatprep.subr.mxu0 0.0
        %2811 = vmatpush1.msra.mxu0 0.0
        %2812 = vmatprep.subr.mxu0 0.0
        %2813 = vmatpush1.msra.mxu0 0.0
        %2814 = vmatprep.subr.mxu0 0.0
        %2815 = vmatpush1.msra.mxu0 0.0
        %2816 = vmatprep.subr.mxu0 0.0
        %2817 = vmatpush1.msra.mxu0 0.0
        %2818 = vmatprep.subr.mxu0 0.0
        %2819 = vmatpush1.msra.mxu0 0.0
        %2820 = vmatprep.subr.mxu0 0.0
        %2821 = vmatpush1.msra.mxu0 0.0
        %2822 = vmatprep.subr.mxu0 0.0
        %2823 = vmatpush1.msra.mxu0 0.0
        %2824 = vmatprep.subr.mxu0 0.0
        %2825 = vmatpush1.msra.mxu0 0.0
        %2826 = vmatprep.subr.mxu0 0.0
        %2827 = vmatpush1.msra.mxu0 0.0
        %2828 = vmatprep.subr.mxu0 0.0
        %2829 = vmatpush1.msra.mxu0 0.0
        %2830 = vmatprep.subr.mxu0 0.0
        %2831 = vmatpush1.msra.mxu0 0.0
        %2832 = vmatprep.subr.mxu0 0.0
        %2833 = vmatpush1.msra.mxu0 0.0
        %2834 = vmatprep.subr.mxu0 0.0
        %2835 = vmatpush1.msra.mxu0 0.0
        %2836 = vmatprep.subr.mxu0 0.0
        %2837 = vmatpush1.msra.mxu0 0.0
        %2838 = vmatprep.subr.mxu0 0.0
        %2839 = vmatpush1.msra.mxu0 0.0
        %2840 = vmatprep.subr.mxu0 0.0
        %2841 = vmatpush1.msra.mxu0 0.0
        %2842 = vmatprep.subr.mxu0 0.0
        %2843 = vmatpush1.msra.mxu0 0.0
        %2844 = vmatprep.subr.mxu0 0.0
        %2845 = vmatpush1.msra.mxu0 0.0
        %2846 = vmatprep.subr.mxu0 0.0
        %2847 = vmatpush1.msra.mxu0 0.0
        %2848 = vmatprep.subr.mxu0 0.0
        %2849 = vmatpush1.msra.mxu0 0.0
        %2850 = vmatprep.subr.mxu0 0.0
        %2851 = vmatpush1.msra.mxu0 0.0
        %2852 = vmatprep.subr.mxu0 0.0
        %2853 = vmatpush1.msra.mxu0 0.0
        %2854 = vmatprep.subr.mxu0 0.0
        %2855 = vmatpush1.msra.mxu0 0.0
        %2856 = vmatprep.subr.mxu0 0.0
        %2857 = vmatpush1.msra.mxu0 0.0
        %2858 = vmatprep.subr.mxu0 0.0
        %2859 = vmatpush1.msra.mxu0 0.0
        %2860 = vmatprep.subr.mxu0 0.0
        %2861 = vmatpush1.msra.mxu0 0.0
        %2862 = vmatprep.subr.mxu0 0.0
        %2863 = vmatpush1.msra.mxu0 0.0
        %2864 = vmatprep.subr.mxu0 0.0
        %2865 = vmatpush1.msra.mxu0 0.0
        %2866 = vmatprep.subr.mxu0 0.0
        %2867 = vmatpush1.msra.mxu0 0.0
        %2868 = vmatprep.mubr.f32.mxu0 0.0
        %2869 = vmatmul.mubr.f32.gmra.mrb[0].mxu0 %v2799
        %v2870 = vpop.f32.mrb[0].mxu0
        %v2871 = vadd.f32 0.0, %v2870
        %v2872 = vpop.f32.mrb[0].mxu0
        %2873 = vmatprep.mubr.f32.mxu0 0.0
        %2874 = vmatmul.mubr.f32.gmra.mrb[0].mxu0 %v2802
        %v2875 = vpop.f32.mrb[0].mxu0
        %v2876 = vadd.f32 0.0, %v2875
        %v2877 = vpop.f32.mrb[0].mxu0
        %2878 = vdwg.mxu0
        %v2880 = vsel %vm551, %v2871, 0
        %v2883 = vsel %vm551, %v2876, 0
        %2885 = vmatprep.subr.mxu0 0.0
        %2886 = vmatpush1.msra.mxu0 %v401
        %2887 = vmatprep.subr.mxu0 0.0
        %2888 = vmatpush1.msra.mxu0 0.0
        %2889 = vmatprep.subr.mxu0 0.0
        %2890 = vmatpush1.msra.mxu0 0.0
        %2891 = vmatprep.subr.mxu0 0.0
        %2892 = vmatpush1.msra.mxu0 0.0
        %2893 = vmatprep.subr.mxu0 0.0
        %2894 = vmatpush1.msra.mxu0 0.0
        %2895 = vmatprep.subr.mxu0 0.0
        %2896 = vmatpush1.msra.mxu0 0.0
        %2897 = vmatprep.subr.mxu0 0.0
        %2898 = vmatpush1.msra.mxu0 0.0
        %2899 = vmatprep.subr.mxu0 0.0
        %2900 = vmatpush1.msra.mxu0 0.0
        %2901 = vmatprep.subr.mxu0 0.0
        %2902 = vmatpush1.msra.mxu0 0.0
        %2903 = vmatprep.subr.mxu0 0.0
        %2904 = vmatpush1.msra.mxu0 0.0
        %2905 = vmatprep.subr.mxu0 0.0
        %2906 = vmatpush1.msra.mxu0 0.0
        %2907 = vmatprep.subr.mxu0 0.0
        %2908 = vmatpush1.msra.mxu0 0.0
        %2909 = vmatprep.subr.mxu0 0.0
        %2910 = vmatpush1.msra.mxu0 0.0
        %2911 = vmatprep.subr.mxu0 0.0
        %2912 = vmatpush1.msra.mxu0 0.0
        %2913 = vmatprep.subr.mxu0 0.0
        %2914 = vmatpush1.msra.mxu0 0.0
        %2915 = vmatprep.subr.mxu0 0.0
        %2916 = vmatpush1.msra.mxu0 0.0
        %2917 = vmatprep.subr.mxu0 0.0
        %2918 = vmatpush1.msra.mxu0 0.0
        %2919 = vmatprep.subr.mxu0 0.0
        %2920 = vmatpush1.msra.mxu0 0.0
        %2921 = vmatprep.subr.mxu0 0.0
        %2922 = vmatpush1.msra.mxu0 0.0
        %2923 = vmatprep.subr.mxu0 0.0
        %2924 = vmatpush1.msra.mxu0 0.0
        %2925 = vmatprep.subr.mxu0 0.0
        %2926 = vmatpush1.msra.mxu0 0.0
        %2927 = vmatprep.subr.mxu0 0.0
        %2928 = vmatpush1.msra.mxu0 0.0
        %2929 = vmatprep.subr.mxu0 0.0
        %2930 = vmatpush1.msra.mxu0 0.0
        %2931 = vmatprep.subr.mxu0 0.0
        %2932 = vmatpush1.msra.mxu0 0.0
        %2933 = vmatprep.subr.mxu0 0.0
        %2934 = vmatpush1.msra.mxu0 0.0
        %2935 = vmatprep.subr.mxu0 0.0
        %2936 = vmatpush1.msra.mxu0 0.0
        %2937 = vmatprep.subr.mxu0 0.0
        %2938 = vmatpush1.msra.mxu0 0.0
        %2939 = vmatprep.subr.mxu0 0.0
        %2940 = vmatpush1.msra.mxu0 0.0
        %2941 = vmatprep.subr.mxu0 0.0
        %2942 = vmatpush1.msra.mxu0 0.0
        %2943 = vmatprep.subr.mxu0 0.0
        %2944 = vmatpush1.msra.mxu0 0.0
        %2945 = vmatprep.subr.mxu0 0.0
        %2946 = vmatpush1.msra.mxu0 0.0
        %2947 = vmatprep.subr.mxu0 0.0
        %2948 = vmatpush1.msra.mxu0 0.0
        %2949 = vmatprep.mubr.f32.mxu0 0.0
        %2950 = vmatmul.mubr.f32.gmra.mrb[0].mxu0 %v2880
        %v2951 = vpop.f32.mrb[0].mxu0
        %v2952 = vadd.f32 0.0, %v2951
        %v2953 = vpop.f32.mrb[0].mxu0
        %2954 = vmatprep.mubr.f32.mxu0 0.0
        %2955 = vmatmul.mubr.f32.gmra.mrb[0].mxu0 %v2883
        %v2956 = vpop.f32.mrb[0].mxu0
        %v2957 = vadd.f32 0.0, %v2956
        %v2958 = vpop.f32.mrb[0].mxu0
        %2959 = vdwg.mxu0
        %v2960 = vadd.f32 %v2677, %v2952
        %v2961 = vadd.f32 %v2678, %v2957
        %2962 = vrot.lane.b32.xlu0 %v2111, 104
        %v2963 = vpop.permute.xlu0 %2962
        %2964 = vrot.lane.b32.xlu0 %v2112, 104
        %v2965 = vpop.permute.xlu0 %2964
        %2966 = vrot.lane.b32.xlu0 %v2103, 72
        %v2967 = vpop.permute.xlu0 %2966
        %2968 = vrot.lane.b32.xlu0 %v2108, 72
        %v2969 = vpop.permute.xlu0 %2968
        %v2970 = vsel %vm551, %v2963, 0
        %v2972 = vsel %vm551, %v2965, 0
        %v2974 = vsel %vm551, %v2967, 0
        %v2976 = vsel %vm551, %v2969, 0
        %2978 = vmatprep.subr.mxu0 0.0
        %2979 = vmatpush1.xpose.msra.mxu0 %v2974
        %2980 = vmatprep.subr.mxu0 0.0
        %2981 = vmatpush1.xpose.msra.mxu0 %v2976
        %2982 = vmatprep.subr.mxu0 0.0
        %2983 = vmatpush1.xpose.msra.mxu0 0.0
        %2984 = vmatprep.subr.mxu0 0.0
        %2985 = vmatpush1.xpose.msra.mxu0 0.0
        %2986 = vmatprep.subr.mxu0 0.0
        %2987 = vmatpush1.xpose.msra.mxu0 0.0
        %2988 = vmatprep.subr.mxu0 0.0
        %2989 = vmatpush1.xpose.msra.mxu0 0.0
        %2990 = vmatprep.subr.mxu0 0.0
        %2991 = vmatpush1.xpose.msra.mxu0 0.0
        %2992 = vmatprep.subr.mxu0 0.0
        %2993 = vmatpush1.xpose.msra.mxu0 0.0
        %2994 = vmatprep.subr.mxu0 0.0
        %2995 = vmatpush1.xpose.msra.mxu0 0.0
        %2996 = vmatprep.subr.mxu0 0.0
        %2997 = vmatpush1.xpose.msra.mxu0 0.0
        %2998 = vmatprep.subr.mxu0 0.0
        %2999 = vmatpush1.xpose.msra.mxu0 0.0
        %3000 = vmatprep.subr.mxu0 0.0
        %3001 = vmatpush1.xpose.msra.mxu0 0.0
        %3002 = vmatprep.subr.mxu0 0.0
        %3003 = vmatpush1.xpose.msra.mxu0 0.0
        %3004 = vmatprep.subr.mxu0 0.0
        %3005 = vmatpush1.xpose.msra.mxu0 0.0
        %3006 = vmatprep.subr.mxu0 0.0
        %3007 = vmatpush1.xpose.msra.mxu0 0.0
        %3008 = vmatprep.subr.mxu0 0.0
        %3009 = vmatpush1.xpose.msra.mxu0 0.0
        %3010 = vmatprep.subr.mxu0 0.0
        %3011 = vmatpush1.xpose.msra.mxu0 0.0
        %3012 = vmatprep.subr.mxu0 0.0
        %3013 = vmatpush1.xpose.msra.mxu0 0.0
        %3014 = vmatprep.subr.mxu0 0.0
        %3015 = vmatpush1.xpose.msra.mxu0 0.0
        %3016 = vmatprep.subr.mxu0 0.0
        %3017 = vmatpush1.xpose.msra.mxu0 0.0
        %3018 = vmatprep.subr.mxu0 0.0
        %3019 = vmatpush1.xpose.msra.mxu0 0.0
        %3020 = vmatprep.subr.mxu0 0.0
        %3021 = vmatpush1.xpose.msra.mxu0 0.0
        %3022 = vmatprep.subr.mxu0 0.0
        %3023 = vmatpush1.xpose.msra.mxu0 0.0
        %3024 = vmatprep.subr.mxu0 0.0
        %3025 = vmatpush1.xpose.msra.mxu0 0.0
        %3026 = vmatprep.subr.mxu0 0.0
        %3027 = vmatpush1.xpose.msra.mxu0 0.0
        %3028 = vmatprep.subr.mxu0 0.0
        %3029 = vmatpush1.xpose.msra.mxu0 0.0
        %3030 = vmatprep.subr.mxu0 0.0
        %3031 = vmatpush1.xpose.msra.mxu0 0.0
        %3032 = vmatprep.subr.mxu0 0.0
        %3033 = vmatpush1.xpose.msra.mxu0 0.0
        %3034 = vmatprep.subr.mxu0 0.0
        %3035 = vmatpush1.xpose.msra.mxu0 0.0
        %3036 = vmatprep.subr.mxu0 0.0
        %3037 = vmatpush1.xpose.msra.mxu0 0.0
        %3038 = vmatprep.subr.mxu0 0.0
        %3039 = vmatpush1.xpose.msra.mxu0 0.0
        %3040 = vmatprep.subr.mxu0 0.0
        %3041 = vmatpush1.xpose.msra.mxu0 0.0
        %3042 = vmatprep.mubr.f32.mxu0 0.0
        %3043 = vmatmul.mubr.f32.gmra.mrb[0].mxu0 %v2970
        %v3044 = vpop.f32.mrb[0].mxu0
        %v3045 = vadd.f32 0.0, %v3044
        %v3046 = vpop.f32.mrb[0].mxu0
        %3047 = vmatprep.mubr.f32.mxu0 0.0
        %3048 = vmatmul.mubr.f32.gmra.mrb[0].mxu0 %v2972
        %v3049 = vpop.f32.mrb[0].mxu0
        %v3050 = vadd.f32 0.0, %v3049
        %v3051 = vpop.f32.mrb[0].mxu0
        %3052 = vdwg.mxu0
        %v3053 = vsel %vm637, %v3045, -inf
        %3054 = vmax.xlane.f32.xlu0 %v3053
        %v3055 = vpop.xlane.xlu0 %3054
        %v3056 = vsel %vm637, %v3050, -inf
        %3057 = vmax.xlane.f32.xlu0 %v3056
        %v3058 = vpop.xlane.xlu0 %3057
        %v3059 = vsub.f32 %v3045, %v3055
        %v3060 = vsub.f32 %v3050, %v3058
        %v3061 = vmul.f32 %v3059, 1.442695
        %v3062 = vpow.pop %v3061
        %v3063 = vmul.f32 %v3060, 1.442695
        %v3064 = vpow.pop %v3063
        %v3065 = vsel %vm637, %v3062, 0.0
        %3066 = vadd.xlane.f32.xlu0 %v3065
        %v3067 = vpop.xlane.xlu0 %3066
        %v3068 = vsel %vm637, %v3064, 0.0
        %3069 = vadd.xlane.f32.xlu0 %v3068
        %v3070 = vpop.xlane.xlu0 %3069
        %v3071 = vrcp.pop %v3067
        %v3072 = vmul.f32 %v3062, %v3071
        %v3073 = vrcp.pop %v3070
        %v3074 = vmul.f32 %v3064, %v3073
        %3075 = vrot.lane.b32.xlu0 %v2103, 40
        %v3076 = vpop.permute.xlu0 %3075
        %3077 = vrot.lane.b32.xlu0 %v2108, 40
        %v3078 = vpop.permute.xlu0 %3077
        %v3082 = vsel %vm637, %v3072, 0
        %v3085 = vsel %vm637, %v3074, 0
        %3087 = vmatprep.subr.mxu0 0.0
        %3088 = vmatpush1.msra.mxu0 %v3076
        %3089 = vmatprep.subr.mxu0 0.0
        %3090 = vmatpush1.msra.mxu0 %v3078
        %3091 = vmatprep.subr.mxu0 0.0
        %3092 = vmatpush1.msra.mxu0 0.0
        %3093 = vmatprep.subr.mxu0 0.0
        %3094 = vmatpush1.msra.mxu0 0.0
        %3095 = vmatprep.subr.mxu0 0.0
        %3096 = vmatpush1.msra.mxu0 0.0
        %3097 = vmatprep.subr.mxu0 0.0
        %3098 = vmatpush1.msra.mxu0 0.0
        %3099 = vmatprep.subr.mxu0 0.0
        %3100 = vmatpush1.msra.mxu0 0.0
        %3101 = vmatprep.subr.mxu0 0.0
        %3102 = vmatpush1.msra.mxu0 0.0
        %3103 = vmatprep.subr.mxu0 0.0
        %3104 = vmatpush1.msra.mxu0 0.0
        %3105 = vmatprep.subr.mxu0 0.0
        %3106 = vmatpush1.msra.mxu0 0.0
        %3107 = vmatprep.subr.mxu0 0.0
        %3108 = vmatpush1.msra.mxu0 0.0
        %3109 = vmatprep.subr.mxu0 0.0
        %3110 = vmatpush1.msra.mxu0 0.0
        %3111 = vmatprep.subr.mxu0 0.0
        %3112 = vmatpush1.msra.mxu0 0.0
        %3113 = vmatprep.subr.mxu0 0.0
        %3114 = vmatpush1.msra.mxu0 0.0
        %3115 = vmatprep.subr.mxu0 0.0
        %3116 = vmatpush1.msra.mxu0 0.0
        %3117 = vmatprep.subr.mxu0 0.0
        %3118 = vmatpush1.msra.mxu0 0.0
        %3119 = vmatprep.subr.mxu0 0.0
        %3120 = vmatpush1.msra.mxu0 0.0
        %3121 = vmatprep.subr.mxu0 0.0
        %3122 = vmatpush1.msra.mxu0 0.0
        %3123 = vmatprep.subr.mxu0 0.0
        %3124 = vmatpush1.msra.mxu0 0.0
        %3125 = vmatprep.subr.mxu0 0.0
        %3126 = vmatpush1.msra.mxu0 0.0
        %3127 = vmatprep.subr.mxu0 0.0
        %3128 = vmatpush1.msra.mxu0 0.0
        %3129 = vmatprep.subr.mxu0 0.0
        %3130 = vmatpush1.msra.mxu0 0.0
        %3131 = vmatprep.subr.mxu0 0.0
        %3132 = vmatpush1.msra.mxu0 0.0
        %3133 = vmatprep.subr.mxu0 0.0
        %3134 = vmatpush1.msra.mxu0 0.0
        %3135 = vmatprep.subr.mxu0 0.0
        %3136 = vmatpush1.msra.mxu0 0.0
        %3137 = vmatprep.subr.mxu0 0.0
        %3138 = vmatpush1.msra.mxu0 0.0
        %3139 = vmatprep.subr.mxu0 0.0
        %3140 = vmatpush1.msra.mxu0 0.0
        %3141 = vmatprep.subr.mxu0 0.0
        %3142 = vmatpush1.msra.mxu0 0.0
        %3143 = vmatprep.subr.mxu0 0.0
        %3144 = vmatpush1.msra.mxu0 0.0
        %3145 = vmatprep.subr.mxu0 0.0
        %3146 = vmatpush1.msra.mxu0 0.0
        %3147 = vmatprep.subr.mxu0 0.0
        %3148 = vmatpush1.msra.mxu0 0.0
        %3149 = vmatprep.subr.mxu0 0.0
        %3150 = vmatpush1.msra.mxu0 0.0
        %3151 = vmatprep.mubr.f32.mxu0 0.0
        %3152 = vmatmul.mubr.f32.gmra.mrb[0].mxu0 %v3082
        %v3153 = vpop.f32.mrb[0].mxu0
        %v3154 = vadd.f32 0.0, %v3153
        %v3155 = vpop.f32.mrb[0].mxu0
        %3156 = vmatprep.mubr.f32.mxu0 0.0
        %3157 = vmatmul.mubr.f32.gmra.mrb[0].mxu0 %v3085
        %v3158 = vpop.f32.mrb[0].mxu0
        %v3159 = vadd.f32 0.0, %v3158
        %v3160 = vpop.f32.mrb[0].mxu0
        %3161 = vdwg.mxu0
        %v3163 = vsel %vm551, %v3154, 0
        %v3166 = vsel %vm551, %v3159, 0
        %3168 = vmatprep.subr.mxu0 0.0
        %3169 = vmatpush1.msra.mxu0 %v402
        %3170 = vmatprep.subr.mxu0 0.0
        %3171 = vmatpush1.msra.mxu0 0.0
        %3172 = vmatprep.subr.mxu0 0.0
        %3173 = vmatpush1.msra.mxu0 0.0
        %3174 = vmatprep.subr.mxu0 0.0
        %3175 = vmatpush1.msra.mxu0 0.0
        %3176 = vmatprep.subr.mxu0 0.0
        %3177 = vmatpush1.msra.mxu0 0.0
        %3178 = vmatprep.subr.mxu0 0.0
        %3179 = vmatpush1.msra.mxu0 0.0
        %3180 = vmatprep.subr.mxu0 0.0
        %3181 = vmatpush1.msra.mxu0 0.0
        %3182 = vmatprep.subr.mxu0 0.0
        %3183 = vmatpush1.msra.mxu0 0.0
        %3184 = vmatprep.subr.mxu0 0.0
        %3185 = vmatpush1.msra.mxu0 0.0
        %3186 = vmatprep.subr.mxu0 0.0
        %3187 = vmatpush1.msra.mxu0 0.0
        %3188 = vmatprep.subr.mxu0 0.0
        %3189 = vmatpush1.msra.mxu0 0.0
        %3190 = vmatprep.subr.mxu0 0.0
        %3191 = vmatpush1.msra.mxu0 0.0
        %3192 = vmatprep.subr.mxu0 0.0
        %3193 = vmatpush1.msra.mxu0 0.0
        %3194 = vmatprep.subr.mxu0 0.0
        %3195 = vmatpush1.msra.mxu0 0.0
        %3196 = vmatprep.subr.mxu0 0.0
        %3197 = vmatpush1.msra.mxu0 0.0
        %3198 = vmatprep.subr.mxu0 0.0
        %3199 = vmatpush1.msra.mxu0 0.0
        %3200 = vmatprep.subr.mxu0 0.0
        %3201 = vmatpush1.msra.mxu0 0.0
        %3202 = vmatprep.subr.mxu0 0.0
        %3203 = vmatpush1.msra.mxu0 0.0
        %3204 = vmatprep.subr.mxu0 0.0
        %3205 = vmatpush1.msra.mxu0 0.0
        %3206 = vmatprep.subr.mxu0 0.0
        %3207 = vmatpush1.msra.mxu0 0.0
        %3208 = vmatprep.subr.mxu0 0.0
        %3209 = vmatpush1.msra.mxu0 0.0
        %3210 = vmatprep.subr.mxu0 0.0
        %3211 = vmatpush1.msra.mxu0 0.0
        %3212 = vmatprep.subr.mxu0 0.0
        %3213 = vmatpush1.msra.mxu0 0.0
        %3214 = vmatprep.subr.mxu0 0.0
        %3215 = vmatpush1.msra.mxu0 0.0
        %3216 = vmatprep.subr.mxu0 0.0
        %3217 = vmatpush1.msra.mxu0 0.0
        %3218 = vmatprep.subr.mxu0 0.0
        %3219 = vmatpush1.msra.mxu0 0.0
        %3220 = vmatprep.subr.mxu0 0.0
        %3221 = vmatpush1.msra.mxu0 0.0
        %3222 = vmatprep.subr.mxu0 0.0
        %3223 = vmatpush1.msra.mxu0 0.0
        %3224 = vmatprep.subr.mxu0 0.0
        %3225 = vmatpush1.msra.mxu0 0.0
        %3226 = vmatprep.subr.mxu0 0.0
        %3227 = vmatpush1.msra.mxu0 0.0
        %3228 = vmatprep.subr.mxu0 0.0
        %3229 = vmatpush1.msra.mxu0 0.0
        %3230 = vmatprep.subr.mxu0 0.0
        %3231 = vmatpush1.msra.mxu0 0.0
        %3232 = vmatprep.mubr.f32.mxu0 0.0
        %3233 = vmatmul.mubr.f32.gmra.mrb[0].mxu0 %v3163
        %v3234 = vpop.f32.mrb[0].mxu0
        %v3235 = vadd.f32 0.0, %v3234
        %v3236 = vpop.f32.mrb[0].mxu0
        %3237 = vmatprep.mubr.f32.mxu0 0.0
        %3238 = vmatmul.mubr.f32.gmra.mrb[0].mxu0 %v3166
        %v3239 = vpop.f32.mrb[0].mxu0
        %v3240 = vadd.f32 0.0, %v3239
        %v3241 = vpop.f32.mrb[0].mxu0
        %3242 = vdwg.mxu0
        %v3243 = vadd.f32 %v2960, %v3235
        %v3244 = vadd.f32 %v2961, %v3240
        %v3245 = vsel %vm421, %v3243, 0.0
        %3246 = vadd.xlane.f32.xlu0 %v3245
        %v3247 = vpop.xlane.xlu0 %3246
        %v3248 = vsel %vm421, %v3244, 0.0
        %3249 = vadd.xlane.f32.xlu0 %v3248
        %v3250 = vpop.xlane.xlu0 %3249
        %v3251 = vmul.f32 %v3247, %v428
        %v3252 = vmul.f32 %v3250, %v428
        %v3253 = vsub.f32 %v3243, %v3251
        %v3254 = vsub.f32 %v3244, %v3252
        %v3255 = vmul.f32 %v3253, %v3253
        %v3256 = vmul.f32 %v3254, %v3254
        %v3257 = vsel %vm421, %v3255, 0.0
        %3258 = vadd.xlane.f32.xlu0 %v3257
        %v3259 = vpop.xlane.xlu0 %3258
        %v3260 = vsel %vm421, %v3256, 0.0
        %3261 = vadd.xlane.f32.xlu0 %v3260
        %v3262 = vpop.xlane.xlu0 %3261
        %v3263 = vmul.f32 %v3259, %v428
        %v3264 = vmul.f32 %v3262, %v428
        %v3265 = vadd.f32 %v3263, 1e-05
        %v3266 = vadd.f32 %v3264, 1e-05
        %v3267 = vrsqrt.pop %v3265
        %v3268 = vrsqrt.pop %v3266
        %v3269 = vmul.f32 %v3253, %v3267
        %v3270 = vmul.f32 %v3254, %v3268
        %v3271 = vadd.f32 %v3269, %v2002
        %v3272 = vadd.f32 %v3270, %v2003
        %v3273 = vsel %vm421, %v3271, 0.0
        %3274 = vadd.xlane.f32.xlu0 %v3273
        %v3275 = vpop.xlane.xlu0 %3274
        %v3276 = vsel %vm421, %v3272, 0.0
        %3277 = vadd.xlane.f32.xlu0 %v3276
        %v3278 = vpop.xlane.xlu0 %3277
        %v3279 = vmul.f32 %v3275, %v428
        %v3280 = vmul.f32 %v3278, %v428
        %v3281 = vsub.f32 %v3271, %v3279
        %v3282 = vsub.f32 %v3272, %v3280
        %v3283 = vmul.f32 %v3281, %v3281
        %v3284 = vmul.f32 %v3282, %v3282
        %v3285 = vsel %vm421, %v3283, 0.0
        %3286 = vadd.xlane.f32.xlu0 %v3285
        %v3287 = vpop.xlane.xlu0 %3286
        %v3288 = vsel %vm421, %v3284, 0.0
        %3289 = vadd.xlane.f32.xlu0 %v3288
        %v3290 = vpop.xlane.xlu0 %3289
        %v3291 = vmul.f32 %v3287, %v428
        %v3292 = vmul.f32 %v3290, %v428
        %v3293 = vadd.f32 %v3291, 1e-05
        %v3294 = vadd.f32 %v3292, 1e-05
        %v3295 = vrsqrt.pop %v3293
        %v3296 = vrsqrt.pop %v3294
        %v3297 = vmul.f32 %v3281, %v3295
        %v3298 = vmul.f32 %v3282, %v3296
        %v3300 = vsel %vm421, %v3297, 0
        %v3303 = vsel %vm421, %v3298, 0
        %3305 = vmatprep.subr.mxu0 0.0
        %3306 = vmatpush1.msra.mxu0 %v404
        %3307 = vmatprep.subr.mxu0 0.0
        %3308 = vmatpush1.msra.mxu0 %v405
        %3309 = vmatprep.subr.mxu0 0.0
        %3310 = vmatpush1.msra.mxu0 %v406
        %3311 = vmatprep.subr.mxu0 0.0
        %3312 = vmatpush1.msra.mxu0 %v407
        %3313 = vmatprep.subr.mxu0 0.0
        %3314 = vmatpush1.msra.mxu0 0.0
        %3315 = vmatprep.subr.mxu0 0.0
        %3316 = vmatpush1.msra.mxu0 0.0
        %3317 = vmatprep.subr.mxu0 0.0
        %3318 = vmatpush1.msra.mxu0 0.0
        %3319 = vmatprep.subr.mxu0 0.0
        %3320 = vmatpush1.msra.mxu0 0.0
        %3321 = vmatprep.subr.mxu0 0.0
        %3322 = vmatpush1.msra.mxu0 0.0
        %3323 = vmatprep.subr.mxu0 0.0
        %3324 = vmatpush1.msra.mxu0 0.0
        %3325 = vmatprep.subr.mxu0 0.0
        %3326 = vmatpush1.msra.mxu0 0.0
        %3327 = vmatprep.subr.mxu0 0.0
        %3328 = vmatpush1.msra.mxu0 0.0
        %3329 = vmatprep.subr.mxu0 0.0
        %3330 = vmatpush1.msra.mxu0 0.0
        %3331 = vmatprep.subr.mxu0 0.0
        %3332 = vmatpush1.msra.mxu0 0.0
        %3333 = vmatprep.subr.mxu0 0.0
        %3334 = vmatpush1.msra.mxu0 0.0
        %3335 = vmatprep.subr.mxu0 0.0
        %3336 = vmatpush1.msra.mxu0 0.0
        %3337 = vmatprep.subr.mxu0 0.0
        %3338 = vmatpush1.msra.mxu0 0.0
        %3339 = vmatprep.subr.mxu0 0.0
        %3340 = vmatpush1.msra.mxu0 0.0
        %3341 = vmatprep.subr.mxu0 0.0
        %3342 = vmatpush1.msra.mxu0 0.0
        %3343 = vmatprep.subr.mxu0 0.0
        %3344 = vmatpush1.msra.mxu0 0.0
        %3345 = vmatprep.subr.mxu0 0.0
        %3346 = vmatpush1.msra.mxu0 0.0
        %3347 = vmatprep.subr.mxu0 0.0
        %3348 = vmatpush1.msra.mxu0 0.0
        %3349 = vmatprep.subr.mxu0 0.0
        %3350 = vmatpush1.msra.mxu0 0.0
        %3351 = vmatprep.subr.mxu0 0.0
        %3352 = vmatpush1.msra.mxu0 0.0
        %3353 = vmatprep.subr.mxu0 0.0
        %3354 = vmatpush1.msra.mxu0 0.0
        %3355 = vmatprep.subr.mxu0 0.0
        %3356 = vmatpush1.msra.mxu0 0.0
        %3357 = vmatprep.subr.mxu0 0.0
        %3358 = vmatpush1.msra.mxu0 0.0
        %3359 = vmatprep.subr.mxu0 0.0
        %3360 = vmatpush1.msra.mxu0 0.0
        %3361 = vmatprep.subr.mxu0 0.0
        %3362 = vmatpush1.msra.mxu0 0.0
        %3363 = vmatprep.subr.mxu0 0.0
        %3364 = vmatpush1.msra.mxu0 0.0
        %3365 = vmatprep.subr.mxu0 0.0
        %3366 = vmatpush1.msra.mxu0 0.0
        %3367 = vmatprep.subr.mxu0 0.0
        %3368 = vmatpush1.msra.mxu0 0.0
        %3369 = vmatprep.mubr.f32.mxu0 0.0
        %3370 = vmatmul.mubr.f32.gmra.mrb[0].mxu0 %v3300
        %v3371 = vpop.f32.mrb[0].mxu0
        %v3372 = vadd.f32 %v1737, %v3371
        %v3373 = vpop.f32.mrb[0].mxu0
        %3374 = vmatprep.mubr.f32.mxu0 0.0
        %3375 = vmatmul.mubr.f32.gmra.mrb[0].mxu0 %v3303
        %v3376 = vpop.f32.mrb[0].mxu0
        %v3377 = vadd.f32 %v1737, %v3376
        %v3378 = vpop.f32.mrb[0].mxu0
        %3379 = vdwg.mxu0
        %v3380 = vmul.f32 %v3372, 0.5
        %v3381 = vmul.f32 %v3377, 0.5
        %v3382 = vmul.f32 %v3372, 0.70710677
        %v3383 = vmul.f32 %v3377, 0.70710677
        %v3384 = vand.u32 2147483647, %v3382
        %v3385 = vand.u32 2147483647, %v3383
        %v3386 = vmul.f32 %v3384, 0.3275911
        %v3387 = vmul.f32 %v3385, 0.3275911
        %v3388 = vadd.f32 %v3386, 1.0
        %v3389 = vadd.f32 %v3387, 1.0
        %v3390 = vrcp.pop %v3388
        %v3391 = vmul.f32 1.0, %v3390
        %v3392 = vrcp.pop %v3389
        %v3393 = vmul.f32 1.0, %v3392
        %v3394 = vmul.f32 %v3391, 1.0614054
        %v3395 = vmul.f32 %v3393, 1.0614054
        %v3396 = vadd.f32 %v3394, -1.4531521
        %v3397 = vadd.f32 %v3395, -1.4531521
        %v3398 = vmul.f32 %v3396, %v3391
        %v3399 = vmul.f32 %v3397, %v3393
        %v3400 = vadd.f32 %v3398, 1.4214138
        %v3401 = vadd.f32 %v3399, 1.4214138
        %v3402 = vmul.f32 %v3400, %v3391
        %v3403 = vmul.f32 %v3401, %v3393
        %v3404 = vadd.f32 %v3402, -0.28449672
        %v3405 = vadd.f32 %v3403, -0.28449672
        %v3406 = vmul.f32 %v3404, %v3391
        %v3407 = vmul.f32 %v3405, %v3393
        %v3408 = vadd.f32 %v3406, 0.2548296
        %v3409 = vadd.f32 %v3407, 0.2548296
        %v3410 = vmul.f32 %v3408, %v3391
        %v3411 = vmul.f32 %v3409, %v3393
        %v3412 = vsub.f32 0.0, %v3384
        %v3413 = vsub.f32 0.0, %v3385
        %v3414 = vmul.f32 %v3412, %v3384
        %v3415 = vmul.f32 %v3413, %v3385
        %v3416 = vmul.f32 %v3414, 1.442695
        %v3417 = vpow.pop %v3416
        %v3418 = vmul.f32 %v3415, 1.442695
        %v3419 = vpow.pop %v3418
        %v3420 = vmul.f32 %v3410, %v3417
        %v3421 = vmul.f32 %v3411, %v3419
        %v3422 = vsub.f32 1.0, %v3420
        %v3423 = vsub.f32 1.0, %v3421
        %vm3424 = vcmp.ge.f32.partialorder %v3382, 0.0
        %vm3425 = vcmp.ge.f32.partialorder %v3383, 0.0
        %v3426 = vsub.f32 0.0, %v3422
        %v3427 = vsub.f32 0.0, %v3423
        %v3428 = vsel %vm3424, %v3422, %v3426
        %v3429 = vsel %vm3425, %v3423, %v3427
        %v3430 = vadd.f32 %v3428, 1.0
        %v3431 = vadd.f32 %v3429, 1.0
        %v3432 = vmul.f32 %v3380, %v3430
        %v3433 = vmul.f32 %v3381, %v3431
        %v3434 = vsel %vm1874, %v3432, 0.0
        %3435 = vadd.xlane.f32.xlu0 %v3434
        %v3436 = vpop.xlane.xlu0 %3435
        %v3437 = vsel %vm1874, %v3433, 0.0
        %3438 = vadd.xlane.f32.xlu0 %v3437
        %v3439 = vpop.xlane.xlu0 %3438
        %v3440 = vmul.f32 %v3436, %v1881
        %v3441 = vmul.f32 %v3439, %v1881
        %v3442 = vsub.f32 %v3432, %v3440
        %v3443 = vsub.f32 %v3433, %v3441
        %v3444 = vmul.f32 %v3442, %v3442
        %v3445 = vmul.f32 %v3443, %v3443
        %v3446 = vsel %vm1874, %v3444, 0.0
        %3447 = vadd.xlane.f32.xlu0 %v3446
        %v3448 = vpop.xlane.xlu0 %3447
        %v3449 = vsel %vm1874, %v3445, 0.0
        %3450 = vadd.xlane.f32.xlu0 %v3449
        %v3451 = vpop.xlane.xlu0 %3450
        %v3452 = vmul.f32 %v3448, %v1881
        %v3453 = vmul.f32 %v3451, %v1881
        %v3454 = vadd.f32 %v3452, 1e-05
        %v3455 = vadd.f32 %v3453, 1e-05
        %v3456 = vrsqrt.pop %v3454
        %v3457 = vrsqrt.pop %v3455
        %v3458 = vmul.f32 %v3442, %v3456
        %v3459 = vmul.f32 %v3443, %v3457
        %v3461 = vsel %vm1874, %v3458, 0
        %v3464 = vsel %vm1874, %v3459, 0
        %3466 = vmatprep.subr.mxu0 0.0
        %3467 = vmatpush1.msra.mxu0 %v409
        %3468 = vmatprep.subr.mxu0 0.0
        %3469 = vmatpush1.msra.mxu0 %v410
        %3470 = vmatprep.subr.mxu0 0.0
        %3471 = vmatpush1.msra.mxu0 %v411
        %3472 = vmatprep.subr.mxu0 0.0
        %3473 = vmatpush1.msra.mxu0 %v412
        %3474 = vmatprep.subr.mxu0 0.0
        %3475 = vmatpush1.msra.mxu0 %v413
        %3476 = vmatprep.subr.mxu0 0.0
        %3477 = vmatpush1.msra.mxu0 %v414
        %3478 = vmatprep.subr.mxu0 0.0
        %3479 = vmatpush1.msra.mxu0 %v415
        %3480 = vmatprep.subr.mxu0 0.0
        %3481 = vmatpush1.msra.mxu0 %v416
        %3482 = vmatprep.subr.mxu0 0.0
        %3483 = vmatpush1.msra.mxu0 0.0
        %3484 = vmatprep.subr.mxu0 0.0
        %3485 = vmatpush1.msra.mxu0 0.0
        %3486 = vmatprep.subr.mxu0 0.0
        %3487 = vmatpush1.msra.mxu0 0.0
        %3488 = vmatprep.subr.mxu0 0.0
        %3489 = vmatpush1.msra.mxu0 0.0
        %3490 = vmatprep.subr.mxu0 0.0
        %3491 = vmatpush1.msra.mxu0 0.0
        %3492 = vmatprep.subr.mxu0 0.0
        %3493 = vmatpush1.msra.mxu0 0.0
        %3494 = vmatprep.subr.mxu0 0.0
        %3495 = vmatpush1.msra.mxu0 0.0
        %3496 = vmatprep.subr.mxu0 0.0
        %3497 = vmatpush1.msra.mxu0 0.0
        %3498 = vmatprep.subr.mxu0 0.0
        %3499 = vmatpush1.msra.mxu0 0.0
        %3500 = vmatprep.subr.mxu0 0.0
        %3501 = vmatpush1.msra.mxu0 0.0
        %3502 = vmatprep.subr.mxu0 0.0
        %3503 = vmatpush1.msra.mxu0 0.0
        %3504 = vmatprep.subr.mxu0 0.0
        %3505 = vmatpush1.msra.mxu0 0.0
        %3506 = vmatprep.subr.mxu0 0.0
        %3507 = vmatpush1.msra.mxu0 0.0
        %3508 = vmatprep.subr.mxu0 0.0
        %3509 = vmatpush1.msra.mxu0 0.0
        %3510 = vmatprep.subr.mxu0 0.0
        %3511 = vmatpush1.msra.mxu0 0.0
        %3512 = vmatprep.subr.mxu0 0.0
        %3513 = vmatpush1.msra.mxu0 0.0
        %3514 = vmatprep.subr.mxu0 0.0
        %3515 = vmatpush1.msra.mxu0 0.0
        %3516 = vmatprep.subr.mxu0 0.0
        %3517 = vmatpush1.msra.mxu0 0.0
        %3518 = vmatprep.subr.mxu0 0.0
        %3519 = vmatpush1.msra.mxu0 0.0
        %3520 = vmatprep.subr.mxu0 0.0
        %3521 = vmatpush1.msra.mxu0 0.0
        %3522 = vmatprep.subr.mxu0 0.0
        %3523 = vmatpush1.msra.mxu0 0.0
        %3524 = vmatprep.subr.mxu0 0.0
        %3525 = vmatpush1.msra.mxu0 0.0
        %3526 = vmatprep.subr.mxu0 0.0
        %3527 = vmatpush1.msra.mxu0 0.0
        %3528 = vmatprep.subr.mxu0 0.0
        %3529 = vmatpush1.msra.mxu0 0.0
        %3530 = vmatprep.mubr.f32.mxu0 0.0
        %3531 = vmatmul.mubr.f32.gmra.mrb[0].mxu0 %v3461
        %v3532 = vpop.f32.mrb[0].mxu0
        %v3533 = vadd.f32 %v1906, %v3532
        %v3534 = vpop.f32.mrb[0].mxu0
        %3535 = vmatprep.mubr.f32.mxu0 0.0
        %3536 = vmatmul.mubr.f32.gmra.mrb[0].mxu0 %v3464
        %v3537 = vpop.f32.mrb[0].mxu0
        %v3538 = vadd.f32 %v1906, %v3537
        %v3539 = vpop.f32.mrb[0].mxu0
        %3540 = vdwg.mxu0
        %v3541 = vmul.f32 %v1993, %v3271
        %v3542 = vmul.f32 %v1993, %v3272
        %v3543 = vadd.f32 %v3533, %v3541
        %v3544 = vadd.f32 %v3538, %v3542
        %s3545 = scalar_lea.vmem %s385, 16 [#allocation7]
        %3546 = vst.msk [vmem:[%s3545] sm:$0xff] %vm421, %v3543
        %3547 = vst.msk [vmem:[%s3545 + $0x8] sm:$0xff] %vm421, %v3544
        %s3548 = sand.u32 %s249, 1
        %s3549 = scalar_lea.sflag [#allocation4], %s3548
        %s3550 = sand.u32 %s249, 1
        %s3551 = smul.addr %s3550, 32
        %s3552 = scalar_lea.vmem [#allocation7], %s3551
        // Predicated region
        $region69: #{tpu_custom_call.1} parent=59 // pred_check
          %p3553 = pneg %p259
        $region70: #{tpu_custom_call.1} parent=59 // pred_check_branch
          %3555 = sbr.rel (%p3553) target = $region72
        $region71: #{tpu_custom_call.1} parent=59 // pred_region
          %s3556 = smul.u32 2, %s26
          %s3558 = ssub.s32 512, 512
          %3559 = vsyncadd %s3549, %s3558
          %s3560 = smul.addr %s3556, 2
          %s3561 = smul.addr %s3560, 128
          %s3562 = scalar_lea.hbm %s10, %s3561
          %s3563 = sshll.u32 %s3552, 4
          %s3564 = int_to_ptr.vmem [resolvable:$true] %s3563
          %3569 = dma.vmem_to_hbm [thread:$0]  %s3564, 512, %s3562, %s3549, 128, 128, 8
        $region72: #{tpu_custom_call.1} parent=59 // pred_fallthru
          _
      $region60: #{tpu_custom_call.1} parent=5 // pred_fallthru
        _
      %p3570 = scmp.le.s32.totalorder 2, %s21
      // Predicated region
      $region73: #{tpu_custom_call.1} parent=5 // pred_check
        %p3571 = pneg %p3570
      $region74: #{tpu_custom_call.1} parent=5 // pred_check_branch
        %3573 = sbr.rel (%p3571) target = $region76
      $region75: #{tpu_custom_call.1} parent=5 // pred_region
        %s3574 = ssub.s32 %s21, 2
        // Predicated region
        $region77: #{tpu_custom_call.1} parent=75 // pred_check
          %p3575 = pneg %p265
        $region78: #{tpu_custom_call.1} parent=75 // pred_check_branch
          %3577 = sbr.rel (%p3575) target = $region80
        $region79: #{tpu_custom_call.1} parent=75 // pred_region
          %s3578 = sand.u32 %s250, 1
          %s3579 = scalar_lea.sflag [#allocation4], %s3578
          %s3580 = sand.u32 %s250, 1
          %s3581 = smul.addr %s3580, 32
          %s3582 = scalar_lea.vmem [#allocation7], %s3581
          %3583 = dma.done %s3579, 512
        $region80: #{tpu_custom_call.1} parent=75 // pred_fallthru
          _
      $region76: #{tpu_custom_call.1} parent=5 // pred_fallthru
        _
    $region6: #{tpu_custom_call.1} parent=1 // loop_footer
      %s25 = sadd.s32 1, %s21
    $region7: #{tpu_custom_call.1} parent=1 // loop_footer_branch
      %20 = sbr.rel target = $region3
    $region8: #{tpu_custom_call.1} parent=1 // loop_exit
      _
    %3584 = vsyncpa [#allocation3], 1
    %s3585 = scalar_lea.sflag [#allocation3], 1
    %3586 = vsyncpa %s3585, 1
    %3587 = vsyncpa [#allocation6], 1
    %3588 = vsyncpa [#allocation4], 1
    %s3589 = scalar_lea.sflag [#allocation4], 1
    %3590 = vsyncpa %s3589, 1

</llo_original>
